<compile_context>
chip_gen: v6e
topology: v6e:2x2x1
jax: 0.10.0
libtpu: 0.0.40
codegen_flags: <defaults>
</compile_context>

<pallas_src>
import math
import jax
import jax.numpy as jnp
from jax.experimental import pallas as pl
from jax.experimental.pallas import tpu as pltpu

# ---------------- model hyper-params (small, consistent with the module) ----------------
B = 2          # batch
S = 8          # sequence length
H = 32         # hidden size
NH = 4         # attention heads
DK = H // NH   # per-head dim
FF = 4 * H     # feed-forward hidden (128)
BS = B * S     # flattened tokens

_LN_EPS = 1e-6
_NEG = -1e30   # stands in for dtype-min used by espnet masking (f32-safe)


def _layer_norm(v, g, b):
    mu = jnp.mean(v, axis=-1, keepdims=True)
    var = jnp.mean((v - mu) ** 2, axis=-1, keepdims=True)
    return (v - mu) * jax.lax.rsqrt(var + _LN_EPS) * g + b


def _gelu(x):
    # BERT tanh-approximate GELU
    return 0.5 * x * (1.0 + jnp.tanh(
        math.sqrt(2.0 / math.pi) * (x + 0.044715 * x * x * x)))


def transformer_block_kernel(
    x_ref, mask_ref,
    wqkv_ref, bqkv_ref, wo_ref, w1_ref, b1_ref, w2_ref, vec_ref,
    o_ref,
):
    x = x_ref[...]                     # (BS, H) — both batches, flattened
    keep = mask_ref[...] > 0           # (B, S) bool — key padding mask
    vecs = vec_ref[...]                # (6, H) packed small vectors
    ln1g, ln1b = vecs[0:1, :], vecs[1:2, :]
    ln2g, ln2b = vecs[2:3, :], vecs[3:4, :]
    bo, b2 = vecs[4:5, :], vecs[5:6, :]

    # ---------------- input sublayer: pre-norm + multi-head self-attention ----------------
    xn = _layer_norm(x, ln1g, ln1b)
    # fused QKV projection; the Q block of wqkv/bqkv is pre-scaled by 1/sqrt(d_k)
    qkv = jnp.dot(xn, wqkv_ref[...], preferred_element_type=jnp.float32) + bqkv_ref[...]

    ctx_rows = []
    for b in range(B):                          # static loops: B*NH = 8 tiny tiles
        r0, r1 = b * S, (b + 1) * S
        keep_b = keep[b:b + 1, :]               # (1, S) — broadcast over query rows
        heads = []
        for h in range(NH):
            c = h * DK
            q_h = qkv[r0:r1, c:c + DK]                      # (S, DK), already scaled
            k_h = qkv[r0:r1, H + c:H + c + DK]              # (S, DK)
            v_h = qkv[r0:r1, 2 * H + c:2 * H + c + DK]      # (S, DK)
            s = jnp.dot(q_h, k_h.T, preferred_element_type=jnp.float32)   # (S, S)
            s = jnp.where(keep_b, s, _NEG)
            m = jnp.max(s, axis=-1, keepdims=True)
            e = jnp.exp(s - m)
            denom = jnp.sum(e, axis=-1, keepdims=True)
            p = e * pl.reciprocal(denom, approx=True)       # softmax divide on EUP
            p = jnp.where(keep_b, p, 0.0)                   # espnet zeroes masked probs
            heads.append(jnp.dot(p, v_h, preferred_element_type=jnp.float32))
        ctx_rows.append(jnp.concatenate(heads, axis=-1))    # (S, H)
    ctx = jnp.concatenate(ctx_rows, axis=0)                 # (BS, H)

    # single full-width output projection (instead of per-head accumulation)
    attn = jnp.dot(ctx, wo_ref[...], preferred_element_type=jnp.float32) + bo
    x1 = x + attn                    # residual (dropout identity)

    # ---------------- output sublayer: pre-norm + position-wise feed-forward ----------------
    x1n = _layer_norm(x1, ln2g, ln2b)
    h1 = jnp.dot(x1n, w1_ref[...], preferred_element_type=jnp.float32) + b1_ref[...]
    h1 = _gelu(h1)
    h2 = jnp.dot(h1, w2_ref[...], preferred_element_type=jnp.float32) + b2

    o_ref[...] = x1 + h2             # residual (final dropout identity)


def transformer_block(x, mask, params):
    """x: (B, S, H) f32, mask: (B, S) f32/int (1=keep)."""
    scale = 1.0 / math.sqrt(DK)
    # fuse QKV; fold the 1/sqrt(d_k) score scaling into the Q weights/bias
    wqkv = jnp.concatenate([params["wq"] * scale, params["wk"], params["wv"]], axis=1)
    bqkv = jnp.concatenate([params["bq"] * scale, params["bk"], params["bv"]], axis=1)
    # pack all width-H vector params into one (6, H) array
    vecs = jnp.concatenate([params["ln1g"], params["ln1b"],
                            params["ln2g"], params["ln2b"],
                            params["bo"], params["b2"]], axis=0)
    x_flat = x.reshape(BS, H)

    full = lambda shape: pl.BlockSpec(shape, lambda i: (0, 0))

    out_flat = pl.pallas_call(
        transformer_block_kernel,
        out_shape=jax.ShapeDtypeStruct((BS, H), jnp.float32),
        grid_spec=pltpu.PrefetchScalarGridSpec(
            num_scalar_prefetch=0,
            grid=(1,),                                    # single grid step: whole problem
            in_specs=[
                full((BS, H)),          # x (flattened)
                full((B, S)),           # mask
                full((H, 3 * H)),       # wqkv (Q pre-scaled)
                full((1, 3 * H)),       # bqkv
                full((H, H)),           # wo
                full((H, FF)),          # w1
                full((1, FF)),          # b1
                full((FF, H)),          # w2
                full((6, H)),           # packed ln1g/ln1b/ln2g/ln2b/bo/b2
            ],
            out_specs=full((BS, H)),
        ),
        compiler_params=pltpu.CompilerParams(dimension_semantics=("arbitrary",)),
    )(x_flat, mask, wqkv, bqkv, params["wo"], params["w1"], params["b1"], params["w2"], vecs)

    return out_flat.reshape(B, S, H)


# ---------------- pure-JAX reference (for correctness check) ----------------
def reference(x, mask, p):
    def ln(v, g, b):
        mu = jnp.mean(v, -1, keepdims=True)
        var = jnp.mean((v - mu) ** 2, -1, keepdims=True)
        return (v - mu) * jax.lax.rsqrt(var + _LN_EPS) * g + b

    keep = (mask > 0)[:, None, None, :]                     # (B,1,1,S)
    xn = ln(x, p["ln1g"], p["ln1b"])
    q = xn @ p["wq"] + p["bq"]
    k = xn @ p["wk"] + p["bk"]
    v = xn @ p["wv"] + p["bv"]
    q = q.reshape(B, S, NH, DK).transpose(0, 2, 1, 3)
    k = k.reshape(B, S, NH, DK).transpose(0, 2, 1, 3)
    v = v.reshape(B, S, NH, DK).transpose(0, 2, 1, 3)
    s = jnp.einsum("bhqd,bhkd->bhqk", q, k) / math.sqrt(DK)
    s = jnp.where(keep, s, _NEG)
    a = jax.nn.softmax(s, -1)
    a = jnp.where(keep, a, 0.0)
    ctx = jnp.einsum("bhqk,bhkd->bhqd", a, v).transpose(0, 2, 1, 3).reshape(B, S, H)
    x1 = x + (ctx @ p["wo"] + p["bo"])
    x1n = ln(x1, p["ln2g"], p["ln2b"])
    h1 = _gelu(x1n @ p["w1"] + p["b1"])
    return x1 + (h1 @ p["w2"] + p["b2"])


def init_params(key):
    ks = jax.random.split(key, 12)
    def lin(k, fi, fo):
        return (jax.random.normal(k, (fi, fo), jnp.float32) / math.sqrt(fi),
                jnp.zeros((1, fo), jnp.float32))
    wq, bq = lin(ks[0], H, H)
    wk, bk = lin(ks[1], H, H)
    wv, bv = lin(ks[2], H, H)
    wo, bo = lin(ks[3], H, H)
    w1, b1 = lin(ks[4], H, FF)
    w2, b2 = lin(ks[5], FF, H)
    return dict(
        wq=wq, bq=bq, wk=wk, bk=bk, wv=wv, bv=bv, wo=wo, bo=bo,
        w1=w1, b1=b1, w2=w2, b2=b2,
        ln1g=jnp.ones((1, H), jnp.float32), ln1b=jnp.zeros((1, H), jnp.float32),
        ln2g=jnp.ones((1, H), jnp.float32), ln2b=jnp.zeros((1, H), jnp.float32),
    )


if __name__ == "__main__":
    key = jax.random.PRNGKey(0)
    kx, kp = jax.random.split(key)
    x = jax.random.normal(kx, (B, S, H), jnp.float32)
    # mask: batch 0 fully valid, batch 1 has its last two key positions padded out
    mask = jnp.ones((B, S), jnp.float32).at[1, -2:].set(0.0)
    params = init_params(kp)

    out = transformer_block(x, mask, params)
    out = jax.block_until_ready(out)

    # f32-exact reference matmuls (avoids bf16-pass drift on TPU)
    with jax.default_matmul_precision("highest"):
        ref = reference(x, mask, params)
    ref = jax.block_until_ready(ref)

    assert out.shape == (B, S, H)
    err = float(jnp.max(jnp.abs(out - ref)))
    # tolerance accounts for the EUP approximate reciprocal in the in-kernel softmax
    assert jnp.allclose(out, ref, atol=5e-3, rtol=5e-3), f"max abs err {err}"
    print("KERNEL_OK")
</pallas_src>

<mosaic_0001>
module attributes {stable_mosaic.version = 11 : i64} {
  func.func @transformer_block_kernel(%arg0: i32, %arg1: memref<16x32xf32, #tpu.memory_space<vmem>>, %arg2: memref<2x8xf32, #tpu.memory_space<vmem>>, %arg3: memref<32x96xf32, #tpu.memory_space<vmem>>, %arg4: memref<1x96xf32, #tpu.memory_space<vmem>>, %arg5: memref<32x32xf32, #tpu.memory_space<vmem>>, %arg6: memref<32x128xf32, #tpu.memory_space<vmem>>, %arg7: memref<1x128xf32, #tpu.memory_space<vmem>>, %arg8: memref<128x32xf32, #tpu.memory_space<vmem>>, %arg9: memref<6x32xf32, #tpu.memory_space<vmem>>, %arg10: memref<16x32xf32, #tpu.memory_space<vmem>>) attributes {dimension_semantics = [#tpu.dimension_semantics<arbitrary>], iteration_bounds = array<i64: 1>, scalar_prefetch = 0 : i64, scratch_operands = 0 : i64, tpu.core_type = #tpu.core_type<tc>, window_params = [{pipeline_mode = #tpu.pipeline_mode<synchronous>, transform_indices = @transform_0, window_bounds = array<i64: 16, 32>}, {pipeline_mode = #tpu.pipeline_mode<synchronous>, transform_indices = @transform_1, window_bounds = array<i64: 2, 8>}, {pipeline_mode = #tpu.pipeline_mode<synchronous>, transform_indices = @transform_2, window_bounds = array<i64: 32, 96>}, {pipeline_mode = #tpu.pipeline_mode<synchronous>, transform_indices = @transform_3, window_bounds = array<i64: 1, 96>}, {pipeline_mode = #tpu.pipeline_mode<synchronous>, transform_indices = @transform_4, window_bounds = array<i64: 32, 32>}, {pipeline_mode = #tpu.pipeline_mode<synchronous>, transform_indices = @transform_5, window_bounds = array<i64: 32, 128>}, {pipeline_mode = #tpu.pipeline_mode<synchronous>, transform_indices = @transform_6, window_bounds = array<i64: 1, 128>}, {pipeline_mode = #tpu.pipeline_mode<synchronous>, transform_indices = @transform_7, window_bounds = array<i64: 128, 32>}, {pipeline_mode = #tpu.pipeline_mode<synchronous>, transform_indices = @transform_8, window_bounds = array<i64: 6, 32>}, {pipeline_mode = #tpu.pipeline_mode<synchronous>, transform_indices = @transform_9, window_bounds = array<i64: 16, 32>}]} {
    %c0 = arith.constant 0 : index
    %c0_0 = arith.constant 0 : index
    %0 = vector.load %arg1[%c0, %c0_0] : memref<16x32xf32, #tpu.memory_space<vmem>>, vector<16x32xf32>
    %c0_1 = arith.constant 0 : index
    %c0_2 = arith.constant 0 : index
    %1 = vector.load %arg2[%c0_1, %c0_2] : memref<2x8xf32, #tpu.memory_space<vmem>>, vector<2x8xf32>
    %cst = arith.constant 0.000000e+00 : f32
    %2 = vector.broadcast %cst : f32 to vector<2x8xf32>
    %3 = arith.cmpf ogt, %1, %2 : vector<2x8xf32>
    %c0_3 = arith.constant 0 : index
    %c0_4 = arith.constant 0 : index
    %4 = vector.load %arg9[%c0_3, %c0_4] : memref<6x32xf32, #tpu.memory_space<vmem>>, vector<6x32xf32>
    %5 = vector.extract_strided_slice %4 {offsets = [0, 0], sizes = [1, 32], strides = [1, 1]} : vector<6x32xf32> to vector<1x32xf32>
    %6 = vector.extract_strided_slice %4 {offsets = [1, 0], sizes = [1, 32], strides = [1, 1]} : vector<6x32xf32> to vector<1x32xf32>
    %7 = vector.extract_strided_slice %4 {offsets = [2, 0], sizes = [1, 32], strides = [1, 1]} : vector<6x32xf32> to vector<1x32xf32>
    %8 = vector.extract_strided_slice %4 {offsets = [3, 0], sizes = [1, 32], strides = [1, 1]} : vector<6x32xf32> to vector<1x32xf32>
    %9 = vector.extract_strided_slice %4 {offsets = [4, 0], sizes = [1, 32], strides = [1, 1]} : vector<6x32xf32> to vector<1x32xf32>
    %10 = vector.extract_strided_slice %4 {offsets = [5, 0], sizes = [1, 32], strides = [1, 1]} : vector<6x32xf32> to vector<1x32xf32>
    %cst_5 = arith.constant dense<0.000000e+00> : vector<16xf32>
    %11 = vector.multi_reduction <add>, %0, %cst_5 [1] : vector<16x32xf32> to vector<16xf32>
    %12 = vector.shape_cast %11 : vector<16xf32> to vector<16x1xf32>
    %cst_6 = arith.constant 3.200000e+01 : f32
    %13 = vector.broadcast %cst_6 : f32 to vector<16x1xf32>
    %14 = arith.divf %12, %13 : vector<16x1xf32>
    %15 = vector.broadcast %14 : vector<16x1xf32> to vector<16x32xf32>
    %16 = arith.subf %0, %15 : vector<16x32xf32>
    %17 = arith.mulf %16, %16 : vector<16x32xf32>
    %cst_7 = arith.constant dense<0.000000e+00> : vector<16xf32>
    %18 = vector.multi_reduction <add>, %17, %cst_7 [1] : vector<16x32xf32> to vector<16xf32>
    %19 = vector.shape_cast %18 : vector<16xf32> to vector<16x1xf32>
    %cst_8 = arith.constant 3.200000e+01 : f32
    %20 = vector.broadcast %cst_8 : f32 to vector<16x1xf32>
    %21 = arith.divf %19, %20 : vector<16x1xf32>
    %22 = vector.broadcast %14 : vector<16x1xf32> to vector<16x32xf32>
    %23 = arith.subf %0, %22 : vector<16x32xf32>
    %cst_9 = arith.constant 9.99999997E-7 : f32
    %24 = vector.broadcast %cst_9 : f32 to vector<16x1xf32>
    %25 = arith.addf %21, %24 : vector<16x1xf32>
    %26 = math.rsqrt %25 : vector<16x1xf32>
    %27 = vector.broadcast %26 : vector<16x1xf32> to vector<16x32xf32>
    %28 = arith.mulf %23, %27 : vector<16x32xf32>
    %29 = vector.broadcast %5 : vector<1x32xf32> to vector<16x32xf32>
    %30 = arith.mulf %28, %29 : vector<16x32xf32>
    %31 = vector.broadcast %6 : vector<1x32xf32> to vector<16x32xf32>
    %32 = arith.addf %30, %31 : vector<16x32xf32>
    %c0_10 = arith.constant 0 : index
    %c0_11 = arith.constant 0 : index
    %33 = vector.load %arg3[%c0_10, %c0_11] : memref<32x96xf32, #tpu.memory_space<vmem>>, vector<32x96xf32>
    %cst_12 = arith.constant dense<0.000000e+00> : vector<16x96xf32>
    %34 = tpu.matmul %32, %33, %cst_12 {dimension_numbers = #tpu.dot_dimension_numbers<[1], [0], [0], [1], [0, 0, 1, 1], [], []>} : vector<16x32xf32>, vector<32x96xf32>, vector<16x96xf32> -> vector<16x96xf32>
    %c0_13 = arith.constant 0 : index
    %c0_14 = arith.constant 0 : index
    %35 = vector.load %arg4[%c0_13, %c0_14] : memref<1x96xf32, #tpu.memory_space<vmem>>, vector<1x96xf32>
    %36 = vector.broadcast %35 : vector<1x96xf32> to vector<16x96xf32>
    %37 = arith.addf %34, %36 : vector<16x96xf32>
    %38 = vector.extract_strided_slice %3 {offsets = [0, 0], sizes = [1, 8], strides = [1, 1]} : vector<2x8xi1> to vector<1x8xi1>
    %39 = vector.extract_strided_slice %37 {offsets = [0, 0], sizes = [8, 8], strides = [1, 1]} : vector<16x96xf32> to vector<8x8xf32>
    %40 = vector.extract_strided_slice %37 {offsets = [0, 32], sizes = [8, 8], strides = [1, 1]} : vector<16x96xf32> to vector<8x8xf32>
    %41 = vector.extract_strided_slice %37 {offsets = [0, 64], sizes = [8, 8], strides = [1, 1]} : vector<16x96xf32> to vector<8x8xf32>
    %42 = tpu.transpose %40, [1, 0] : vector<8x8xf32> -> vector<8x8xf32>
    %cst_15 = arith.constant dense<0.000000e+00> : vector<8x8xf32>
    %43 = tpu.matmul %39, %42, %cst_15 {dimension_numbers = #tpu.dot_dimension_numbers<[1], [0], [0], [1], [0, 0, 1, 1], [], []>} : vector<8x8xf32>, vector<8x8xf32>, vector<8x8xf32> -> vector<8x8xf32>
    %cst_16 = arith.constant -1.000000e+30 : f32
    %44 = vector.shape_cast %38 : vector<1x8xi1> to vector<1x8xi1>
    %45 = vector.broadcast %44 : vector<1x8xi1> to vector<8x8xi1>
    %46 = vector.broadcast %cst_16 : f32 to vector<8x8xf32>
    %47 = arith.select %45, %43, %46 : vector<8x8xi1>, vector<8x8xf32>
    %cst_17 = arith.constant dense<0xFF800000> : vector<8xf32>
    %48 = vector.multi_reduction <maximumf>, %47, %cst_17 [1] : vector<8x8xf32> to vector<8xf32>
    %49 = vector.shape_cast %48 : vector<8xf32> to vector<8x1xf32>
    %50 = vector.broadcast %49 : vector<8x1xf32> to vector<8x8xf32>
    %51 = arith.subf %47, %50 : vector<8x8xf32>
    %52 = math.exp %51 : vector<8x8xf32>
    %cst_18 = arith.constant dense<0.000000e+00> : vector<8xf32>
    %53 = vector.multi_reduction <add>, %52, %cst_18 [1] : vector<8x8xf32> to vector<8xf32>
    %54 = vector.shape_cast %53 : vector<8xf32> to vector<8x1xf32>
    %55 = tpu.reciprocal %54 {approx = true} : vector<8x1xf32> -> vector<8x1xf32>
    %56 = vector.broadcast %55 : vector<8x1xf32> to vector<8x8xf32>
    %57 = arith.mulf %52, %56 : vector<8x8xf32>
    %cst_19 = arith.constant 0.000000e+00 : f32
    %58 = vector.shape_cast %38 : vector<1x8xi1> to vector<1x8xi1>
    %59 = vector.broadcast %58 : vector<1x8xi1> to vector<8x8xi1>
    %60 = vector.broadcast %cst_19 : f32 to vector<8x8xf32>
    %61 = arith.select %59, %57, %60 : vector<8x8xi1>, vector<8x8xf32>
    %cst_20 = arith.constant dense<0.000000e+00> : vector<8x8xf32>
    %62 = tpu.matmul %61, %41, %cst_20 {dimension_numbers = #tpu.dot_dimension_numbers<[1], [0], [0], [1], [0, 0, 1, 1], [], []>} : vector<8x8xf32>, vector<8x8xf32>, vector<8x8xf32> -> vector<8x8xf32>
    %63 = vector.extract_strided_slice %37 {offsets = [0, 8], sizes = [8, 8], strides = [1, 1]} : vector<16x96xf32> to vector<8x8xf32>
    %64 = vector.extract_strided_slice %37 {offsets = [0, 40], sizes = [8, 8], strides = [1, 1]} : vector<16x96xf32> to vector<8x8xf32>
    %65 = vector.extract_strided_slice %37 {offsets = [0, 72], sizes = [8, 8], strides = [1, 1]} : vector<16x96xf32> to vector<8x8xf32>
    %66 = tpu.transpose %64, [1, 0] : vector<8x8xf32> -> vector<8x8xf32>
    %cst_21 = arith.constant dense<0.000000e+00> : vector<8x8xf32>
    %67 = tpu.matmul %63, %66, %cst_21 {dimension_numbers = #tpu.dot_dimension_numbers<[1], [0], [0], [1], [0, 0, 1, 1], [], []>} : vector<8x8xf32>, vector<8x8xf32>, vector<8x8xf32> -> vector<8x8xf32>
    %cst_22 = arith.constant -1.000000e+30 : f32
    %68 = vector.shape_cast %38 : vector<1x8xi1> to vector<1x8xi1>
    %69 = vector.broadcast %68 : vector<1x8xi1> to vector<8x8xi1>
    %70 = vector.broadcast %cst_22 : f32 to vector<8x8xf32>
    %71 = arith.select %69, %67, %70 : vector<8x8xi1>, vector<8x8xf32>
    %cst_23 = arith.constant dense<0xFF800000> : vector<8xf32>
    %72 = vector.multi_reduction <maximumf>, %71, %cst_23 [1] : vector<8x8xf32> to vector<8xf32>
    %73 = vector.shape_cast %72 : vector<8xf32> to vector<8x1xf32>
    %74 = vector.broadcast %73 : vector<8x1xf32> to vector<8x8xf32>
    %75 = arith.subf %71, %74 : vector<8x8xf32>
    %76 = math.exp %75 : vector<8x8xf32>
    %cst_24 = arith.constant dense<0.000000e+00> : vector<8xf32>
    %77 = vector.multi_reduction <add>, %76, %cst_24 [1] : vector<8x8xf32> to vector<8xf32>
    %78 = vector.shape_cast %77 : vector<8xf32> to vector<8x1xf32>
    %79 = tpu.reciprocal %78 {approx = true} : vector<8x1xf32> -> vector<8x1xf32>
    %80 = vector.broadcast %79 : vector<8x1xf32> to vector<8x8xf32>
    %81 = arith.mulf %76, %80 : vector<8x8xf32>
    %cst_25 = arith.constant 0.000000e+00 : f32
    %82 = vector.shape_cast %38 : vector<1x8xi1> to vector<1x8xi1>
    %83 = vector.broadcast %82 : vector<1x8xi1> to vector<8x8xi1>
    %84 = vector.broadcast %cst_25 : f32 to vector<8x8xf32>
    %85 = arith.select %83, %81, %84 : vector<8x8xi1>, vector<8x8xf32>
    %cst_26 = arith.constant dense<0.000000e+00> : vector<8x8xf32>
    %86 = tpu.matmul %85, %65, %cst_26 {dimension_numbers = #tpu.dot_dimension_numbers<[1], [0], [0], [1], [0, 0, 1, 1], [], []>} : vector<8x8xf32>, vector<8x8xf32>, vector<8x8xf32> -> vector<8x8xf32>
    %87 = vector.extract_strided_slice %37 {offsets = [0, 16], sizes = [8, 8], strides = [1, 1]} : vector<16x96xf32> to vector<8x8xf32>
    %88 = vector.extract_strided_slice %37 {offsets = [0, 48], sizes = [8, 8], strides = [1, 1]} : vector<16x96xf32> to vector<8x8xf32>
    %89 = vector.extract_strided_slice %37 {offsets = [0, 80], sizes = [8, 8], strides = [1, 1]} : vector<16x96xf32> to vector<8x8xf32>
    %90 = tpu.transpose %88, [1, 0] : vector<8x8xf32> -> vector<8x8xf32>
    %cst_27 = arith.constant dense<0.000000e+00> : vector<8x8xf32>
    %91 = tpu.matmul %87, %90, %cst_27 {dimension_numbers = #tpu.dot_dimension_numbers<[1], [0], [0], [1], [0, 0, 1, 1], [], []>} : vector<8x8xf32>, vector<8x8xf32>, vector<8x8xf32> -> vector<8x8xf32>
    %cst_28 = arith.constant -1.000000e+30 : f32
    %92 = vector.shape_cast %38 : vector<1x8xi1> to vector<1x8xi1>
    %93 = vector.broadcast %92 : vector<1x8xi1> to vector<8x8xi1>
    %94 = vector.broadcast %cst_28 : f32 to vector<8x8xf32>
    %95 = arith.select %93, %91, %94 : vector<8x8xi1>, vector<8x8xf32>
    %cst_29 = arith.constant dense<0xFF800000> : vector<8xf32>
    %96 = vector.multi_reduction <maximumf>, %95, %cst_29 [1] : vector<8x8xf32> to vector<8xf32>
    %97 = vector.shape_cast %96 : vector<8xf32> to vector<8x1xf32>
    %98 = vector.broadcast %97 : vector<8x1xf32> to vector<8x8xf32>
    %99 = arith.subf %95, %98 : vector<8x8xf32>
    %100 = math.exp %99 : vector<8x8xf32>
    %cst_30 = arith.constant dense<0.000000e+00> : vector<8xf32>
    %101 = vector.multi_reduction <add>, %100, %cst_30 [1] : vector<8x8xf32> to vector<8xf32>
    %102 = vector.shape_cast %101 : vector<8xf32> to vector<8x1xf32>
    %103 = tpu.reciprocal %102 {approx = true} : vector<8x1xf32> -> vector<8x1xf32>
    %104 = vector.broadcast %103 : vector<8x1xf32> to vector<8x8xf32>
    %105 = arith.mulf %100, %104 : vector<8x8xf32>
    %cst_31 = arith.constant 0.000000e+00 : f32
    %106 = vector.shape_cast %38 : vector<1x8xi1> to vector<1x8xi1>
    %107 = vector.broadcast %106 : vector<1x8xi1> to vector<8x8xi1>
    %108 = vector.broadcast %cst_31 : f32 to vector<8x8xf32>
    %109 = arith.select %107, %105, %108 : vector<8x8xi1>, vector<8x8xf32>
    %cst_32 = arith.constant dense<0.000000e+00> : vector<8x8xf32>
    %110 = tpu.matmul %109, %89, %cst_32 {dimension_numbers = #tpu.dot_dimension_numbers<[1], [0], [0], [1], [0, 0, 1, 1], [], []>} : vector<8x8xf32>, vector<8x8xf32>, vector<8x8xf32> -> vector<8x8xf32>
    %111 = vector.extract_strided_slice %37 {offsets = [0, 24], sizes = [8, 8], strides = [1, 1]} : vector<16x96xf32> to vector<8x8xf32>
    %112 = vector.extract_strided_slice %37 {offsets = [0, 56], sizes = [8, 8], strides = [1, 1]} : vector<16x96xf32> to vector<8x8xf32>
    %113 = vector.extract_strided_slice %37 {offsets = [0, 88], sizes = [8, 8], strides = [1, 1]} : vector<16x96xf32> to vector<8x8xf32>
    %114 = tpu.transpose %112, [1, 0] : vector<8x8xf32> -> vector<8x8xf32>
    %cst_33 = arith.constant dense<0.000000e+00> : vector<8x8xf32>
    %115 = tpu.matmul %111, %114, %cst_33 {dimension_numbers = #tpu.dot_dimension_numbers<[1], [0], [0], [1], [0, 0, 1, 1], [], []>} : vector<8x8xf32>, vector<8x8xf32>, vector<8x8xf32> -> vector<8x8xf32>
    %cst_34 = arith.constant -1.000000e+30 : f32
    %116 = vector.shape_cast %38 : vector<1x8xi1> to vector<1x8xi1>
    %117 = vector.broadcast %116 : vector<1x8xi1> to vector<8x8xi1>
    %118 = vector.broadcast %cst_34 : f32 to vector<8x8xf32>
    %119 = arith.select %117, %115, %118 : vector<8x8xi1>, vector<8x8xf32>
    %cst_35 = arith.constant dense<0xFF800000> : vector<8xf32>
    %120 = vector.multi_reduction <maximumf>, %119, %cst_35 [1] : vector<8x8xf32> to vector<8xf32>
    %121 = vector.shape_cast %120 : vector<8xf32> to vector<8x1xf32>
    %122 = vector.broadcast %121 : vector<8x1xf32> to vector<8x8xf32>
    %123 = arith.subf %119, %122 : vector<8x8xf32>
    %124 = math.exp %123 : vector<8x8xf32>
    %cst_36 = arith.constant dense<0.000000e+00> : vector<8xf32>
    %125 = vector.multi_reduction <add>, %124, %cst_36 [1] : vector<8x8xf32> to vector<8xf32>
    %126 = vector.shape_cast %125 : vector<8xf32> to vector<8x1xf32>
    %127 = tpu.reciprocal %126 {approx = true} : vector<8x1xf32> -> vector<8x1xf32>
    %128 = vector.broadcast %127 : vector<8x1xf32> to vector<8x8xf32>
    %129 = arith.mulf %124, %128 : vector<8x8xf32>
    %cst_37 = arith.constant 0.000000e+00 : f32
    %130 = vector.shape_cast %38 : vector<1x8xi1> to vector<1x8xi1>
    %131 = vector.broadcast %130 : vector<1x8xi1> to vector<8x8xi1>
    %132 = vector.broadcast %cst_37 : f32 to vector<8x8xf32>
    %133 = arith.select %131, %129, %132 : vector<8x8xi1>, vector<8x8xf32>
    %cst_38 = arith.constant dense<0.000000e+00> : vector<8x8xf32>
    %134 = tpu.matmul %133, %113, %cst_38 {dimension_numbers = #tpu.dot_dimension_numbers<[1], [0], [0], [1], [0, 0, 1, 1], [], []>} : vector<8x8xf32>, vector<8x8xf32>, vector<8x8xf32> -> vector<8x8xf32>
    %135 = tpu.concatenate %62, %86, %110, %134 in 1 : vector<8x8xf32>, vector<8x8xf32>, vector<8x8xf32>, vector<8x8xf32> -> vector<8x32xf32>
    %136 = vector.extract_strided_slice %3 {offsets = [1, 0], sizes = [1, 8], strides = [1, 1]} : vector<2x8xi1> to vector<1x8xi1>
    %137 = vector.extract_strided_slice %37 {offsets = [8, 0], sizes = [8, 8], strides = [1, 1]} : vector<16x96xf32> to vector<8x8xf32>
    %138 = vector.extract_strided_slice %37 {offsets = [8, 32], sizes = [8, 8], strides = [1, 1]} : vector<16x96xf32> to vector<8x8xf32>
    %139 = vector.extract_strided_slice %37 {offsets = [8, 64], sizes = [8, 8], strides = [1, 1]} : vector<16x96xf32> to vector<8x8xf32>
    %140 = tpu.transpose %138, [1, 0] : vector<8x8xf32> -> vector<8x8xf32>
    %cst_39 = arith.constant dense<0.000000e+00> : vector<8x8xf32>
    %141 = tpu.matmul %137, %140, %cst_39 {dimension_numbers = #tpu.dot_dimension_numbers<[1], [0], [0], [1], [0, 0, 1, 1], [], []>} : vector<8x8xf32>, vector<8x8xf32>, vector<8x8xf32> -> vector<8x8xf32>
    %cst_40 = arith.constant -1.000000e+30 : f32
    %142 = vector.shape_cast %136 : vector<1x8xi1> to vector<1x8xi1>
    %143 = vector.broadcast %142 : vector<1x8xi1> to vector<8x8xi1>
    %144 = vector.broadcast %cst_40 : f32 to vector<8x8xf32>
    %145 = arith.select %143, %141, %144 : vector<8x8xi1>, vector<8x8xf32>
    %cst_41 = arith.constant dense<0xFF800000> : vector<8xf32>
    %146 = vector.multi_reduction <maximumf>, %145, %cst_41 [1] : vector<8x8xf32> to vector<8xf32>
    %147 = vector.shape_cast %146 : vector<8xf32> to vector<8x1xf32>
    %148 = vector.broadcast %147 : vector<8x1xf32> to vector<8x8xf32>
    %149 = arith.subf %145, %148 : vector<8x8xf32>
    %150 = math.exp %149 : vector<8x8xf32>
    %cst_42 = arith.constant dense<0.000000e+00> : vector<8xf32>
    %151 = vector.multi_reduction <add>, %150, %cst_42 [1] : vector<8x8xf32> to vector<8xf32>
    %152 = vector.shape_cast %151 : vector<8xf32> to vector<8x1xf32>
    %153 = tpu.reciprocal %152 {approx = true} : vector<8x1xf32> -> vector<8x1xf32>
    %154 = vector.broadcast %153 : vector<8x1xf32> to vector<8x8xf32>
    %155 = arith.mulf %150, %154 : vector<8x8xf32>
    %cst_43 = arith.constant 0.000000e+00 : f32
    %156 = vector.shape_cast %136 : vector<1x8xi1> to vector<1x8xi1>
    %157 = vector.broadcast %156 : vector<1x8xi1> to vector<8x8xi1>
    %158 = vector.broadcast %cst_43 : f32 to vector<8x8xf32>
    %159 = arith.select %157, %155, %158 : vector<8x8xi1>, vector<8x8xf32>
    %cst_44 = arith.constant dense<0.000000e+00> : vector<8x8xf32>
    %160 = tpu.matmul %159, %139, %cst_44 {dimension_numbers = #tpu.dot_dimension_numbers<[1], [0], [0], [1], [0, 0, 1, 1], [], []>} : vector<8x8xf32>, vector<8x8xf32>, vector<8x8xf32> -> vector<8x8xf32>
    %161 = vector.extract_strided_slice %37 {offsets = [8, 8], sizes = [8, 8], strides = [1, 1]} : vector<16x96xf32> to vector<8x8xf32>
    %162 = vector.extract_strided_slice %37 {offsets = [8, 40], sizes = [8, 8], strides = [1, 1]} : vector<16x96xf32> to vector<8x8xf32>
    %163 = vector.extract_strided_slice %37 {offsets = [8, 72], sizes = [8, 8], strides = [1, 1]} : vector<16x96xf32> to vector<8x8xf32>
    %164 = tpu.transpose %162, [1, 0] : vector<8x8xf32> -> vector<8x8xf32>
    %cst_45 = arith.constant dense<0.000000e+00> : vector<8x8xf32>
    %165 = tpu.matmul %161, %164, %cst_45 {dimension_numbers = #tpu.dot_dimension_numbers<[1], [0], [0], [1], [0, 0, 1, 1], [], []>} : vector<8x8xf32>, vector<8x8xf32>, vector<8x8xf32> -> vector<8x8xf32>
    %cst_46 = arith.constant -1.000000e+30 : f32
    %166 = vector.shape_cast %136 : vector<1x8xi1> to vector<1x8xi1>
    %167 = vector.broadcast %166 : vector<1x8xi1> to vector<8x8xi1>
    %168 = vector.broadcast %cst_46 : f32 to vector<8x8xf32>
    %169 = arith.select %167, %165, %168 : vector<8x8xi1>, vector<8x8xf32>
    %cst_47 = arith.constant dense<0xFF800000> : vector<8xf32>
    %170 = vector.multi_reduction <maximumf>, %169, %cst_47 [1] : vector<8x8xf32> to vector<8xf32>
    %171 = vector.shape_cast %170 : vector<8xf32> to vector<8x1xf32>
    %172 = vector.broadcast %171 : vector<8x1xf32> to vector<8x8xf32>
    %173 = arith.subf %169, %172 : vector<8x8xf32>
    %174 = math.exp %173 : vector<8x8xf32>
    %cst_48 = arith.constant dense<0.000000e+00> : vector<8xf32>
    %175 = vector.multi_reduction <add>, %174, %cst_48 [1] : vector<8x8xf32> to vector<8xf32>
    %176 = vector.shape_cast %175 : vector<8xf32> to vector<8x1xf32>
    %177 = tpu.reciprocal %176 {approx = true} : vector<8x1xf32> -> vector<8x1xf32>
    %178 = vector.broadcast %177 : vector<8x1xf32> to vector<8x8xf32>
    %179 = arith.mulf %174, %178 : vector<8x8xf32>
    %cst_49 = arith.constant 0.000000e+00 : f32
    %180 = vector.shape_cast %136 : vector<1x8xi1> to vector<1x8xi1>
    %181 = vector.broadcast %180 : vector<1x8xi1> to vector<8x8xi1>
    %182 = vector.broadcast %cst_49 : f32 to vector<8x8xf32>
    %183 = arith.select %181, %179, %182 : vector<8x8xi1>, vector<8x8xf32>
    %cst_50 = arith.constant dense<0.000000e+00> : vector<8x8xf32>
    %184 = tpu.matmul %183, %163, %cst_50 {dimension_numbers = #tpu.dot_dimension_numbers<[1], [0], [0], [1], [0, 0, 1, 1], [], []>} : vector<8x8xf32>, vector<8x8xf32>, vector<8x8xf32> -> vector<8x8xf32>
    %185 = vector.extract_strided_slice %37 {offsets = [8, 16], sizes = [8, 8], strides = [1, 1]} : vector<16x96xf32> to vector<8x8xf32>
    %186 = vector.extract_strided_slice %37 {offsets = [8, 48], sizes = [8, 8], strides = [1, 1]} : vector<16x96xf32> to vector<8x8xf32>
    %187 = vector.extract_strided_slice %37 {offsets = [8, 80], sizes = [8, 8], strides = [1, 1]} : vector<16x96xf32> to vector<8x8xf32>
    %188 = tpu.transpose %186, [1, 0] : vector<8x8xf32> -> vector<8x8xf32>
    %cst_51 = arith.constant dense<0.000000e+00> : vector<8x8xf32>
    %189 = tpu.matmul %185, %188, %cst_51 {dimension_numbers = #tpu.dot_dimension_numbers<[1], [0], [0], [1], [0, 0, 1, 1], [], []>} : vector<8x8xf32>, vector<8x8xf32>, vector<8x8xf32> -> vector<8x8xf32>
    %cst_52 = arith.constant -1.000000e+30 : f32
    %190 = vector.shape_cast %136 : vector<1x8xi1> to vector<1x8xi1>
    %191 = vector.broadcast %190 : vector<1x8xi1> to vector<8x8xi1>
    %192 = vector.broadcast %cst_52 : f32 to vector<8x8xf32>
    %193 = arith.select %191, %189, %192 : vector<8x8xi1>, vector<8x8xf32>
    %cst_53 = arith.constant dense<0xFF800000> : vector<8xf32>
    %194 = vector.multi_reduction <maximumf>, %193, %cst_53 [1] : vector<8x8xf32> to vector<8xf32>
    %195 = vector.shape_cast %194 : vector<8xf32> to vector<8x1xf32>
    %196 = vector.broadcast %195 : vector<8x1xf32> to vector<8x8xf32>
    %197 = arith.subf %193, %196 : vector<8x8xf32>
    %198 = math.exp %197 : vector<8x8xf32>
    %cst_54 = arith.constant dense<0.000000e+00> : vector<8xf32>
    %199 = vector.multi_reduction <add>, %198, %cst_54 [1] : vector<8x8xf32> to vector<8xf32>
    %200 = vector.shape_cast %199 : vector<8xf32> to vector<8x1xf32>
    %201 = tpu.reciprocal %200 {approx = true} : vector<8x1xf32> -> vector<8x1xf32>
    %202 = vector.broadcast %201 : vector<8x1xf32> to vector<8x8xf32>
    %203 = arith.mulf %198, %202 : vector<8x8xf32>
    %cst_55 = arith.constant 0.000000e+00 : f32
    %204 = vector.shape_cast %136 : vector<1x8xi1> to vector<1x8xi1>
    %205 = vector.broadcast %204 : vector<1x8xi1> to vector<8x8xi1>
    %206 = vector.broadcast %cst_55 : f32 to vector<8x8xf32>
    %207 = arith.select %205, %203, %206 : vector<8x8xi1>, vector<8x8xf32>
    %cst_56 = arith.constant dense<0.000000e+00> : vector<8x8xf32>
    %208 = tpu.matmul %207, %187, %cst_56 {dimension_numbers = #tpu.dot_dimension_numbers<[1], [0], [0], [1], [0, 0, 1, 1], [], []>} : vector<8x8xf32>, vector<8x8xf32>, vector<8x8xf32> -> vector<8x8xf32>
    %209 = vector.extract_strided_slice %37 {offsets = [8, 24], sizes = [8, 8], strides = [1, 1]} : vector<16x96xf32> to vector<8x8xf32>
    %210 = vector.extract_strided_slice %37 {offsets = [8, 56], sizes = [8, 8], strides = [1, 1]} : vector<16x96xf32> to vector<8x8xf32>
    %211 = vector.extract_strided_slice %37 {offsets = [8, 88], sizes = [8, 8], strides = [1, 1]} : vector<16x96xf32> to vector<8x8xf32>
    %212 = tpu.transpose %210, [1, 0] : vector<8x8xf32> -> vector<8x8xf32>
    %cst_57 = arith.constant dense<0.000000e+00> : vector<8x8xf32>
    %213 = tpu.matmul %209, %212, %cst_57 {dimension_numbers = #tpu.dot_dimension_numbers<[1], [0], [0], [1], [0, 0, 1, 1], [], []>} : vector<8x8xf32>, vector<8x8xf32>, vector<8x8xf32> -> vector<8x8xf32>
    %cst_58 = arith.constant -1.000000e+30 : f32
    %214 = vector.shape_cast %136 : vector<1x8xi1> to vector<1x8xi1>
    %215 = vector.broadcast %214 : vector<1x8xi1> to vector<8x8xi1>
    %216 = vector.broadcast %cst_58 : f32 to vector<8x8xf32>
    %217 = arith.select %215, %213, %216 : vector<8x8xi1>, vector<8x8xf32>
    %cst_59 = arith.constant dense<0xFF800000> : vector<8xf32>
    %218 = vector.multi_reduction <maximumf>, %217, %cst_59 [1] : vector<8x8xf32> to vector<8xf32>
    %219 = vector.shape_cast %218 : vector<8xf32> to vector<8x1xf32>
    %220 = vector.broadcast %219 : vector<8x1xf32> to vector<8x8xf32>
    %221 = arith.subf %217, %220 : vector<8x8xf32>
    %222 = math.exp %221 : vector<8x8xf32>
    %cst_60 = arith.constant dense<0.000000e+00> : vector<8xf32>
    %223 = vector.multi_reduction <add>, %222, %cst_60 [1] : vector<8x8xf32> to vector<8xf32>
    %224 = vector.shape_cast %223 : vector<8xf32> to vector<8x1xf32>
    %225 = tpu.reciprocal %224 {approx = true} : vector<8x1xf32> -> vector<8x1xf32>
    %226 = vector.broadcast %225 : vector<8x1xf32> to vector<8x8xf32>
    %227 = arith.mulf %222, %226 : vector<8x8xf32>
    %cst_61 = arith.constant 0.000000e+00 : f32
    %228 = vector.shape_cast %136 : vector<1x8xi1> to vector<1x8xi1>
    %229 = vector.broadcast %228 : vector<1x8xi1> to vector<8x8xi1>
    %230 = vector.broadcast %cst_61 : f32 to vector<8x8xf32>
    %231 = arith.select %229, %227, %230 : vector<8x8xi1>, vector<8x8xf32>
    %cst_62 = arith.constant dense<0.000000e+00> : vector<8x8xf32>
    %232 = tpu.matmul %231, %211, %cst_62 {dimension_numbers = #tpu.dot_dimension_numbers<[1], [0], [0], [1], [0, 0, 1, 1], [], []>} : vector<8x8xf32>, vector<8x8xf32>, vector<8x8xf32> -> vector<8x8xf32>
    %233 = tpu.concatenate %160, %184, %208, %232 in 1 : vector<8x8xf32>, vector<8x8xf32>, vector<8x8xf32>, vector<8x8xf32> -> vector<8x32xf32>
    %234 = tpu.concatenate %135, %233 in 0 : vector<8x32xf32>, vector<8x32xf32> -> vector<16x32xf32>
    %c0_63 = arith.constant 0 : index
    %c0_64 = arith.constant 0 : index
    %235 = vector.load %arg5[%c0_63, %c0_64] : memref<32x32xf32, #tpu.memory_space<vmem>>, vector<32x32xf32>
    %cst_65 = arith.constant dense<0.000000e+00> : vector<16x32xf32>
    %236 = tpu.matmul %234, %235, %cst_65 {dimension_numbers = #tpu.dot_dimension_numbers<[1], [0], [0], [1], [0, 0, 1, 1], [], []>} : vector<16x32xf32>, vector<32x32xf32>, vector<16x32xf32> -> vector<16x32xf32>
    %237 = vector.broadcast %9 : vector<1x32xf32> to vector<16x32xf32>
    %238 = arith.addf %236, %237 : vector<16x32xf32>
    %239 = arith.addf %0, %238 : vector<16x32xf32>
    %cst_66 = arith.constant dense<0.000000e+00> : vector<16xf32>
    %240 = vector.multi_reduction <add>, %239, %cst_66 [1] : vector<16x32xf32> to vector<16xf32>
    %241 = vector.shape_cast %240 : vector<16xf32> to vector<16x1xf32>
    %cst_67 = arith.constant 3.200000e+01 : f32
    %242 = vector.broadcast %cst_67 : f32 to vector<16x1xf32>
    %243 = arith.divf %241, %242 : vector<16x1xf32>
    %244 = vector.broadcast %243 : vector<16x1xf32> to vector<16x32xf32>
    %245 = arith.subf %239, %244 : vector<16x32xf32>
    %246 = arith.mulf %245, %245 : vector<16x32xf32>
    %cst_68 = arith.constant dense<0.000000e+00> : vector<16xf32>
    %247 = vector.multi_reduction <add>, %246, %cst_68 [1] : vector<16x32xf32> to vector<16xf32>
    %248 = vector.shape_cast %247 : vector<16xf32> to vector<16x1xf32>
    %cst_69 = arith.constant 3.200000e+01 : f32
    %249 = vector.broadcast %cst_69 : f32 to vector<16x1xf32>
    %250 = arith.divf %248, %249 : vector<16x1xf32>
    %251 = vector.broadcast %243 : vector<16x1xf32> to vector<16x32xf32>
    %252 = arith.subf %239, %251 : vector<16x32xf32>
    %cst_70 = arith.constant 9.99999997E-7 : f32
    %253 = vector.broadcast %cst_70 : f32 to vector<16x1xf32>
    %254 = arith.addf %250, %253 : vector<16x1xf32>
    %255 = math.rsqrt %254 : vector<16x1xf32>
    %256 = vector.broadcast %255 : vector<16x1xf32> to vector<16x32xf32>
    %257 = arith.mulf %252, %256 : vector<16x32xf32>
    %258 = vector.broadcast %7 : vector<1x32xf32> to vector<16x32xf32>
    %259 = arith.mulf %257, %258 : vector<16x32xf32>
    %260 = vector.broadcast %8 : vector<1x32xf32> to vector<16x32xf32>
    %261 = arith.addf %259, %260 : vector<16x32xf32>
    %c0_71 = arith.constant 0 : index
    %c0_72 = arith.constant 0 : index
    %262 = vector.load %arg6[%c0_71, %c0_72] : memref<32x128xf32, #tpu.memory_space<vmem>>, vector<32x128xf32>
    %cst_73 = arith.constant dense<0.000000e+00> : vector<16x128xf32>
    %263 = tpu.matmul %261, %262, %cst_73 {dimension_numbers = #tpu.dot_dimension_numbers<[1], [0], [0], [1], [0, 0, 1, 1], [], []>} : vector<16x32xf32>, vector<32x128xf32>, vector<16x128xf32> -> vector<16x128xf32>
    %c0_74 = arith.constant 0 : index
    %c0_75 = arith.constant 0 : index
    %264 = vector.load %arg7[%c0_74, %c0_75] : memref<1x128xf32, #tpu.memory_space<vmem>>, vector<1x128xf32>
    %265 = vector.broadcast %264 : vector<1x128xf32> to vector<16x128xf32>
    %266 = arith.addf %263, %265 : vector<16x128xf32>
    %cst_76 = arith.constant 5.000000e-01 : f32
    %267 = vector.broadcast %cst_76 : f32 to vector<16x128xf32>
    %268 = arith.mulf %267, %266 : vector<16x128xf32>
    %cst_77 = arith.constant 4.471500e-02 : f32
    %269 = vector.broadcast %cst_77 : f32 to vector<16x128xf32>
    %270 = arith.mulf %269, %266 : vector<16x128xf32>
    %271 = arith.mulf %270, %266 : vector<16x128xf32>
    %272 = arith.mulf %271, %266 : vector<16x128xf32>
    %273 = arith.addf %266, %272 : vector<16x128xf32>
    %cst_78 = arith.constant 0.797884583 : f32
    %274 = vector.broadcast %cst_78 : f32 to vector<16x128xf32>
    %275 = arith.mulf %274, %273 : vector<16x128xf32>
    %276 = math.tanh %275 : vector<16x128xf32>
    %cst_79 = arith.constant 1.000000e+00 : f32
    %277 = vector.broadcast %cst_79 : f32 to vector<16x128xf32>
    %278 = arith.addf %277, %276 : vector<16x128xf32>
    %279 = arith.mulf %268, %278 : vector<16x128xf32>
    %c0_80 = arith.constant 0 : index
    %c0_81 = arith.constant 0 : index
    %280 = vector.load %arg8[%c0_80, %c0_81] : memref<128x32xf32, #tpu.memory_space<vmem>>, vector<128x32xf32>
    %cst_82 = arith.constant dense<0.000000e+00> : vector<16x32xf32>
    %281 = tpu.matmul %279, %280, %cst_82 {dimension_numbers = #tpu.dot_dimension_numbers<[1], [0], [0], [1], [0, 0, 1, 1], [], []>} : vector<16x128xf32>, vector<128x32xf32>, vector<16x32xf32> -> vector<16x32xf32>
    %282 = vector.broadcast %10 : vector<1x32xf32> to vector<16x32xf32>
    %283 = arith.addf %281, %282 : vector<16x32xf32>
    %284 = arith.addf %239, %283 : vector<16x32xf32>
    %c0_83 = arith.constant 0 : index
    %c0_84 = arith.constant 0 : index
    %285 = vector.load %arg10[%c0_83, %c0_84] : memref<16x32xf32, #tpu.memory_space<vmem>>, vector<16x32xf32>
    tpu.vector_store %arg10[%c0_83, %c0_84], %284 {strides = array<i32>} : memref<16x32xf32, #tpu.memory_space<vmem>>, vector<16x32xf32>,
    return
  }
  func.func @transform_0(%arg0: i32) -> (i32, i32) {
    %c0_i32 = arith.constant 0 : i32
    %c0_i32_0 = arith.constant 0 : i32
    %c0_i32_1 = arith.constant 0 : i32
    return %c0_i32, %c0_i32_0 : i32, i32
  }
  func.func @transform_1(%arg0: i32) -> (i32, i32) {
    %c0_i32 = arith.constant 0 : i32
    %c0_i32_0 = arith.constant 0 : i32
    %c0_i32_1 = arith.constant 0 : i32
    return %c0_i32, %c0_i32_0 : i32, i32
  }
  func.func @transform_2(%arg0: i32) -> (i32, i32) {
    %c0_i32 = arith.constant 0 : i32
    %c0_i32_0 = arith.constant 0 : i32
    %c0_i32_1 = arith.constant 0 : i32
    return %c0_i32, %c0_i32_0 : i32, i32
  }
  func.func @transform_3(%arg0: i32) -> (i32, i32) {
    %c0_i32 = arith.constant 0 : i32
    %c0_i32_0 = arith.constant 0 : i32
    %c0_i32_1 = arith.constant 0 : i32
    return %c0_i32, %c0_i32_0 : i32, i32
  }
  func.func @transform_4(%arg0: i32) -> (i32, i32) {
    %c0_i32 = arith.constant 0 : i32
    %c0_i32_0 = arith.constant 0 : i32
    %c0_i32_1 = arith.constant 0 : i32
    return %c0_i32, %c0_i32_0 : i32, i32
  }
  func.func @transform_5(%arg0: i32) -> (i32, i32) {
    %c0_i32 = arith.constant 0 : i32
    %c0_i32_0 = arith.constant 0 : i32
    %c0_i32_1 = arith.constant 0 : i32
    return %c0_i32, %c0_i32_0 : i32, i32
  }
  func.func @transform_6(%arg0: i32) -> (i32, i32) {
    %c0_i32 = arith.constant 0 : i32
    %c0_i32_0 = arith.constant 0 : i32
    %c0_i32_1 = arith.constant 0 : i32
    return %c0_i32, %c0_i32_0 : i32, i32
  }
  func.func @transform_7(%arg0: i32) -> (i32, i32) {
    %c0_i32 = arith.constant 0 : i32
    %c0_i32_0 = arith.constant 0 : i32
    %c0_i32_1 = arith.constant 0 : i32
    return %c0_i32, %c0_i32_0 : i32, i32
  }
  func.func @transform_8(%arg0: i32) -> (i32, i32) {
    %c0_i32 = arith.constant 0 : i32
    %c0_i32_0 = arith.constant 0 : i32
    %c0_i32_1 = arith.constant 0 : i32
    return %c0_i32, %c0_i32_0 : i32, i32
  }
  func.func @transform_9(%arg0: i32) -> (i32, i32) {
    %c0_i32 = arith.constant 0 : i32
    %c0_i32_0 = arith.constant 0 : i32
    %c0_i32_1 = arith.constant 0 : i32
    return %c0_i32, %c0_i32_0 : i32, i32
  }
}

</mosaic_0001>

<llo_original>
// kernel: tpu_custom_call.1
$region0: #{tpu_custom_call.1}
  #allocation0 [shape = 'u32[]', space=smem, size = 0x4, offset = 0x4, fixed_abs, tag = 'smem constant byte address 0x4 - core index']
  #allocation1 [shape = 'u32[144,128]{1,0:T(1,128)}', space=vmem, size = 0x12000, scoped, tag = 'internal scratch']
  %s0 = inlined_call_operand.vmem [shape: f32[16,32], index: 0, kind: input, shape index: {}]
  %s1 = inlined_call_operand.vmem [shape: f32[2,8], index: 1, kind: input, shape index: {}]
  %s2 = inlined_call_operand.vmem [shape: f32[32,96], index: 2, kind: input, shape index: {}]
  %s3 = inlined_call_operand.vmem [shape: f32[1,96], index: 3, kind: input, shape index: {}]
  %s4 = inlined_call_operand.vmem [shape: f32[32,32], index: 4, kind: input, shape index: {}]
  %s5 = inlined_call_operand.vmem [shape: f32[32,128], index: 5, kind: input, shape index: {}]
  %s6 = inlined_call_operand.vmem [shape: f32[1,128], index: 6, kind: input, shape index: {}]
  %s7 = inlined_call_operand.vmem [shape: f32[128,32], index: 7, kind: input, shape index: {}]
  %s8 = inlined_call_operand.vmem [shape: f32[6,32], index: 8, kind: input, shape index: {}]
  %s9 = inlined_call_operand.hbm [shape: f32[16,32], index: 9, kind: output, shape index: {}]
  %s10 = sld [smem:[#allocation0]]
  $region46: #{tpu_custom_call.1} parent=0
    _
  %s12 = ssub.s32 1, %s10
  %s13 = scalar_select 0, %s12, %s10
  $region1: #{tpu_custom_call.1} parent=0
    #allocation2 [shape = 'u8[8192]{0}', space=vmem, size = 0x2000, scoped, tag = 'output window, operand 0, single buffered']
    #allocation3 [shape = 's32[1]{0}', space=sflag, size = 0x4, scoped, tag = 'scoped memory for tpu_custom_call.1']
    %14 = vsyncpa [#allocation3], 0
    // Predicated region
    $region2: #{tpu_custom_call.1} parent=1 // pred_check
      _
    $region3: #{tpu_custom_call.1} parent=1 // pred_check_branch
      %16 = sbr.rel (0) target = $region5
    $region4: #{tpu_custom_call.1} parent=1 // pred_region
      _
    $region5: #{tpu_custom_call.1} parent=1 // pred_fallthru
      _
    // Predicated region
    $region6: #{tpu_custom_call.1} parent=1 // pred_check
      _
    $region7: #{tpu_custom_call.1} parent=1 // pred_check_branch
      %18 = sbr.rel (0) target = $region9
    $region8: #{tpu_custom_call.1} parent=1 // pred_region
      _
    $region9: #{tpu_custom_call.1} parent=1 // pred_fallthru
      _
    // Predicated region
    $region10: #{tpu_custom_call.1} parent=1 // pred_check
      _
    $region11: #{tpu_custom_call.1} parent=1 // pred_check_branch
      %20 = sbr.rel (0) target = $region13
    $region12: #{tpu_custom_call.1} parent=1 // pred_region
      _
    $region13: #{tpu_custom_call.1} parent=1 // pred_fallthru
      _
    // Predicated region
    $region14: #{tpu_custom_call.1} parent=1 // pred_check
      _
    $region15: #{tpu_custom_call.1} parent=1 // pred_check_branch
      %22 = sbr.rel (0) target = $region17
    $region16: #{tpu_custom_call.1} parent=1 // pred_region
      _
    $region17: #{tpu_custom_call.1} parent=1 // pred_fallthru
      _
    // Predicated region
    $region18: #{tpu_custom_call.1} parent=1 // pred_check
      _
    $region19: #{tpu_custom_call.1} parent=1 // pred_check_branch
      %24 = sbr.rel (0) target = $region21
    $region20: #{tpu_custom_call.1} parent=1 // pred_region
      _
    $region21: #{tpu_custom_call.1} parent=1 // pred_fallthru
      _
    // Predicated region
    $region22: #{tpu_custom_call.1} parent=1 // pred_check
      _
    $region23: #{tpu_custom_call.1} parent=1 // pred_check_branch
      %26 = sbr.rel (0) target = $region25
    $region24: #{tpu_custom_call.1} parent=1 // pred_region
      _
    $region25: #{tpu_custom_call.1} parent=1 // pred_fallthru
      _
    // Predicated region
    $region26: #{tpu_custom_call.1} parent=1 // pred_check
      _
    $region27: #{tpu_custom_call.1} parent=1 // pred_check_branch
      %28 = sbr.rel (0) target = $region29
    $region28: #{tpu_custom_call.1} parent=1 // pred_region
      _
    $region29: #{tpu_custom_call.1} parent=1 // pred_fallthru
      _
    // Predicated region
    $region30: #{tpu_custom_call.1} parent=1 // pred_check
      _
    $region31: #{tpu_custom_call.1} parent=1 // pred_check_branch
      %30 = sbr.rel (0) target = $region33
    $region32: #{tpu_custom_call.1} parent=1 // pred_region
      _
    $region33: #{tpu_custom_call.1} parent=1 // pred_fallthru
      _
    // Predicated region
    $region34: #{tpu_custom_call.1} parent=1 // pred_check
      _
    $region35: #{tpu_custom_call.1} parent=1 // pred_check_branch
      %32 = sbr.rel (0) target = $region37
    $region36: #{tpu_custom_call.1} parent=1 // pred_region
      _
    $region37: #{tpu_custom_call.1} parent=1 // pred_fallthru
      _
    %v33 = vld [vmem:[%s0] sm:$0xff]
    %v34 = vld [vmem:[%s0 + $0x8] sm:$0xff]
    %v35 = vld [vmem:[%s1] sm:$0x3]
    %vm36 = vcmp.gt.f32.partialorder %v35, 0.0
    %v37 = vld [vmem:[%s8] sm:$0x3f]
    %vm38 = vcmask 261120
    %v39 = vsel %vm38, %v33, 0.0
    %40 = vadd.xlane.f32.xlu0 %v39
    %v41 = vpop.xlane.xlu0 %40
    %v42 = vsel %vm38, %v34, 0.0
    %43 = vadd.xlane.f32.xlu0 %v42
    %v44 = vpop.xlane.xlu0 %43
    %v45 = vrcp.pop 32.0
    %v46 = vmul.f32 %v41, %v45
    %v47 = vmul.f32 %v44, %v45
    %v48 = vsub.f32 %v33, %v46
    %v49 = vsub.f32 %v34, %v47
    %v50 = vmul.f32 %v48, %v48
    %v51 = vmul.f32 %v49, %v49
    %v52 = vsel %vm38, %v50, 0.0
    %53 = vadd.xlane.f32.xlu0 %v52
    %v54 = vpop.xlane.xlu0 %53
    %v55 = vsel %vm38, %v51, 0.0
    %56 = vadd.xlane.f32.xlu0 %v55
    %v57 = vpop.xlane.xlu0 %56
    %v58 = vmul.f32 %v54, %v45
    %v59 = vmul.f32 %v57, %v45
    %v60 = vadd.f32 %v58, 1e-06
    %v61 = vadd.f32 %v59, 1e-06
    %v62 = vrsqrt.pop %v60
    %v63 = vrsqrt.pop %v61
    %v64 = vmul.f32 %v48, %v62
    %v65 = vmul.f32 %v49, %v63
    %v66 = vlaneseq
    %v67 = vshrl.u32 %v66, 7
    %v68 = vsub.s32 0, %v67
    %v69 = vrot.slane %v37, %v68
    %v70 = vmul.f32 %v64, %v69
    %v71 = vmul.f32 %v65, %v69
    %v72 = vlaneseq
    %v73 = vshrl.u32 %v72, 7
    %v74 = vsub.s32 1, %v73
    %v75 = vrot.slane %v37, %v74
    %v76 = vadd.f32 %v70, %v75
    %v77 = vadd.f32 %v71, %v75
    %v78 = vld [vmem:[%s2] sm:$0xff]
    %v79 = vld [vmem:[%s2 + $0x8] sm:$0xff]
    %v80 = vld [vmem:[%s2 + $0x10] sm:$0xff]
    %v81 = vld [vmem:[%s2 + $0x18] sm:$0xff]
    %v82 = vld [vmem:[%s3] sm:$0x1]
    %v84 = vlaneseq
    %v85 = vshrl.u32 %v84, 7
    %v86 = vsub.s32 0, %v85
    %v87 = vrot.slane %v82, %v86
    %v90 = vsel %vm38, %v76, 0
    %v93 = vsel %vm38, %v77, 0
    %95 = vmatprep.subr.mxu0 0.0
    %96 = vmatpush1.msra.mxu0 0.0
    %97 = vmatprep.subr.mxu0 0.0
    %98 = vmatpush1.msra.mxu0 0.0
    %99 = vmatprep.subr.mxu0 0.0
    %100 = vmatpush1.msra.mxu0 0.0
    %101 = vmatprep.subr.mxu0 0.0
    %102 = vmatpush1.msra.mxu0 0.0
    %103 = vmatprep.subr.mxu0 0.0
    %104 = vmatpush1.msra.mxu0 0.0
    %105 = vmatprep.subr.mxu0 0.0
    %106 = vmatpush1.msra.mxu0 0.0
    %107 = vmatprep.subr.mxu0 0.0
    %108 = vmatpush1.msra.mxu0 0.0
    %109 = vmatprep.subr.mxu0 0.0
    %110 = vmatpush1.msra.mxu0 0.0
    %111 = vmatprep.subr.mxu0 0.0
    %112 = vmatpush1.msra.mxu0 0.0
    %113 = vmatprep.subr.mxu0 0.0
    %114 = vmatpush1.msra.mxu0 0.0
    %115 = vmatprep.subr.mxu0 0.0
    %116 = vmatpush1.msra.mxu0 0.0
    %117 = vmatprep.subr.mxu0 0.0
    %118 = vmatpush1.msra.mxu0 0.0
    %119 = vmatprep.subr.mxu0 0.0
    %120 = vmatpush1.msra.mxu0 %v81
    %121 = vmatprep.subr.mxu0 0.0
    %122 = vmatpush1.msra.mxu0 %v80
    %123 = vmatprep.subr.mxu0 0.0
    %124 = vmatpush1.msra.mxu0 %v79
    %125 = vmatprep.subr.mxu0 0.0
    %126 = vmatpush1.msra.mxu0 %v78
    %127 = vmatprep.subr.mxu0 0.0
    %128 = vmatpush2.msra.mxu0 0.0
    %129 = vmatprep.subr.mxu0 0.0
    %130 = vmatpush2.msra.mxu0 0.0
    %131 = vmatprep.subr.mxu0 0.0
    %132 = vmatpush2.msra.mxu0 0.0
    %133 = vmatprep.subr.mxu0 0.0
    %134 = vmatpush2.msra.mxu0 0.0
    %135 = vmatprep.subr.mxu0 0.0
    %136 = vmatpush2.msra.mxu0 0.0
    %137 = vmatprep.subr.mxu0 0.0
    %138 = vmatpush2.msra.mxu0 0.0
    %139 = vmatprep.subr.mxu0 0.0
    %140 = vmatpush2.msra.mxu0 0.0
    %141 = vmatprep.subr.mxu0 0.0
    %142 = vmatpush2.msra.mxu0 0.0
    %143 = vmatprep.subr.mxu0 0.0
    %144 = vmatpush2.msra.mxu0 0.0
    %145 = vmatprep.subr.mxu0 0.0
    %146 = vmatpush2.msra.mxu0 0.0
    %147 = vmatprep.subr.mxu0 0.0
    %148 = vmatpush2.msra.mxu0 0.0
    %149 = vmatprep.subr.mxu0 0.0
    %150 = vmatpush2.msra.mxu0 0.0
    %151 = vmatprep.subr.mxu0 0.0
    %152 = vmatpush2.msra.mxu0 0.0
    %153 = vmatprep.subr.mxu0 0.0
    %154 = vmatpush2.msra.mxu0 0.0
    %155 = vmatprep.subr.mxu0 0.0
    %156 = vmatpush2.msra.mxu0 0.0
    %157 = vmatprep.subr.mxu0 0.0
    %158 = vmatpush2.msra.mxu0 0.0
    %159 = vmatprep.mubr.f32.mxu0 0.0
    %160 = vmatmul.mubr.f32.gmra.mxu0 %v90
    %v161 = vpop.f32.mrf.mxu0
    %v162 = vadd.f32 %v87, %v161
    %v163 = vpop.f32.mrf.mxu0
    %164 = vmatprep.mubr.f32.mxu0 0.0
    %165 = vmatmul.mubr.f32.gmra.mxu0 %v93
    %v166 = vpop.f32.mrf.mxu0
    %v167 = vadd.f32 %v87, %v166
    %v168 = vpop.f32.mrf.mxu0
    %169 = vdwg.mxu0
    %171 = vrot.lane.b32.xlu0 %v162, 96
    %v172 = vpop.permute.xlu0 %171
    %vm173 = vcmask 64512
    %v174 = vsel %vm173, %v162, 0
    %v176 = vsel %vm173, %v172, 0
    %178 = vmatprep.subr.mxu0 0.0
    %179 = vmatpush1.xpose.msra.mxu0 0.0
    %180 = vmatprep.subr.mxu0 0.0
    %181 = vmatpush1.xpose.msra.mxu0 0.0
    %182 = vmatprep.subr.mxu0 0.0
    %183 = vmatpush1.xpose.msra.mxu0 0.0
    %184 = vmatprep.subr.mxu0 0.0
    %185 = vmatpush1.xpose.msra.mxu0 0.0
    %186 = vmatprep.subr.mxu0 0.0
    %187 = vmatpush1.xpose.msra.mxu0 0.0
    %188 = vmatprep.subr.mxu0 0.0
    %189 = vmatpush1.xpose.msra.mxu0 0.0
    %190 = vmatprep.subr.mxu0 0.0
    %191 = vmatpush1.xpose.msra.mxu0 0.0
    %192 = vmatprep.subr.mxu0 0.0
    %193 = vmatpush1.xpose.msra.mxu0 0.0
    %194 = vmatprep.subr.mxu0 0.0
    %195 = vmatpush1.xpose.msra.mxu0 0.0
    %196 = vmatprep.subr.mxu0 0.0
    %197 = vmatpush1.xpose.msra.mxu0 0.0
    %198 = vmatprep.subr.mxu0 0.0
    %199 = vmatpush1.xpose.msra.mxu0 0.0
    %200 = vmatprep.subr.mxu0 0.0
    %201 = vmatpush1.xpose.msra.mxu0 0.0
    %202 = vmatprep.subr.mxu0 0.0
    %203 = vmatpush1.xpose.msra.mxu0 0.0
    %204 = vmatprep.subr.mxu0 0.0
    %205 = vmatpush1.xpose.msra.mxu0 0.0
    %206 = vmatprep.subr.mxu0 0.0
    %207 = vmatpush1.xpose.msra.mxu0 0.0
    %208 = vmatprep.subr.mxu0 0.0
    %209 = vmatpush1.xpose.msra.mxu0 %v176
    %210 = vmatprep.subr.mxu0 0.0
    %211 = vmatpush2.xpose.msra.mxu0 0.0
    %212 = vmatprep.subr.mxu0 0.0
    %213 = vmatpush2.xpose.msra.mxu0 0.0
    %214 = vmatprep.subr.mxu0 0.0
    %215 = vmatpush2.xpose.msra.mxu0 0.0
    %216 = vmatprep.subr.mxu0 0.0
    %217 = vmatpush2.xpose.msra.mxu0 0.0
    %218 = vmatprep.subr.mxu0 0.0
    %219 = vmatpush2.xpose.msra.mxu0 0.0
    %220 = vmatprep.subr.mxu0 0.0
    %221 = vmatpush2.xpose.msra.mxu0 0.0
    %222 = vmatprep.subr.mxu0 0.0
    %223 = vmatpush2.xpose.msra.mxu0 0.0
    %224 = vmatprep.subr.mxu0 0.0
    %225 = vmatpush2.xpose.msra.mxu0 0.0
    %226 = vmatprep.subr.mxu0 0.0
    %227 = vmatpush2.xpose.msra.mxu0 0.0
    %228 = vmatprep.subr.mxu0 0.0
    %229 = vmatpush2.xpose.msra.mxu0 0.0
    %230 = vmatprep.subr.mxu0 0.0
    %231 = vmatpush2.xpose.msra.mxu0 0.0
    %232 = vmatprep.subr.mxu0 0.0
    %233 = vmatpush2.xpose.msra.mxu0 0.0
    %234 = vmatprep.subr.mxu0 0.0
    %235 = vmatpush2.xpose.msra.mxu0 0.0
    %236 = vmatprep.subr.mxu0 0.0
    %237 = vmatpush2.xpose.msra.mxu0 0.0
    %238 = vmatprep.subr.mxu0 0.0
    %239 = vmatpush2.xpose.msra.mxu0 0.0
    %240 = vmatprep.subr.mxu0 0.0
    %241 = vmatpush2.xpose.msra.mxu0 0.0
    %242 = vmatprep.mubr.f32.mxu0 0.0
    %243 = vmatmul.mubr.f32.gmra.mxu0 %v174
    %v244 = vpop.f32.mrf.mxu0
    %v245 = vadd.f32 0.0, %v244
    %v246 = vpop.f32.mrf.mxu0
    %247 = vdwg.mxu0
    %v248 = vsel %vm36, 1, 0
    %vm249 = vcmp.eq.s32.totalorder %v248, 1
    %v251 = vrot.slane %v245, 1
    %v252 = vrot.slane %v245, 2
    %v253 = vrot.slane %v245, 3
    %v254 = vrot.slane %v245, 4
    %v255 = vrot.slane %v245, 5
    %v256 = vrot.slane %v245, 6
    %v257 = vrot.slane %v245, 7
    %v266 = vsel %vm249, %v245, -1e+30
    %v267 = vsel %vm249, %v251, -1e+30
    %v268 = vsel %vm249, %v252, -1e+30
    %v269 = vsel %vm249, %v253, -1e+30
    %v270 = vsel %vm249, %v254, -1e+30
    %v271 = vsel %vm249, %v255, -1e+30
    %v272 = vsel %vm249, %v256, -1e+30
    %v273 = vsel %vm249, %v257, -1e+30
    %v282 = vrot.slane %v267, 7
    %vm283 = vcmask 1041409
    %v284 = vsel %vm283, %v282, %v266
    %v285 = vrot.slane %v268, 6
    %vm286 = vcmask 1042434
    %v287 = vsel %vm286, %v285, %v284
    %v288 = vrot.slane %v269, 5
    %vm289 = vcmask 1043459
    %v290 = vsel %vm289, %v288, %v287
    %v291 = vrot.slane %v270, 4
    %vm292 = vcmask 1044484
    %v293 = vsel %vm292, %v291, %v290
    %v294 = vrot.slane %v271, 3
    %vm295 = vcmask 1045509
    %v296 = vsel %vm295, %v294, %v293
    %v297 = vrot.slane %v272, 2
    %vm298 = vcmask 1046534
    %v299 = vsel %vm298, %v297, %v296
    %v300 = vrot.slane %v273, 1
    %vm301 = vcmask 1047559
    %v302 = vsel %vm301, %v300, %v299
    %v304 = vsel %vm173, %v302, -inf
    %305 = vmax.xlane.f32.xlu0 %v304
    %v306 = vpop.xlane.xlu0 %305
    %v308 = vrot.slane %v306, 1
    %v309 = vrot.slane %v306, 2
    %v310 = vrot.slane %v306, 3
    %v311 = vrot.slane %v306, 4
    %v312 = vrot.slane %v306, 5
    %v313 = vrot.slane %v306, 6
    %v314 = vrot.slane %v306, 7
    %v323 = vsub.f32 %v266, %v306
    %v324 = vsub.f32 %v267, %v308
    %v325 = vsub.f32 %v268, %v309
    %v326 = vsub.f32 %v269, %v310
    %v327 = vsub.f32 %v270, %v311
    %v328 = vsub.f32 %v271, %v312
    %v329 = vsub.f32 %v272, %v313
    %v330 = vsub.f32 %v273, %v314
    %v331 = vmul.f32 %v323, 1.442695
    %v332 = vpow.pop %v331
    %v333 = vmul.f32 %v324, 1.442695
    %v334 = vpow.pop %v333
    %v335 = vmul.f32 %v325, 1.442695
    %v336 = vpow.pop %v335
    %v337 = vmul.f32 %v326, 1.442695
    %v338 = vpow.pop %v337
    %v339 = vmul.f32 %v327, 1.442695
    %v340 = vpow.pop %v339
    %v341 = vmul.f32 %v328, 1.442695
    %v342 = vpow.pop %v341
    %v343 = vmul.f32 %v329, 1.442695
    %v344 = vpow.pop %v343
    %v345 = vmul.f32 %v330, 1.442695
    %v346 = vpow.pop %v345
    %v355 = vrot.slane %v334, 7
    %v356 = vsel %vm283, %v355, %v332
    %v357 = vrot.slane %v336, 6
    %v358 = vsel %vm286, %v357, %v356
    %v359 = vrot.slane %v338, 5
    %v360 = vsel %vm289, %v359, %v358
    %v361 = vrot.slane %v340, 4
    %v362 = vsel %vm292, %v361, %v360
    %v363 = vrot.slane %v342, 3
    %v364 = vsel %vm295, %v363, %v362
    %v365 = vrot.slane %v344, 2
    %v366 = vsel %vm298, %v365, %v364
    %v367 = vrot.slane %v346, 1
    %v368 = vsel %vm301, %v367, %v366
    %v370 = vsel %vm173, %v368, 0.0
    %371 = vadd.xlane.f32.xlu0 %v370
    %v372 = vpop.xlane.xlu0 %371
    %v373 = vrcp.pop %v372
    %v375 = vrot.slane %v373, 1
    %v376 = vrot.slane %v373, 2
    %v377 = vrot.slane %v373, 3
    %v378 = vrot.slane %v373, 4
    %v379 = vrot.slane %v373, 5
    %v380 = vrot.slane %v373, 6
    %v381 = vrot.slane %v373, 7
    %v390 = vmul.f32 %v332, %v373
    %v391 = vmul.f32 %v334, %v375
    %v392 = vmul.f32 %v336, %v376
    %v393 = vmul.f32 %v338, %v377
    %v394 = vmul.f32 %v340, %v378
    %v395 = vmul.f32 %v342, %v379
    %v396 = vmul.f32 %v344, %v380
    %v397 = vmul.f32 %v346, %v381
    %v398 = vsel %vm249, %v390, 0.0
    %v399 = vsel %vm249, %v391, 0.0
    %v400 = vsel %vm249, %v392, 0.0
    %v401 = vsel %vm249, %v393, 0.0
    %v402 = vsel %vm249, %v394, 0.0
    %v403 = vsel %vm249, %v395, 0.0
    %v404 = vsel %vm249, %v396, 0.0
    %v405 = vsel %vm249, %v397, 0.0
    %v414 = vrot.slane %v399, 7
    %v415 = vsel %vm283, %v414, %v398
    %v416 = vrot.slane %v400, 6
    %v417 = vsel %vm286, %v416, %v415
    %v418 = vrot.slane %v401, 5
    %v419 = vsel %vm289, %v418, %v417
    %v420 = vrot.slane %v402, 4
    %v421 = vsel %vm292, %v420, %v419
    %v422 = vrot.slane %v403, 3
    %v423 = vsel %vm295, %v422, %v421
    %v424 = vrot.slane %v404, 2
    %v425 = vsel %vm298, %v424, %v423
    %v426 = vrot.slane %v405, 1
    %v427 = vsel %vm301, %v426, %v425
    %428 = vrot.lane.b32.xlu0 %v162, 64
    %v429 = vpop.permute.xlu0 %428
    %v431 = vsel %vm173, %v427, 0
    %433 = vmatprep.subr.mxu0 0.0
    %434 = vmatpush1.msra.mxu0 0.0
    %435 = vmatprep.subr.mxu0 0.0
    %436 = vmatpush1.msra.mxu0 0.0
    %437 = vmatprep.subr.mxu0 0.0
    %438 = vmatpush1.msra.mxu0 0.0
    %439 = vmatprep.subr.mxu0 0.0
    %440 = vmatpush1.msra.mxu0 0.0
    %441 = vmatprep.subr.mxu0 0.0
    %442 = vmatpush1.msra.mxu0 0.0
    %443 = vmatprep.subr.mxu0 0.0
    %444 = vmatpush1.msra.mxu0 0.0
    %445 = vmatprep.subr.mxu0 0.0
    %446 = vmatpush1.msra.mxu0 0.0
    %447 = vmatprep.subr.mxu0 0.0
    %448 = vmatpush1.msra.mxu0 0.0
    %449 = vmatprep.subr.mxu0 0.0
    %450 = vmatpush1.msra.mxu0 0.0
    %451 = vmatprep.subr.mxu0 0.0
    %452 = vmatpush1.msra.mxu0 0.0
    %453 = vmatprep.subr.mxu0 0.0
    %454 = vmatpush1.msra.mxu0 0.0
    %455 = vmatprep.subr.mxu0 0.0
    %456 = vmatpush1.msra.mxu0 0.0
    %457 = vmatprep.subr.mxu0 0.0
    %458 = vmatpush1.msra.mxu0 0.0
    %459 = vmatprep.subr.mxu0 0.0
    %460 = vmatpush1.msra.mxu0 0.0
    %461 = vmatprep.subr.mxu0 0.0
    %462 = vmatpush1.msra.mxu0 0.0
    %463 = vmatprep.subr.mxu0 0.0
    %464 = vmatpush1.msra.mxu0 %v429
    %465 = vmatprep.subr.mxu0 0.0
    %466 = vmatpush2.msra.mxu0 0.0
    %467 = vmatprep.subr.mxu0 0.0
    %468 = vmatpush2.msra.mxu0 0.0
    %469 = vmatprep.subr.mxu0 0.0
    %470 = vmatpush2.msra.mxu0 0.0
    %471 = vmatprep.subr.mxu0 0.0
    %472 = vmatpush2.msra.mxu0 0.0
    %473 = vmatprep.subr.mxu0 0.0
    %474 = vmatpush2.msra.mxu0 0.0
    %475 = vmatprep.subr.mxu0 0.0
    %476 = vmatpush2.msra.mxu0 0.0
    %477 = vmatprep.subr.mxu0 0.0
    %478 = vmatpush2.msra.mxu0 0.0
    %479 = vmatprep.subr.mxu0 0.0
    %480 = vmatpush2.msra.mxu0 0.0
    %481 = vmatprep.subr.mxu0 0.0
    %482 = vmatpush2.msra.mxu0 0.0
    %483 = vmatprep.subr.mxu0 0.0
    %484 = vmatpush2.msra.mxu0 0.0
    %485 = vmatprep.subr.mxu0 0.0
    %486 = vmatpush2.msra.mxu0 0.0
    %487 = vmatprep.subr.mxu0 0.0
    %488 = vmatpush2.msra.mxu0 0.0
    %489 = vmatprep.subr.mxu0 0.0
    %490 = vmatpush2.msra.mxu0 0.0
    %491 = vmatprep.subr.mxu0 0.0
    %492 = vmatpush2.msra.mxu0 0.0
    %493 = vmatprep.subr.mxu0 0.0
    %494 = vmatpush2.msra.mxu0 0.0
    %495 = vmatprep.subr.mxu0 0.0
    %496 = vmatpush2.msra.mxu0 0.0
    %497 = vmatprep.mubr.f32.mxu0 0.0
    %498 = vmatmul.mubr.f32.gmra.mxu0 %v431
    %v499 = vpop.f32.mrf.mxu0
    %v500 = vadd.f32 0.0, %v499
    %v501 = vpop.f32.mrf.mxu0
    %502 = vdwg.mxu0
    %503 = vrot.lane.b32.xlu0 %v162, 120
    %v504 = vpop.permute.xlu0 %503
    %505 = vrot.lane.b32.xlu0 %v162, 88
    %v506 = vpop.permute.xlu0 %505
    %v507 = vsel %vm173, %v504, 0
    %v509 = vsel %vm173, %v506, 0
    %511 = vmatprep.subr.mxu0 0.0
    %512 = vmatpush1.xpose.msra.mxu0 0.0
    %513 = vmatprep.subr.mxu0 0.0
    %514 = vmatpush1.xpose.msra.mxu0 0.0
    %515 = vmatprep.subr.mxu0 0.0
    %516 = vmatpush1.xpose.msra.mxu0 0.0
    %517 = vmatprep.subr.mxu0 0.0
    %518 = vmatpush1.xpose.msra.mxu0 0.0
    %519 = vmatprep.subr.mxu0 0.0
    %520 = vmatpush1.xpose.msra.mxu0 0.0
    %521 = vmatprep.subr.mxu0 0.0
    %522 = vmatpush1.xpose.msra.mxu0 0.0
    %523 = vmatprep.subr.mxu0 0.0
    %524 = vmatpush1.xpose.msra.mxu0 0.0
    %525 = vmatprep.subr.mxu0 0.0
    %526 = vmatpush1.xpose.msra.mxu0 0.0
    %527 = vmatprep.subr.mxu0 0.0
    %528 = vmatpush1.xpose.msra.mxu0 0.0
    %529 = vmatprep.subr.mxu0 0.0
    %530 = vmatpush1.xpose.msra.mxu0 0.0
    %531 = vmatprep.subr.mxu0 0.0
    %532 = vmatpush1.xpose.msra.mxu0 0.0
    %533 = vmatprep.subr.mxu0 0.0
    %534 = vmatpush1.xpose.msra.mxu0 0.0
    %535 = vmatprep.subr.mxu0 0.0
    %536 = vmatpush1.xpose.msra.mxu0 0.0
    %537 = vmatprep.subr.mxu0 0.0
    %538 = vmatpush1.xpose.msra.mxu0 0.0
    %539 = vmatprep.subr.mxu0 0.0
    %540 = vmatpush1.xpose.msra.mxu0 0.0
    %541 = vmatprep.subr.mxu0 0.0
    %542 = vmatpush1.xpose.msra.mxu0 %v509
    %543 = vmatprep.subr.mxu0 0.0
    %544 = vmatpush2.xpose.msra.mxu0 0.0
    %545 = vmatprep.subr.mxu0 0.0
    %546 = vmatpush2.xpose.msra.mxu0 0.0
    %547 = vmatprep.subr.mxu0 0.0
    %548 = vmatpush2.xpose.msra.mxu0 0.0
    %549 = vmatprep.subr.mxu0 0.0
    %550 = vmatpush2.xpose.msra.mxu0 0.0
    %551 = vmatprep.subr.mxu0 0.0
    %552 = vmatpush2.xpose.msra.mxu0 0.0
    %553 = vmatprep.subr.mxu0 0.0
    %554 = vmatpush2.xpose.msra.mxu0 0.0
    %555 = vmatprep.subr.mxu0 0.0
    %556 = vmatpush2.xpose.msra.mxu0 0.0
    %557 = vmatprep.subr.mxu0 0.0
    %558 = vmatpush2.xpose.msra.mxu0 0.0
    %559 = vmatprep.subr.mxu0 0.0
    %560 = vmatpush2.xpose.msra.mxu0 0.0
    %561 = vmatprep.subr.mxu0 0.0
    %562 = vmatpush2.xpose.msra.mxu0 0.0
    %563 = vmatprep.subr.mxu0 0.0
    %564 = vmatpush2.xpose.msra.mxu0 0.0
    %565 = vmatprep.subr.mxu0 0.0
    %566 = vmatpush2.xpose.msra.mxu0 0.0
    %567 = vmatprep.subr.mxu0 0.0
    %568 = vmatpush2.xpose.msra.mxu0 0.0
    %569 = vmatprep.subr.mxu0 0.0
    %570 = vmatpush2.xpose.msra.mxu0 0.0
    %571 = vmatprep.subr.mxu0 0.0
    %572 = vmatpush2.xpose.msra.mxu0 0.0
    %573 = vmatprep.subr.mxu0 0.0
    %574 = vmatpush2.xpose.msra.mxu0 0.0
    %575 = vmatprep.mubr.f32.mxu0 0.0
    %576 = vmatmul.mubr.f32.gmra.mxu0 %v507
    %v577 = vpop.f32.mrf.mxu0
    %v578 = vadd.f32 0.0, %v577
    %v579 = vpop.f32.mrf.mxu0
    %580 = vdwg.mxu0
    %v582 = vrot.slane %v578, 1
    %v583 = vrot.slane %v578, 2
    %v584 = vrot.slane %v578, 3
    %v585 = vrot.slane %v578, 4
    %v586 = vrot.slane %v578, 5
    %v587 = vrot.slane %v578, 6
    %v588 = vrot.slane %v578, 7
    %v597 = vsel %vm249, %v578, -1e+30
    %v598 = vsel %vm249, %v582, -1e+30
    %v599 = vsel %vm249, %v583, -1e+30
    %v600 = vsel %vm249, %v584, -1e+30
    %v601 = vsel %vm249, %v585, -1e+30
    %v602 = vsel %vm249, %v586, -1e+30
    %v603 = vsel %vm249, %v587, -1e+30
    %v604 = vsel %vm249, %v588, -1e+30
    %v613 = vrot.slane %v598, 7
    %v614 = vsel %vm283, %v613, %v597
    %v615 = vrot.slane %v599, 6
    %v616 = vsel %vm286, %v615, %v614
    %v617 = vrot.slane %v600, 5
    %v618 = vsel %vm289, %v617, %v616
    %v619 = vrot.slane %v601, 4
    %v620 = vsel %vm292, %v619, %v618
    %v621 = vrot.slane %v602, 3
    %v622 = vsel %vm295, %v621, %v620
    %v623 = vrot.slane %v603, 2
    %v624 = vsel %vm298, %v623, %v622
    %v625 = vrot.slane %v604, 1
    %v626 = vsel %vm301, %v625, %v624
    %v628 = vsel %vm173, %v626, -inf
    %629 = vmax.xlane.f32.xlu0 %v628
    %v630 = vpop.xlane.xlu0 %629
    %v632 = vrot.slane %v630, 1
    %v633 = vrot.slane %v630, 2
    %v634 = vrot.slane %v630, 3
    %v635 = vrot.slane %v630, 4
    %v636 = vrot.slane %v630, 5
    %v637 = vrot.slane %v630, 6
    %v638 = vrot.slane %v630, 7
    %v647 = vsub.f32 %v597, %v630
    %v648 = vsub.f32 %v598, %v632
    %v649 = vsub.f32 %v599, %v633
    %v650 = vsub.f32 %v600, %v634
    %v651 = vsub.f32 %v601, %v635
    %v652 = vsub.f32 %v602, %v636
    %v653 = vsub.f32 %v603, %v637
    %v654 = vsub.f32 %v604, %v638
    %v655 = vmul.f32 %v647, 1.442695
    %v656 = vpow.pop %v655
    %v657 = vmul.f32 %v648, 1.442695
    %v658 = vpow.pop %v657
    %v659 = vmul.f32 %v649, 1.442695
    %v660 = vpow.pop %v659
    %v661 = vmul.f32 %v650, 1.442695
    %v662 = vpow.pop %v661
    %v663 = vmul.f32 %v651, 1.442695
    %v664 = vpow.pop %v663
    %v665 = vmul.f32 %v652, 1.442695
    %v666 = vpow.pop %v665
    %v667 = vmul.f32 %v653, 1.442695
    %v668 = vpow.pop %v667
    %v669 = vmul.f32 %v654, 1.442695
    %v670 = vpow.pop %v669
    %v679 = vrot.slane %v658, 7
    %v680 = vsel %vm283, %v679, %v656
    %v681 = vrot.slane %v660, 6
    %v682 = vsel %vm286, %v681, %v680
    %v683 = vrot.slane %v662, 5
    %v684 = vsel %vm289, %v683, %v682
    %v685 = vrot.slane %v664, 4
    %v686 = vsel %vm292, %v685, %v684
    %v687 = vrot.slane %v666, 3
    %v688 = vsel %vm295, %v687, %v686
    %v689 = vrot.slane %v668, 2
    %v690 = vsel %vm298, %v689, %v688
    %v691 = vrot.slane %v670, 1
    %v692 = vsel %vm301, %v691, %v690
    %v694 = vsel %vm173, %v692, 0.0
    %695 = vadd.xlane.f32.xlu0 %v694
    %v696 = vpop.xlane.xlu0 %695
    %v697 = vrcp.pop %v696
    %v699 = vrot.slane %v697, 1
    %v700 = vrot.slane %v697, 2
    %v701 = vrot.slane %v697, 3
    %v702 = vrot.slane %v697, 4
    %v703 = vrot.slane %v697, 5
    %v704 = vrot.slane %v697, 6
    %v705 = vrot.slane %v697, 7
    %v714 = vmul.f32 %v656, %v697
    %v715 = vmul.f32 %v658, %v699
    %v716 = vmul.f32 %v660, %v700
    %v717 = vmul.f32 %v662, %v701
    %v718 = vmul.f32 %v664, %v702
    %v719 = vmul.f32 %v666, %v703
    %v720 = vmul.f32 %v668, %v704
    %v721 = vmul.f32 %v670, %v705
    %v722 = vsel %vm249, %v714, 0.0
    %v723 = vsel %vm249, %v715, 0.0
    %v724 = vsel %vm249, %v716, 0.0
    %v725 = vsel %vm249, %v717, 0.0
    %v726 = vsel %vm249, %v718, 0.0
    %v727 = vsel %vm249, %v719, 0.0
    %v728 = vsel %vm249, %v720, 0.0
    %v729 = vsel %vm249, %v721, 0.0
    %v738 = vrot.slane %v723, 7
    %v739 = vsel %vm283, %v738, %v722
    %v740 = vrot.slane %v724, 6
    %v741 = vsel %vm286, %v740, %v739
    %v742 = vrot.slane %v725, 5
    %v743 = vsel %vm289, %v742, %v741
    %v744 = vrot.slane %v726, 4
    %v745 = vsel %vm292, %v744, %v743
    %v746 = vrot.slane %v727, 3
    %v747 = vsel %vm295, %v746, %v745
    %v748 = vrot.slane %v728, 2
    %v749 = vsel %vm298, %v748, %v747
    %v750 = vrot.slane %v729, 1
    %v751 = vsel %vm301, %v750, %v749
    %752 = vrot.lane.b32.xlu0 %v162, 56
    %v753 = vpop.permute.xlu0 %752
    %v755 = vsel %vm173, %v751, 0
    %757 = vmatprep.subr.mxu0 0.0
    %758 = vmatpush1.msra.mxu0 0.0
    %759 = vmatprep.subr.mxu0 0.0
    %760 = vmatpush1.msra.mxu0 0.0
    %761 = vmatprep.subr.mxu0 0.0
    %762 = vmatpush1.msra.mxu0 0.0
    %763 = vmatprep.subr.mxu0 0.0
    %764 = vmatpush1.msra.mxu0 0.0
    %765 = vmatprep.subr.mxu0 0.0
    %766 = vmatpush1.msra.mxu0 0.0
    %767 = vmatprep.subr.mxu0 0.0
    %768 = vmatpush1.msra.mxu0 0.0
    %769 = vmatprep.subr.mxu0 0.0
    %770 = vmatpush1.msra.mxu0 0.0
    %771 = vmatprep.subr.mxu0 0.0
    %772 = vmatpush1.msra.mxu0 0.0
    %773 = vmatprep.subr.mxu0 0.0
    %774 = vmatpush1.msra.mxu0 0.0
    %775 = vmatprep.subr.mxu0 0.0
    %776 = vmatpush1.msra.mxu0 0.0
    %777 = vmatprep.subr.mxu0 0.0
    %778 = vmatpush1.msra.mxu0 0.0
    %779 = vmatprep.subr.mxu0 0.0
    %780 = vmatpush1.msra.mxu0 0.0
    %781 = vmatprep.subr.mxu0 0.0
    %782 = vmatpush1.msra.mxu0 0.0
    %783 = vmatprep.subr.mxu0 0.0
    %784 = vmatpush1.msra.mxu0 0.0
    %785 = vmatprep.subr.mxu0 0.0
    %786 = vmatpush1.msra.mxu0 0.0
    %787 = vmatprep.subr.mxu0 0.0
    %788 = vmatpush1.msra.mxu0 %v753
    %789 = vmatprep.subr.mxu0 0.0
    %790 = vmatpush2.msra.mxu0 0.0
    %791 = vmatprep.subr.mxu0 0.0
    %792 = vmatpush2.msra.mxu0 0.0
    %793 = vmatprep.subr.mxu0 0.0
    %794 = vmatpush2.msra.mxu0 0.0
    %795 = vmatprep.subr.mxu0 0.0
    %796 = vmatpush2.msra.mxu0 0.0
    %797 = vmatprep.subr.mxu0 0.0
    %798 = vmatpush2.msra.mxu0 0.0
    %799 = vmatprep.subr.mxu0 0.0
    %800 = vmatpush2.msra.mxu0 0.0
    %801 = vmatprep.subr.mxu0 0.0
    %802 = vmatpush2.msra.mxu0 0.0
    %803 = vmatprep.subr.mxu0 0.0
    %804 = vmatpush2.msra.mxu0 0.0
    %805 = vmatprep.subr.mxu0 0.0
    %806 = vmatpush2.msra.mxu0 0.0
    %807 = vmatprep.subr.mxu0 0.0
    %808 = vmatpush2.msra.mxu0 0.0
    %809 = vmatprep.subr.mxu0 0.0
    %810 = vmatpush2.msra.mxu0 0.0
    %811 = vmatprep.subr.mxu0 0.0
    %812 = vmatpush2.msra.mxu0 0.0
    %813 = vmatprep.subr.mxu0 0.0
    %814 = vmatpush2.msra.mxu0 0.0
    %815 = vmatprep.subr.mxu0 0.0
    %816 = vmatpush2.msra.mxu0 0.0
    %817 = vmatprep.subr.mxu0 0.0
    %818 = vmatpush2.msra.mxu0 0.0
    %819 = vmatprep.subr.mxu0 0.0
    %820 = vmatpush2.msra.mxu0 0.0
    %821 = vmatprep.mubr.f32.mxu0 0.0
    %822 = vmatmul.mubr.f32.gmra.mxu0 %v755
    %v823 = vpop.f32.mrf.mxu0
    %v824 = vadd.f32 0.0, %v823
    %v825 = vpop.f32.mrf.mxu0
    %826 = vdwg.mxu0
    %827 = vrot.lane.b32.xlu0 %v162, 112
    %v828 = vpop.permute.xlu0 %827
    %829 = vrot.lane.b32.xlu0 %v162, 80
    %v830 = vpop.permute.xlu0 %829
    %v831 = vsel %vm173, %v828, 0
    %v833 = vsel %vm173, %v830, 0
    %835 = vmatprep.subr.mxu0 0.0
    %836 = vmatpush1.xpose.msra.mxu0 0.0
    %837 = vmatprep.subr.mxu0 0.0
    %838 = vmatpush1.xpose.msra.mxu0 0.0
    %839 = vmatprep.subr.mxu0 0.0
    %840 = vmatpush1.xpose.msra.mxu0 0.0
    %841 = vmatprep.subr.mxu0 0.0
    %842 = vmatpush1.xpose.msra.mxu0 0.0
    %843 = vmatprep.subr.mxu0 0.0
    %844 = vmatpush1.xpose.msra.mxu0 0.0
    %845 = vmatprep.subr.mxu0 0.0
    %846 = vmatpush1.xpose.msra.mxu0 0.0
    %847 = vmatprep.subr.mxu0 0.0
    %848 = vmatpush1.xpose.msra.mxu0 0.0
    %849 = vmatprep.subr.mxu0 0.0
    %850 = vmatpush1.xpose.msra.mxu0 0.0
    %851 = vmatprep.subr.mxu0 0.0
    %852 = vmatpush1.xpose.msra.mxu0 0.0
    %853 = vmatprep.subr.mxu0 0.0
    %854 = vmatpush1.xpose.msra.mxu0 0.0
    %855 = vmatprep.subr.mxu0 0.0
    %856 = vmatpush1.xpose.msra.mxu0 0.0
    %857 = vmatprep.subr.mxu0 0.0
    %858 = vmatpush1.xpose.msra.mxu0 0.0
    %859 = vmatprep.subr.mxu0 0.0
    %860 = vmatpush1.xpose.msra.mxu0 0.0
    %861 = vmatprep.subr.mxu0 0.0
    %862 = vmatpush1.xpose.msra.mxu0 0.0
    %863 = vmatprep.subr.mxu0 0.0
    %864 = vmatpush1.xpose.msra.mxu0 0.0
    %865 = vmatprep.subr.mxu0 0.0
    %866 = vmatpush1.xpose.msra.mxu0 %v833
    %867 = vmatprep.subr.mxu0 0.0
    %868 = vmatpush2.xpose.msra.mxu0 0.0
    %869 = vmatprep.subr.mxu0 0.0
    %870 = vmatpush2.xpose.msra.mxu0 0.0
    %871 = vmatprep.subr.mxu0 0.0
    %872 = vmatpush2.xpose.msra.mxu0 0.0
    %873 = vmatprep.subr.mxu0 0.0
    %874 = vmatpush2.xpose.msra.mxu0 0.0
    %875 = vmatprep.subr.mxu0 0.0
    %876 = vmatpush2.xpose.msra.mxu0 0.0
    %877 = vmatprep.subr.mxu0 0.0
    %878 = vmatpush2.xpose.msra.mxu0 0.0
    %879 = vmatprep.subr.mxu0 0.0
    %880 = vmatpush2.xpose.msra.mxu0 0.0
    %881 = vmatprep.subr.mxu0 0.0
    %882 = vmatpush2.xpose.msra.mxu0 0.0
    %883 = vmatprep.subr.mxu0 0.0
    %884 = vmatpush2.xpose.msra.mxu0 0.0
    %885 = vmatprep.subr.mxu0 0.0
    %886 = vmatpush2.xpose.msra.mxu0 0.0
    %887 = vmatprep.subr.mxu0 0.0
    %888 = vmatpush2.xpose.msra.mxu0 0.0
    %889 = vmatprep.subr.mxu0 0.0
    %890 = vmatpush2.xpose.msra.mxu0 0.0
    %891 = vmatprep.subr.mxu0 0.0
    %892 = vmatpush2.xpose.msra.mxu0 0.0
    %893 = vmatprep.subr.mxu0 0.0
    %894 = vmatpush2.xpose.msra.mxu0 0.0
    %895 = vmatprep.subr.mxu0 0.0
    %896 = vmatpush2.xpose.msra.mxu0 0.0
    %897 = vmatprep.subr.mxu0 0.0
    %898 = vmatpush2.xpose.msra.mxu0 0.0
    %899 = vmatprep.mubr.f32.mxu0 0.0
    %900 = vmatmul.mubr.f32.gmra.mxu0 %v831
    %v901 = vpop.f32.mrf.mxu0
    %v902 = vadd.f32 0.0, %v901
    %v903 = vpop.f32.mrf.mxu0
    %904 = vdwg.mxu0
    %v906 = vrot.slane %v902, 1
    %v907 = vrot.slane %v902, 2
    %v908 = vrot.slane %v902, 3
    %v909 = vrot.slane %v902, 4
    %v910 = vrot.slane %v902, 5
    %v911 = vrot.slane %v902, 6
    %v912 = vrot.slane %v902, 7
    %v921 = vsel %vm249, %v902, -1e+30
    %v922 = vsel %vm249, %v906, -1e+30
    %v923 = vsel %vm249, %v907, -1e+30
    %v924 = vsel %vm249, %v908, -1e+30
    %v925 = vsel %vm249, %v909, -1e+30
    %v926 = vsel %vm249, %v910, -1e+30
    %v927 = vsel %vm249, %v911, -1e+30
    %v928 = vsel %vm249, %v912, -1e+30
    %v937 = vrot.slane %v922, 7
    %v938 = vsel %vm283, %v937, %v921
    %v939 = vrot.slane %v923, 6
    %v940 = vsel %vm286, %v939, %v938
    %v941 = vrot.slane %v924, 5
    %v942 = vsel %vm289, %v941, %v940
    %v943 = vrot.slane %v925, 4
    %v944 = vsel %vm292, %v943, %v942
    %v945 = vrot.slane %v926, 3
    %v946 = vsel %vm295, %v945, %v944
    %v947 = vrot.slane %v927, 2
    %v948 = vsel %vm298, %v947, %v946
    %v949 = vrot.slane %v928, 1
    %v950 = vsel %vm301, %v949, %v948
    %v952 = vsel %vm173, %v950, -inf
    %953 = vmax.xlane.f32.xlu0 %v952
    %v954 = vpop.xlane.xlu0 %953
    %v956 = vrot.slane %v954, 1
    %v957 = vrot.slane %v954, 2
    %v958 = vrot.slane %v954, 3
    %v959 = vrot.slane %v954, 4
    %v960 = vrot.slane %v954, 5
    %v961 = vrot.slane %v954, 6
    %v962 = vrot.slane %v954, 7
    %v971 = vsub.f32 %v921, %v954
    %v972 = vsub.f32 %v922, %v956
    %v973 = vsub.f32 %v923, %v957
    %v974 = vsub.f32 %v924, %v958
    %v975 = vsub.f32 %v925, %v959
    %v976 = vsub.f32 %v926, %v960
    %v977 = vsub.f32 %v927, %v961
    %v978 = vsub.f32 %v928, %v962
    %v979 = vmul.f32 %v971, 1.442695
    %v980 = vpow.pop %v979
    %v981 = vmul.f32 %v972, 1.442695
    %v982 = vpow.pop %v981
    %v983 = vmul.f32 %v973, 1.442695
    %v984 = vpow.pop %v983
    %v985 = vmul.f32 %v974, 1.442695
    %v986 = vpow.pop %v985
    %v987 = vmul.f32 %v975, 1.442695
    %v988 = vpow.pop %v987
    %v989 = vmul.f32 %v976, 1.442695
    %v990 = vpow.pop %v989
    %v991 = vmul.f32 %v977, 1.442695
    %v992 = vpow.pop %v991
    %v993 = vmul.f32 %v978, 1.442695
    %v994 = vpow.pop %v993
    %v1003 = vrot.slane %v982, 7
    %v1004 = vsel %vm283, %v1003, %v980
    %v1005 = vrot.slane %v984, 6
    %v1006 = vsel %vm286, %v1005, %v1004
    %v1007 = vrot.slane %v986, 5
    %v1008 = vsel %vm289, %v1007, %v1006
    %v1009 = vrot.slane %v988, 4
    %v1010 = vsel %vm292, %v1009, %v1008
    %v1011 = vrot.slane %v990, 3
    %v1012 = vsel %vm295, %v1011, %v1010
    %v1013 = vrot.slane %v992, 2
    %v1014 = vsel %vm298, %v1013, %v1012
    %v1015 = vrot.slane %v994, 1
    %v1016 = vsel %vm301, %v1015, %v1014
    %v1018 = vsel %vm173, %v1016, 0.0
    %1019 = vadd.xlane.f32.xlu0 %v1018
    %v1020 = vpop.xlane.xlu0 %1019
    %v1021 = vrcp.pop %v1020
    %v1023 = vrot.slane %v1021, 1
    %v1024 = vrot.slane %v1021, 2
    %v1025 = vrot.slane %v1021, 3
    %v1026 = vrot.slane %v1021, 4
    %v1027 = vrot.slane %v1021, 5
    %v1028 = vrot.slane %v1021, 6
    %v1029 = vrot.slane %v1021, 7
    %v1038 = vmul.f32 %v980, %v1021
    %v1039 = vmul.f32 %v982, %v1023
    %v1040 = vmul.f32 %v984, %v1024
    %v1041 = vmul.f32 %v986, %v1025
    %v1042 = vmul.f32 %v988, %v1026
    %v1043 = vmul.f32 %v990, %v1027
    %v1044 = vmul.f32 %v992, %v1028
    %v1045 = vmul.f32 %v994, %v1029
    %v1046 = vsel %vm249, %v1038, 0.0
    %v1047 = vsel %vm249, %v1039, 0.0
    %v1048 = vsel %vm249, %v1040, 0.0
    %v1049 = vsel %vm249, %v1041, 0.0
    %v1050 = vsel %vm249, %v1042, 0.0
    %v1051 = vsel %vm249, %v1043, 0.0
    %v1052 = vsel %vm249, %v1044, 0.0
    %v1053 = vsel %vm249, %v1045, 0.0
    %v1062 = vrot.slane %v1047, 7
    %v1063 = vsel %vm283, %v1062, %v1046
    %v1064 = vrot.slane %v1048, 6
    %v1065 = vsel %vm286, %v1064, %v1063
    %v1066 = vrot.slane %v1049, 5
    %v1067 = vsel %vm289, %v1066, %v1065
    %v1068 = vrot.slane %v1050, 4
    %v1069 = vsel %vm292, %v1068, %v1067
    %v1070 = vrot.slane %v1051, 3
    %v1071 = vsel %vm295, %v1070, %v1069
    %v1072 = vrot.slane %v1052, 2
    %v1073 = vsel %vm298, %v1072, %v1071
    %v1074 = vrot.slane %v1053, 1
    %v1075 = vsel %vm301, %v1074, %v1073
    %1076 = vrot.lane.b32.xlu0 %v162, 48
    %v1077 = vpop.permute.xlu0 %1076
    %v1079 = vsel %vm173, %v1075, 0
    %1081 = vmatprep.subr.mxu0 0.0
    %1082 = vmatpush1.msra.mxu0 0.0
    %1083 = vmatprep.subr.mxu0 0.0
    %1084 = vmatpush1.msra.mxu0 0.0
    %1085 = vmatprep.subr.mxu0 0.0
    %1086 = vmatpush1.msra.mxu0 0.0
    %1087 = vmatprep.subr.mxu0 0.0
    %1088 = vmatpush1.msra.mxu0 0.0
    %1089 = vmatprep.subr.mxu0 0.0
    %1090 = vmatpush1.msra.mxu0 0.0
    %1091 = vmatprep.subr.mxu0 0.0
    %1092 = vmatpush1.msra.mxu0 0.0
    %1093 = vmatprep.subr.mxu0 0.0
    %1094 = vmatpush1.msra.mxu0 0.0
    %1095 = vmatprep.subr.mxu0 0.0
    %1096 = vmatpush1.msra.mxu0 0.0
    %1097 = vmatprep.subr.mxu0 0.0
    %1098 = vmatpush1.msra.mxu0 0.0
    %1099 = vmatprep.subr.mxu0 0.0
    %1100 = vmatpush1.msra.mxu0 0.0
    %1101 = vmatprep.subr.mxu0 0.0
    %1102 = vmatpush1.msra.mxu0 0.0
    %1103 = vmatprep.subr.mxu0 0.0
    %1104 = vmatpush1.msra.mxu0 0.0
    %1105 = vmatprep.subr.mxu0 0.0
    %1106 = vmatpush1.msra.mxu0 0.0
    %1107 = vmatprep.subr.mxu0 0.0
    %1108 = vmatpush1.msra.mxu0 0.0
    %1109 = vmatprep.subr.mxu0 0.0
    %1110 = vmatpush1.msra.mxu0 0.0
    %1111 = vmatprep.subr.mxu0 0.0
    %1112 = vmatpush1.msra.mxu0 %v1077
    %1113 = vmatprep.subr.mxu0 0.0
    %1114 = vmatpush2.msra.mxu0 0.0
    %1115 = vmatprep.subr.mxu0 0.0
    %1116 = vmatpush2.msra.mxu0 0.0
    %1117 = vmatprep.subr.mxu0 0.0
    %1118 = vmatpush2.msra.mxu0 0.0
    %1119 = vmatprep.subr.mxu0 0.0
    %1120 = vmatpush2.msra.mxu0 0.0
    %1121 = vmatprep.subr.mxu0 0.0
    %1122 = vmatpush2.msra.mxu0 0.0
    %1123 = vmatprep.subr.mxu0 0.0
    %1124 = vmatpush2.msra.mxu0 0.0
    %1125 = vmatprep.subr.mxu0 0.0
    %1126 = vmatpush2.msra.mxu0 0.0
    %1127 = vmatprep.subr.mxu0 0.0
    %1128 = vmatpush2.msra.mxu0 0.0
    %1129 = vmatprep.subr.mxu0 0.0
    %1130 = vmatpush2.msra.mxu0 0.0
    %1131 = vmatprep.subr.mxu0 0.0
    %1132 = vmatpush2.msra.mxu0 0.0
    %1133 = vmatprep.subr.mxu0 0.0
    %1134 = vmatpush2.msra.mxu0 0.0
    %1135 = vmatprep.subr.mxu0 0.0
    %1136 = vmatpush2.msra.mxu0 0.0
    %1137 = vmatprep.subr.mxu0 0.0
    %1138 = vmatpush2.msra.mxu0 0.0
    %1139 = vmatprep.subr.mxu0 0.0
    %1140 = vmatpush2.msra.mxu0 0.0
    %1141 = vmatprep.subr.mxu0 0.0
    %1142 = vmatpush2.msra.mxu0 0.0
    %1143 = vmatprep.subr.mxu0 0.0
    %1144 = vmatpush2.msra.mxu0 0.0
    %1145 = vmatprep.mubr.f32.mxu0 0.0
    %1146 = vmatmul.mubr.f32.gmra.mxu0 %v1079
    %v1147 = vpop.f32.mrf.mxu0
    %v1148 = vadd.f32 0.0, %v1147
    %v1149 = vpop.f32.mrf.mxu0
    %1150 = vdwg.mxu0
    %1151 = vrot.lane.b32.xlu0 %v162, 104
    %v1152 = vpop.permute.xlu0 %1151
    %1153 = vrot.lane.b32.xlu0 %v162, 72
    %v1154 = vpop.permute.xlu0 %1153
    %v1155 = vsel %vm173, %v1152, 0
    %v1157 = vsel %vm173, %v1154, 0
    %1159 = vmatprep.subr.mxu0 0.0
    %1160 = vmatpush1.xpose.msra.mxu0 0.0
    %1161 = vmatprep.subr.mxu0 0.0
    %1162 = vmatpush1.xpose.msra.mxu0 0.0
    %1163 = vmatprep.subr.mxu0 0.0
    %1164 = vmatpush1.xpose.msra.mxu0 0.0
    %1165 = vmatprep.subr.mxu0 0.0
    %1166 = vmatpush1.xpose.msra.mxu0 0.0
    %1167 = vmatprep.subr.mxu0 0.0
    %1168 = vmatpush1.xpose.msra.mxu0 0.0
    %1169 = vmatprep.subr.mxu0 0.0
    %1170 = vmatpush1.xpose.msra.mxu0 0.0
    %1171 = vmatprep.subr.mxu0 0.0
    %1172 = vmatpush1.xpose.msra.mxu0 0.0
    %1173 = vmatprep.subr.mxu0 0.0
    %1174 = vmatpush1.xpose.msra.mxu0 0.0
    %1175 = vmatprep.subr.mxu0 0.0
    %1176 = vmatpush1.xpose.msra.mxu0 0.0
    %1177 = vmatprep.subr.mxu0 0.0
    %1178 = vmatpush1.xpose.msra.mxu0 0.0
    %1179 = vmatprep.subr.mxu0 0.0
    %1180 = vmatpush1.xpose.msra.mxu0 0.0
    %1181 = vmatprep.subr.mxu0 0.0
    %1182 = vmatpush1.xpose.msra.mxu0 0.0
    %1183 = vmatprep.subr.mxu0 0.0
    %1184 = vmatpush1.xpose.msra.mxu0 0.0
    %1185 = vmatprep.subr.mxu0 0.0
    %1186 = vmatpush1.xpose.msra.mxu0 0.0
    %1187 = vmatprep.subr.mxu0 0.0
    %1188 = vmatpush1.xpose.msra.mxu0 0.0
    %1189 = vmatprep.subr.mxu0 0.0
    %1190 = vmatpush1.xpose.msra.mxu0 %v1157
    %1191 = vmatprep.subr.mxu0 0.0
    %1192 = vmatpush2.xpose.msra.mxu0 0.0
    %1193 = vmatprep.subr.mxu0 0.0
    %1194 = vmatpush2.xpose.msra.mxu0 0.0
    %1195 = vmatprep.subr.mxu0 0.0
    %1196 = vmatpush2.xpose.msra.mxu0 0.0
    %1197 = vmatprep.subr.mxu0 0.0
    %1198 = vmatpush2.xpose.msra.mxu0 0.0
    %1199 = vmatprep.subr.mxu0 0.0
    %1200 = vmatpush2.xpose.msra.mxu0 0.0
    %1201 = vmatprep.subr.mxu0 0.0
    %1202 = vmatpush2.xpose.msra.mxu0 0.0
    %1203 = vmatprep.subr.mxu0 0.0
    %1204 = vmatpush2.xpose.msra.mxu0 0.0
    %1205 = vmatprep.subr.mxu0 0.0
    %1206 = vmatpush2.xpose.msra.mxu0 0.0
    %1207 = vmatprep.subr.mxu0 0.0
    %1208 = vmatpush2.xpose.msra.mxu0 0.0
    %1209 = vmatprep.subr.mxu0 0.0
    %1210 = vmatpush2.xpose.msra.mxu0 0.0
    %1211 = vmatprep.subr.mxu0 0.0
    %1212 = vmatpush2.xpose.msra.mxu0 0.0
    %1213 = vmatprep.subr.mxu0 0.0
    %1214 = vmatpush2.xpose.msra.mxu0 0.0
    %1215 = vmatprep.subr.mxu0 0.0
    %1216 = vmatpush2.xpose.msra.mxu0 0.0
    %1217 = vmatprep.subr.mxu0 0.0
    %1218 = vmatpush2.xpose.msra.mxu0 0.0
    %1219 = vmatprep.subr.mxu0 0.0
    %1220 = vmatpush2.xpose.msra.mxu0 0.0
    %1221 = vmatprep.subr.mxu0 0.0
    %1222 = vmatpush2.xpose.msra.mxu0 0.0
    %1223 = vmatprep.mubr.f32.mxu0 0.0
    %1224 = vmatmul.mubr.f32.gmra.mxu0 %v1155
    %v1225 = vpop.f32.mrf.mxu0
    %v1226 = vadd.f32 0.0, %v1225
    %v1227 = vpop.f32.mrf.mxu0
    %1228 = vdwg.mxu0
    %v1230 = vrot.slane %v1226, 1
    %v1231 = vrot.slane %v1226, 2
    %v1232 = vrot.slane %v1226, 3
    %v1233 = vrot.slane %v1226, 4
    %v1234 = vrot.slane %v1226, 5
    %v1235 = vrot.slane %v1226, 6
    %v1236 = vrot.slane %v1226, 7
    %v1245 = vsel %vm249, %v1226, -1e+30
    %v1246 = vsel %vm249, %v1230, -1e+30
    %v1247 = vsel %vm249, %v1231, -1e+30
    %v1248 = vsel %vm249, %v1232, -1e+30
    %v1249 = vsel %vm249, %v1233, -1e+30
    %v1250 = vsel %vm249, %v1234, -1e+30
    %v1251 = vsel %vm249, %v1235, -1e+30
    %v1252 = vsel %vm249, %v1236, -1e+30
    %v1261 = vrot.slane %v1246, 7
    %v1262 = vsel %vm283, %v1261, %v1245
    %v1263 = vrot.slane %v1247, 6
    %v1264 = vsel %vm286, %v1263, %v1262
    %v1265 = vrot.slane %v1248, 5
    %v1266 = vsel %vm289, %v1265, %v1264
    %v1267 = vrot.slane %v1249, 4
    %v1268 = vsel %vm292, %v1267, %v1266
    %v1269 = vrot.slane %v1250, 3
    %v1270 = vsel %vm295, %v1269, %v1268
    %v1271 = vrot.slane %v1251, 2
    %v1272 = vsel %vm298, %v1271, %v1270
    %v1273 = vrot.slane %v1252, 1
    %v1274 = vsel %vm301, %v1273, %v1272
    %v1276 = vsel %vm173, %v1274, -inf
    %1277 = vmax.xlane.f32.xlu0 %v1276
    %v1278 = vpop.xlane.xlu0 %1277
    %v1280 = vrot.slane %v1278, 1
    %v1281 = vrot.slane %v1278, 2
    %v1282 = vrot.slane %v1278, 3
    %v1283 = vrot.slane %v1278, 4
    %v1284 = vrot.slane %v1278, 5
    %v1285 = vrot.slane %v1278, 6
    %v1286 = vrot.slane %v1278, 7
    %v1295 = vsub.f32 %v1245, %v1278
    %v1296 = vsub.f32 %v1246, %v1280
    %v1297 = vsub.f32 %v1247, %v1281
    %v1298 = vsub.f32 %v1248, %v1282
    %v1299 = vsub.f32 %v1249, %v1283
    %v1300 = vsub.f32 %v1250, %v1284
    %v1301 = vsub.f32 %v1251, %v1285
    %v1302 = vsub.f32 %v1252, %v1286
    %v1303 = vmul.f32 %v1295, 1.442695
    %v1304 = vpow.pop %v1303
    %v1305 = vmul.f32 %v1296, 1.442695
    %v1306 = vpow.pop %v1305
    %v1307 = vmul.f32 %v1297, 1.442695
    %v1308 = vpow.pop %v1307
    %v1309 = vmul.f32 %v1298, 1.442695
    %v1310 = vpow.pop %v1309
    %v1311 = vmul.f32 %v1299, 1.442695
    %v1312 = vpow.pop %v1311
    %v1313 = vmul.f32 %v1300, 1.442695
    %v1314 = vpow.pop %v1313
    %v1315 = vmul.f32 %v1301, 1.442695
    %v1316 = vpow.pop %v1315
    %v1317 = vmul.f32 %v1302, 1.442695
    %v1318 = vpow.pop %v1317
    %v1327 = vrot.slane %v1306, 7
    %v1328 = vsel %vm283, %v1327, %v1304
    %v1329 = vrot.slane %v1308, 6
    %v1330 = vsel %vm286, %v1329, %v1328
    %v1331 = vrot.slane %v1310, 5
    %v1332 = vsel %vm289, %v1331, %v1330
    %v1333 = vrot.slane %v1312, 4
    %v1334 = vsel %vm292, %v1333, %v1332
    %v1335 = vrot.slane %v1314, 3
    %v1336 = vsel %vm295, %v1335, %v1334
    %v1337 = vrot.slane %v1316, 2
    %v1338 = vsel %vm298, %v1337, %v1336
    %v1339 = vrot.slane %v1318, 1
    %v1340 = vsel %vm301, %v1339, %v1338
    %v1342 = vsel %vm173, %v1340, 0.0
    %1343 = vadd.xlane.f32.xlu0 %v1342
    %v1344 = vpop.xlane.xlu0 %1343
    %v1345 = vrcp.pop %v1344
    %v1347 = vrot.slane %v1345, 1
    %v1348 = vrot.slane %v1345, 2
    %v1349 = vrot.slane %v1345, 3
    %v1350 = vrot.slane %v1345, 4
    %v1351 = vrot.slane %v1345, 5
    %v1352 = vrot.slane %v1345, 6
    %v1353 = vrot.slane %v1345, 7
    %v1362 = vmul.f32 %v1304, %v1345
    %v1363 = vmul.f32 %v1306, %v1347
    %v1364 = vmul.f32 %v1308, %v1348
    %v1365 = vmul.f32 %v1310, %v1349
    %v1366 = vmul.f32 %v1312, %v1350
    %v1367 = vmul.f32 %v1314, %v1351
    %v1368 = vmul.f32 %v1316, %v1352
    %v1369 = vmul.f32 %v1318, %v1353
    %v1370 = vsel %vm249, %v1362, 0.0
    %v1371 = vsel %vm249, %v1363, 0.0
    %v1372 = vsel %vm249, %v1364, 0.0
    %v1373 = vsel %vm249, %v1365, 0.0
    %v1374 = vsel %vm249, %v1366, 0.0
    %v1375 = vsel %vm249, %v1367, 0.0
    %v1376 = vsel %vm249, %v1368, 0.0
    %v1377 = vsel %vm249, %v1369, 0.0
    %v1386 = vrot.slane %v1371, 7
    %v1387 = vsel %vm283, %v1386, %v1370
    %v1388 = vrot.slane %v1372, 6
    %v1389 = vsel %vm286, %v1388, %v1387
    %v1390 = vrot.slane %v1373, 5
    %v1391 = vsel %vm289, %v1390, %v1389
    %v1392 = vrot.slane %v1374, 4
    %v1393 = vsel %vm292, %v1392, %v1391
    %v1394 = vrot.slane %v1375, 3
    %v1395 = vsel %vm295, %v1394, %v1393
    %v1396 = vrot.slane %v1376, 2
    %v1397 = vsel %vm298, %v1396, %v1395
    %v1398 = vrot.slane %v1377, 1
    %v1399 = vsel %vm301, %v1398, %v1397
    %1400 = vrot.lane.b32.xlu0 %v162, 40
    %v1401 = vpop.permute.xlu0 %1400
    %v1403 = vsel %vm173, %v1399, 0
    %1405 = vmatprep.subr.mxu0 0.0
    %1406 = vmatpush1.msra.mxu0 0.0
    %1407 = vmatprep.subr.mxu0 0.0
    %1408 = vmatpush1.msra.mxu0 0.0
    %1409 = vmatprep.subr.mxu0 0.0
    %1410 = vmatpush1.msra.mxu0 0.0
    %1411 = vmatprep.subr.mxu0 0.0
    %1412 = vmatpush1.msra.mxu0 0.0
    %1413 = vmatprep.subr.mxu0 0.0
    %1414 = vmatpush1.msra.mxu0 0.0
    %1415 = vmatprep.subr.mxu0 0.0
    %1416 = vmatpush1.msra.mxu0 0.0
    %1417 = vmatprep.subr.mxu0 0.0
    %1418 = vmatpush1.msra.mxu0 0.0
    %1419 = vmatprep.subr.mxu0 0.0
    %1420 = vmatpush1.msra.mxu0 0.0
    %1421 = vmatprep.subr.mxu0 0.0
    %1422 = vmatpush1.msra.mxu0 0.0
    %1423 = vmatprep.subr.mxu0 0.0
    %1424 = vmatpush1.msra.mxu0 0.0
    %1425 = vmatprep.subr.mxu0 0.0
    %1426 = vmatpush1.msra.mxu0 0.0
    %1427 = vmatprep.subr.mxu0 0.0
    %1428 = vmatpush1.msra.mxu0 0.0
    %1429 = vmatprep.subr.mxu0 0.0
    %1430 = vmatpush1.msra.mxu0 0.0
    %1431 = vmatprep.subr.mxu0 0.0
    %1432 = vmatpush1.msra.mxu0 0.0
    %1433 = vmatprep.subr.mxu0 0.0
    %1434 = vmatpush1.msra.mxu0 0.0
    %1435 = vmatprep.subr.mxu0 0.0
    %1436 = vmatpush1.msra.mxu0 %v1401
    %1437 = vmatprep.subr.mxu0 0.0
    %1438 = vmatpush2.msra.mxu0 0.0
    %1439 = vmatprep.subr.mxu0 0.0
    %1440 = vmatpush2.msra.mxu0 0.0
    %1441 = vmatprep.subr.mxu0 0.0
    %1442 = vmatpush2.msra.mxu0 0.0
    %1443 = vmatprep.subr.mxu0 0.0
    %1444 = vmatpush2.msra.mxu0 0.0
    %1445 = vmatprep.subr.mxu0 0.0
    %1446 = vmatpush2.msra.mxu0 0.0
    %1447 = vmatprep.subr.mxu0 0.0
    %1448 = vmatpush2.msra.mxu0 0.0
    %1449 = vmatprep.subr.mxu0 0.0
    %1450 = vmatpush2.msra.mxu0 0.0
    %1451 = vmatprep.subr.mxu0 0.0
    %1452 = vmatpush2.msra.mxu0 0.0
    %1453 = vmatprep.subr.mxu0 0.0
    %1454 = vmatpush2.msra.mxu0 0.0
    %1455 = vmatprep.subr.mxu0 0.0
    %1456 = vmatpush2.msra.mxu0 0.0
    %1457 = vmatprep.subr.mxu0 0.0
    %1458 = vmatpush2.msra.mxu0 0.0
    %1459 = vmatprep.subr.mxu0 0.0
    %1460 = vmatpush2.msra.mxu0 0.0
    %1461 = vmatprep.subr.mxu0 0.0
    %1462 = vmatpush2.msra.mxu0 0.0
    %1463 = vmatprep.subr.mxu0 0.0
    %1464 = vmatpush2.msra.mxu0 0.0
    %1465 = vmatprep.subr.mxu0 0.0
    %1466 = vmatpush2.msra.mxu0 0.0
    %1467 = vmatprep.subr.mxu0 0.0
    %1468 = vmatpush2.msra.mxu0 0.0
    %1469 = vmatprep.mubr.f32.mxu0 0.0
    %1470 = vmatmul.mubr.f32.gmra.mxu0 %v1403
    %v1471 = vpop.f32.mrf.mxu0
    %v1472 = vadd.f32 0.0, %v1471
    %v1473 = vpop.f32.mrf.mxu0
    %1474 = vdwg.mxu0
    %1476 = vrot.lane.b32.xlu0 %v824, 8
    %v1477 = vpop.permute.xlu0 %1476
    %1480 = vrot.lane.b32.xlu0 %v1148, 16
    %v1481 = vpop.permute.xlu0 %1480
    %1484 = vrot.lane.b32.xlu0 %v1472, 24
    %v1485 = vpop.permute.xlu0 %1484
    %v1487 = vsel %vm173, %v500, %v1477
    %vm1488 = vcmask 130048
    %v1489 = vsel %vm1488, %v1487, %v1481
    %vm1490 = vcmask 195584
    %v1491 = vsel %vm1490, %v1489, %v1485
    %1493 = vrot.lane.b32.xlu0 %v167, 96
    %v1494 = vpop.permute.xlu0 %1493
    %v1495 = vsel %vm173, %v167, 0
    %v1497 = vsel %vm173, %v1494, 0
    %1499 = vmatprep.subr.mxu0 0.0
    %1500 = vmatpush1.xpose.msra.mxu0 0.0
    %1501 = vmatprep.subr.mxu0 0.0
    %1502 = vmatpush1.xpose.msra.mxu0 0.0
    %1503 = vmatprep.subr.mxu0 0.0
    %1504 = vmatpush1.xpose.msra.mxu0 0.0
    %1505 = vmatprep.subr.mxu0 0.0
    %1506 = vmatpush1.xpose.msra.mxu0 0.0
    %1507 = vmatprep.subr.mxu0 0.0
    %1508 = vmatpush1.xpose.msra.mxu0 0.0
    %1509 = vmatprep.subr.mxu0 0.0
    %1510 = vmatpush1.xpose.msra.mxu0 0.0
    %1511 = vmatprep.subr.mxu0 0.0
    %1512 = vmatpush1.xpose.msra.mxu0 0.0
    %1513 = vmatprep.subr.mxu0 0.0
    %1514 = vmatpush1.xpose.msra.mxu0 0.0
    %1515 = vmatprep.subr.mxu0 0.0
    %1516 = vmatpush1.xpose.msra.mxu0 0.0
    %1517 = vmatprep.subr.mxu0 0.0
    %1518 = vmatpush1.xpose.msra.mxu0 0.0
    %1519 = vmatprep.subr.mxu0 0.0
    %1520 = vmatpush1.xpose.msra.mxu0 0.0
    %1521 = vmatprep.subr.mxu0 0.0
    %1522 = vmatpush1.xpose.msra.mxu0 0.0
    %1523 = vmatprep.subr.mxu0 0.0
    %1524 = vmatpush1.xpose.msra.mxu0 0.0
    %1525 = vmatprep.subr.mxu0 0.0
    %1526 = vmatpush1.xpose.msra.mxu0 0.0
    %1527 = vmatprep.subr.mxu0 0.0
    %1528 = vmatpush1.xpose.msra.mxu0 0.0
    %1529 = vmatprep.subr.mxu0 0.0
    %1530 = vmatpush1.xpose.msra.mxu0 %v1497
    %1531 = vmatprep.subr.mxu0 0.0
    %1532 = vmatpush2.xpose.msra.mxu0 0.0
    %1533 = vmatprep.subr.mxu0 0.0
    %1534 = vmatpush2.xpose.msra.mxu0 0.0
    %1535 = vmatprep.subr.mxu0 0.0
    %1536 = vmatpush2.xpose.msra.mxu0 0.0
    %1537 = vmatprep.subr.mxu0 0.0
    %1538 = vmatpush2.xpose.msra.mxu0 0.0
    %1539 = vmatprep.subr.mxu0 0.0
    %1540 = vmatpush2.xpose.msra.mxu0 0.0
    %1541 = vmatprep.subr.mxu0 0.0
    %1542 = vmatpush2.xpose.msra.mxu0 0.0
    %1543 = vmatprep.subr.mxu0 0.0
    %1544 = vmatpush2.xpose.msra.mxu0 0.0
    %1545 = vmatprep.subr.mxu0 0.0
    %1546 = vmatpush2.xpose.msra.mxu0 0.0
    %1547 = vmatprep.subr.mxu0 0.0
    %1548 = vmatpush2.xpose.msra.mxu0 0.0
    %1549 = vmatprep.subr.mxu0 0.0
    %1550 = vmatpush2.xpose.msra.mxu0 0.0
    %1551 = vmatprep.subr.mxu0 0.0
    %1552 = vmatpush2.xpose.msra.mxu0 0.0
    %1553 = vmatprep.subr.mxu0 0.0
    %1554 = vmatpush2.xpose.msra.mxu0 0.0
    %1555 = vmatprep.subr.mxu0 0.0
    %1556 = vmatpush2.xpose.msra.mxu0 0.0
    %1557 = vmatprep.subr.mxu0 0.0
    %1558 = vmatpush2.xpose.msra.mxu0 0.0
    %1559 = vmatprep.subr.mxu0 0.0
    %1560 = vmatpush2.xpose.msra.mxu0 0.0
    %1561 = vmatprep.subr.mxu0 0.0
    %1562 = vmatpush2.xpose.msra.mxu0 0.0
    %1563 = vmatprep.mubr.f32.mxu0 0.0
    %1564 = vmatmul.mubr.f32.gmra.mxu0 %v1495
    %v1565 = vpop.f32.mrf.mxu0
    %v1566 = vadd.f32 0.0, %v1565
    %v1567 = vpop.f32.mrf.mxu0
    %1568 = vdwg.mxu0
    %v1570 = vrot.slane %v1566, 7
    %v1571 = vrot.slane %v1566, 1
    %v1572 = vrot.slane %v1566, 2
    %v1573 = vrot.slane %v1566, 3
    %v1574 = vrot.slane %v1566, 4
    %v1575 = vrot.slane %v1566, 5
    %v1576 = vrot.slane %v1566, 6
    %v1585 = vsel %vm249, %v1570, -1e+30
    %v1586 = vsel %vm249, %v1566, -1e+30
    %v1587 = vsel %vm249, %v1571, -1e+30
    %v1588 = vsel %vm249, %v1572, -1e+30
    %v1589 = vsel %vm249, %v1573, -1e+30
    %v1590 = vsel %vm249, %v1574, -1e+30
    %v1591 = vsel %vm249, %v1575, -1e+30
    %v1592 = vsel %vm249, %v1576, -1e+30
    %v1601 = vrot.slane %v1586, 7
    %v1602 = vsel %vm286, %v1601, %v1585
    %v1603 = vrot.slane %v1587, 6
    %v1604 = vsel %vm289, %v1603, %v1602
    %v1605 = vrot.slane %v1588, 5
    %v1606 = vsel %vm292, %v1605, %v1604
    %v1607 = vrot.slane %v1589, 4
    %v1608 = vsel %vm295, %v1607, %v1606
    %v1609 = vrot.slane %v1590, 3
    %v1610 = vsel %vm298, %v1609, %v1608
    %v1611 = vrot.slane %v1591, 2
    %v1612 = vsel %vm301, %v1611, %v1610
    %v1613 = vrot.slane %v1592, 1
    %vm1616 = vcmask 64513
    %v1617 = vsel %vm1616, %v1612, -inf
    %1618 = vmax.xlane.f32.xlu0 %v1617
    %v1619 = vpop.xlane.xlu0 %1618
    %vm1620 = vcmask 57344
    %v1621 = vsel %vm1620, %v1613, -inf
    %1622 = vmax.xlane.f32.xlu0 %v1621
    %v1623 = vpop.xlane.xlu0 %1622
    %v1626 = vrot.slane %v1619, 1
    %v1627 = vrot.slane %v1619, 2
    %v1628 = vrot.slane %v1619, 3
    %v1629 = vrot.slane %v1619, 4
    %v1630 = vrot.slane %v1619, 5
    %v1631 = vrot.slane %v1619, 6
    %v1632 = vrot.slane %v1623, 7
    %v1641 = vsub.f32 %v1585, %v1619
    %v1642 = vsub.f32 %v1586, %v1626
    %v1643 = vsub.f32 %v1587, %v1627
    %v1644 = vsub.f32 %v1588, %v1628
    %v1645 = vsub.f32 %v1589, %v1629
    %v1646 = vsub.f32 %v1590, %v1630
    %v1647 = vsub.f32 %v1591, %v1631
    %v1648 = vsub.f32 %v1592, %v1632
    %v1649 = vmul.f32 %v1641, 1.442695
    %v1650 = vpow.pop %v1649
    %v1651 = vmul.f32 %v1642, 1.442695
    %v1652 = vpow.pop %v1651
    %v1653 = vmul.f32 %v1643, 1.442695
    %v1654 = vpow.pop %v1653
    %v1655 = vmul.f32 %v1644, 1.442695
    %v1656 = vpow.pop %v1655
    %v1657 = vmul.f32 %v1645, 1.442695
    %v1658 = vpow.pop %v1657
    %v1659 = vmul.f32 %v1646, 1.442695
    %v1660 = vpow.pop %v1659
    %v1661 = vmul.f32 %v1647, 1.442695
    %v1662 = vpow.pop %v1661
    %v1663 = vmul.f32 %v1648, 1.442695
    %v1664 = vpow.pop %v1663
    %v1673 = vrot.slane %v1652, 7
    %v1674 = vsel %vm286, %v1673, %v1650
    %v1675 = vrot.slane %v1654, 6
    %v1676 = vsel %vm289, %v1675, %v1674
    %v1677 = vrot.slane %v1656, 5
    %v1678 = vsel %vm292, %v1677, %v1676
    %v1679 = vrot.slane %v1658, 4
    %v1680 = vsel %vm295, %v1679, %v1678
    %v1681 = vrot.slane %v1660, 3
    %v1682 = vsel %vm298, %v1681, %v1680
    %v1683 = vrot.slane %v1662, 2
    %v1684 = vsel %vm301, %v1683, %v1682
    %v1685 = vrot.slane %v1664, 1
    %v1688 = vsel %vm1616, %v1684, 0.0
    %1689 = vadd.xlane.f32.xlu0 %v1688
    %v1690 = vpop.xlane.xlu0 %1689
    %v1691 = vsel %vm1620, %v1685, 0.0
    %1692 = vadd.xlane.f32.xlu0 %v1691
    %v1693 = vpop.xlane.xlu0 %1692
    %v1694 = vrcp.pop %v1690
    %v1695 = vrcp.pop %v1693
    %v1698 = vrot.slane %v1694, 1
    %v1699 = vrot.slane %v1694, 2
    %v1700 = vrot.slane %v1694, 3
    %v1701 = vrot.slane %v1694, 4
    %v1702 = vrot.slane %v1694, 5
    %v1703 = vrot.slane %v1694, 6
    %v1704 = vrot.slane %v1695, 7
    %v1713 = vmul.f32 %v1650, %v1694
    %v1714 = vmul.f32 %v1652, %v1698
    %v1715 = vmul.f32 %v1654, %v1699
    %v1716 = vmul.f32 %v1656, %v1700
    %v1717 = vmul.f32 %v1658, %v1701
    %v1718 = vmul.f32 %v1660, %v1702
    %v1719 = vmul.f32 %v1662, %v1703
    %v1720 = vmul.f32 %v1664, %v1704
    %v1721 = vsel %vm249, %v1713, 0.0
    %v1722 = vsel %vm249, %v1714, 0.0
    %v1723 = vsel %vm249, %v1715, 0.0
    %v1724 = vsel %vm249, %v1716, 0.0
    %v1725 = vsel %vm249, %v1717, 0.0
    %v1726 = vsel %vm249, %v1718, 0.0
    %v1727 = vsel %vm249, %v1719, 0.0
    %v1728 = vsel %vm249, %v1720, 0.0
    %v1737 = vrot.slane %v1721, 1
    %v1738 = vsel %vm283, %v1722, %v1737
    %v1739 = vrot.slane %v1723, 7
    %v1740 = vsel %vm286, %v1739, %v1738
    %v1741 = vrot.slane %v1724, 6
    %v1742 = vsel %vm289, %v1741, %v1740
    %v1743 = vrot.slane %v1725, 5
    %v1744 = vsel %vm292, %v1743, %v1742
    %v1745 = vrot.slane %v1726, 4
    %v1746 = vsel %vm295, %v1745, %v1744
    %v1747 = vrot.slane %v1727, 3
    %v1748 = vsel %vm298, %v1747, %v1746
    %v1749 = vrot.slane %v1728, 2
    %v1750 = vsel %vm301, %v1749, %v1748
    %1751 = vrot.lane.b32.xlu0 %v167, 64
    %v1752 = vpop.permute.xlu0 %1751
    %v1754 = vsel %vm173, %v1750, 0
    %1756 = vmatprep.subr.mxu0 0.0
    %1757 = vmatpush1.msra.mxu0 0.0
    %1758 = vmatprep.subr.mxu0 0.0
    %1759 = vmatpush1.msra.mxu0 0.0
    %1760 = vmatprep.subr.mxu0 0.0
    %1761 = vmatpush1.msra.mxu0 0.0
    %1762 = vmatprep.subr.mxu0 0.0
    %1763 = vmatpush1.msra.mxu0 0.0
    %1764 = vmatprep.subr.mxu0 0.0
    %1765 = vmatpush1.msra.mxu0 0.0
    %1766 = vmatprep.subr.mxu0 0.0
    %1767 = vmatpush1.msra.mxu0 0.0
    %1768 = vmatprep.subr.mxu0 0.0
    %1769 = vmatpush1.msra.mxu0 0.0
    %1770 = vmatprep.subr.mxu0 0.0
    %1771 = vmatpush1.msra.mxu0 0.0
    %1772 = vmatprep.subr.mxu0 0.0
    %1773 = vmatpush1.msra.mxu0 0.0
    %1774 = vmatprep.subr.mxu0 0.0
    %1775 = vmatpush1.msra.mxu0 0.0
    %1776 = vmatprep.subr.mxu0 0.0
    %1777 = vmatpush1.msra.mxu0 0.0
    %1778 = vmatprep.subr.mxu0 0.0
    %1779 = vmatpush1.msra.mxu0 0.0
    %1780 = vmatprep.subr.mxu0 0.0
    %1781 = vmatpush1.msra.mxu0 0.0
    %1782 = vmatprep.subr.mxu0 0.0
    %1783 = vmatpush1.msra.mxu0 0.0
    %1784 = vmatprep.subr.mxu0 0.0
    %1785 = vmatpush1.msra.mxu0 0.0
    %1786 = vmatprep.subr.mxu0 0.0
    %1787 = vmatpush1.msra.mxu0 %v1752
    %1788 = vmatprep.subr.mxu0 0.0
    %1789 = vmatpush2.msra.mxu0 0.0
    %1790 = vmatprep.subr.mxu0 0.0
    %1791 = vmatpush2.msra.mxu0 0.0
    %1792 = vmatprep.subr.mxu0 0.0
    %1793 = vmatpush2.msra.mxu0 0.0
    %1794 = vmatprep.subr.mxu0 0.0
    %1795 = vmatpush2.msra.mxu0 0.0
    %1796 = vmatprep.subr.mxu0 0.0
    %1797 = vmatpush2.msra.mxu0 0.0
    %1798 = vmatprep.subr.mxu0 0.0
    %1799 = vmatpush2.msra.mxu0 0.0
    %1800 = vmatprep.subr.mxu0 0.0
    %1801 = vmatpush2.msra.mxu0 0.0
    %1802 = vmatprep.subr.mxu0 0.0
    %1803 = vmatpush2.msra.mxu0 0.0
    %1804 = vmatprep.subr.mxu0 0.0
    %1805 = vmatpush2.msra.mxu0 0.0
    %1806 = vmatprep.subr.mxu0 0.0
    %1807 = vmatpush2.msra.mxu0 0.0
    %1808 = vmatprep.subr.mxu0 0.0
    %1809 = vmatpush2.msra.mxu0 0.0
    %1810 = vmatprep.subr.mxu0 0.0
    %1811 = vmatpush2.msra.mxu0 0.0
    %1812 = vmatprep.subr.mxu0 0.0
    %1813 = vmatpush2.msra.mxu0 0.0
    %1814 = vmatprep.subr.mxu0 0.0
    %1815 = vmatpush2.msra.mxu0 0.0
    %1816 = vmatprep.subr.mxu0 0.0
    %1817 = vmatpush2.msra.mxu0 0.0
    %1818 = vmatprep.subr.mxu0 0.0
    %1819 = vmatpush2.msra.mxu0 0.0
    %1820 = vmatprep.mubr.f32.mxu0 0.0
    %1821 = vmatmul.mubr.f32.gmra.mxu0 %v1754
    %v1822 = vpop.f32.mrf.mxu0
    %v1823 = vadd.f32 0.0, %v1822
    %v1824 = vpop.f32.mrf.mxu0
    %1825 = vdwg.mxu0
    %1826 = vrot.lane.b32.xlu0 %v167, 120
    %v1827 = vpop.permute.xlu0 %1826
    %1828 = vrot.lane.b32.xlu0 %v167, 88
    %v1829 = vpop.permute.xlu0 %1828
    %v1830 = vsel %vm173, %v1827, 0
    %v1832 = vsel %vm173, %v1829, 0
    %1834 = vmatprep.subr.mxu0 0.0
    %1835 = vmatpush1.xpose.msra.mxu0 0.0
    %1836 = vmatprep.subr.mxu0 0.0
    %1837 = vmatpush1.xpose.msra.mxu0 0.0
    %1838 = vmatprep.subr.mxu0 0.0
    %1839 = vmatpush1.xpose.msra.mxu0 0.0
    %1840 = vmatprep.subr.mxu0 0.0
    %1841 = vmatpush1.xpose.msra.mxu0 0.0
    %1842 = vmatprep.subr.mxu0 0.0
    %1843 = vmatpush1.xpose.msra.mxu0 0.0
    %1844 = vmatprep.subr.mxu0 0.0
    %1845 = vmatpush1.xpose.msra.mxu0 0.0
    %1846 = vmatprep.subr.mxu0 0.0
    %1847 = vmatpush1.xpose.msra.mxu0 0.0
    %1848 = vmatprep.subr.mxu0 0.0
    %1849 = vmatpush1.xpose.msra.mxu0 0.0
    %1850 = vmatprep.subr.mxu0 0.0
    %1851 = vmatpush1.xpose.msra.mxu0 0.0
    %1852 = vmatprep.subr.mxu0 0.0
    %1853 = vmatpush1.xpose.msra.mxu0 0.0
    %1854 = vmatprep.subr.mxu0 0.0
    %1855 = vmatpush1.xpose.msra.mxu0 0.0
    %1856 = vmatprep.subr.mxu0 0.0
    %1857 = vmatpush1.xpose.msra.mxu0 0.0
    %1858 = vmatprep.subr.mxu0 0.0
    %1859 = vmatpush1.xpose.msra.mxu0 0.0
    %1860 = vmatprep.subr.mxu0 0.0
    %1861 = vmatpush1.xpose.msra.mxu0 0.0
    %1862 = vmatprep.subr.mxu0 0.0
    %1863 = vmatpush1.xpose.msra.mxu0 0.0
    %1864 = vmatprep.subr.mxu0 0.0
    %1865 = vmatpush1.xpose.msra.mxu0 %v1832
    %1866 = vmatprep.subr.mxu0 0.0
    %1867 = vmatpush2.xpose.msra.mxu0 0.0
    %1868 = vmatprep.subr.mxu0 0.0
    %1869 = vmatpush2.xpose.msra.mxu0 0.0
    %1870 = vmatprep.subr.mxu0 0.0
    %1871 = vmatpush2.xpose.msra.mxu0 0.0
    %1872 = vmatprep.subr.mxu0 0.0
    %1873 = vmatpush2.xpose.msra.mxu0 0.0
    %1874 = vmatprep.subr.mxu0 0.0
    %1875 = vmatpush2.xpose.msra.mxu0 0.0
    %1876 = vmatprep.subr.mxu0 0.0
    %1877 = vmatpush2.xpose.msra.mxu0 0.0
    %1878 = vmatprep.subr.mxu0 0.0
    %1879 = vmatpush2.xpose.msra.mxu0 0.0
    %1880 = vmatprep.subr.mxu0 0.0
    %1881 = vmatpush2.xpose.msra.mxu0 0.0
    %1882 = vmatprep.subr.mxu0 0.0
    %1883 = vmatpush2.xpose.msra.mxu0 0.0
    %1884 = vmatprep.subr.mxu0 0.0
    %1885 = vmatpush2.xpose.msra.mxu0 0.0
    %1886 = vmatprep.subr.mxu0 0.0
    %1887 = vmatpush2.xpose.msra.mxu0 0.0
    %1888 = vmatprep.subr.mxu0 0.0
    %1889 = vmatpush2.xpose.msra.mxu0 0.0
    %1890 = vmatprep.subr.mxu0 0.0
    %1891 = vmatpush2.xpose.msra.mxu0 0.0
    %1892 = vmatprep.subr.mxu0 0.0
    %1893 = vmatpush2.xpose.msra.mxu0 0.0
    %1894 = vmatprep.subr.mxu0 0.0
    %1895 = vmatpush2.xpose.msra.mxu0 0.0
    %1896 = vmatprep.subr.mxu0 0.0
    %1897 = vmatpush2.xpose.msra.mxu0 0.0
    %1898 = vmatprep.mubr.f32.mxu0 0.0
    %1899 = vmatmul.mubr.f32.gmra.mxu0 %v1830
    %v1900 = vpop.f32.mrf.mxu0
    %v1901 = vadd.f32 0.0, %v1900
    %v1902 = vpop.f32.mrf.mxu0
    %1903 = vdwg.mxu0
    %v1905 = vrot.slane %v1901, 7
    %v1906 = vrot.slane %v1901, 1
    %v1907 = vrot.slane %v1901, 2
    %v1908 = vrot.slane %v1901, 3
    %v1909 = vrot.slane %v1901, 4
    %v1910 = vrot.slane %v1901, 5
    %v1911 = vrot.slane %v1901, 6
    %v1920 = vsel %vm249, %v1905, -1e+30
    %v1921 = vsel %vm249, %v1901, -1e+30
    %v1922 = vsel %vm249, %v1906, -1e+30
    %v1923 = vsel %vm249, %v1907, -1e+30
    %v1924 = vsel %vm249, %v1908, -1e+30
    %v1925 = vsel %vm249, %v1909, -1e+30
    %v1926 = vsel %vm249, %v1910, -1e+30
    %v1927 = vsel %vm249, %v1911, -1e+30
    %v1936 = vrot.slane %v1921, 7
    %v1937 = vsel %vm286, %v1936, %v1920
    %v1938 = vrot.slane %v1922, 6
    %v1939 = vsel %vm289, %v1938, %v1937
    %v1940 = vrot.slane %v1923, 5
    %v1941 = vsel %vm292, %v1940, %v1939
    %v1942 = vrot.slane %v1924, 4
    %v1943 = vsel %vm295, %v1942, %v1941
    %v1944 = vrot.slane %v1925, 3
    %v1945 = vsel %vm298, %v1944, %v1943
    %v1946 = vrot.slane %v1926, 2
    %v1947 = vsel %vm301, %v1946, %v1945
    %v1948 = vrot.slane %v1927, 1
    %v1951 = vsel %vm1616, %v1947, -inf
    %1952 = vmax.xlane.f32.xlu0 %v1951
    %v1953 = vpop.xlane.xlu0 %1952
    %v1954 = vsel %vm1620, %v1948, -inf
    %1955 = vmax.xlane.f32.xlu0 %v1954
    %v1956 = vpop.xlane.xlu0 %1955
    %v1959 = vrot.slane %v1953, 1
    %v1960 = vrot.slane %v1953, 2
    %v1961 = vrot.slane %v1953, 3
    %v1962 = vrot.slane %v1953, 4
    %v1963 = vrot.slane %v1953, 5
    %v1964 = vrot.slane %v1953, 6
    %v1965 = vrot.slane %v1956, 7
    %v1974 = vsub.f32 %v1920, %v1953
    %v1975 = vsub.f32 %v1921, %v1959
    %v1976 = vsub.f32 %v1922, %v1960
    %v1977 = vsub.f32 %v1923, %v1961
    %v1978 = vsub.f32 %v1924, %v1962
    %v1979 = vsub.f32 %v1925, %v1963
    %v1980 = vsub.f32 %v1926, %v1964
    %v1981 = vsub.f32 %v1927, %v1965
    %v1982 = vmul.f32 %v1974, 1.442695
    %v1983 = vpow.pop %v1982
    %v1984 = vmul.f32 %v1975, 1.442695
    %v1985 = vpow.pop %v1984
    %v1986 = vmul.f32 %v1976, 1.442695
    %v1987 = vpow.pop %v1986
    %v1988 = vmul.f32 %v1977, 1.442695
    %v1989 = vpow.pop %v1988
    %v1990 = vmul.f32 %v1978, 1.442695
    %v1991 = vpow.pop %v1990
    %v1992 = vmul.f32 %v1979, 1.442695
    %v1993 = vpow.pop %v1992
    %v1994 = vmul.f32 %v1980, 1.442695
    %v1995 = vpow.pop %v1994
    %v1996 = vmul.f32 %v1981, 1.442695
    %v1997 = vpow.pop %v1996
    %v2006 = vrot.slane %v1985, 7
    %v2007 = vsel %vm286, %v2006, %v1983
    %v2008 = vrot.slane %v1987, 6
    %v2009 = vsel %vm289, %v2008, %v2007
    %v2010 = vrot.slane %v1989, 5
    %v2011 = vsel %vm292, %v2010, %v2009
    %v2012 = vrot.slane %v1991, 4
    %v2013 = vsel %vm295, %v2012, %v2011
    %v2014 = vrot.slane %v1993, 3
    %v2015 = vsel %vm298, %v2014, %v2013
    %v2016 = vrot.slane %v1995, 2
    %v2017 = vsel %vm301, %v2016, %v2015
    %v2018 = vrot.slane %v1997, 1
    %v2021 = vsel %vm1616, %v2017, 0.0
    %2022 = vadd.xlane.f32.xlu0 %v2021
    %v2023 = vpop.xlane.xlu0 %2022
    %v2024 = vsel %vm1620, %v2018, 0.0
    %2025 = vadd.xlane.f32.xlu0 %v2024
    %v2026 = vpop.xlane.xlu0 %2025
    %v2027 = vrcp.pop %v2023
    %v2028 = vrcp.pop %v2026
    %v2031 = vrot.slane %v2027, 1
    %v2032 = vrot.slane %v2027, 2
    %v2033 = vrot.slane %v2027, 3
    %v2034 = vrot.slane %v2027, 4
    %v2035 = vrot.slane %v2027, 5
    %v2036 = vrot.slane %v2027, 6
    %v2037 = vrot.slane %v2028, 7
    %v2046 = vmul.f32 %v1983, %v2027
    %v2047 = vmul.f32 %v1985, %v2031
    %v2048 = vmul.f32 %v1987, %v2032
    %v2049 = vmul.f32 %v1989, %v2033
    %v2050 = vmul.f32 %v1991, %v2034
    %v2051 = vmul.f32 %v1993, %v2035
    %v2052 = vmul.f32 %v1995, %v2036
    %v2053 = vmul.f32 %v1997, %v2037
    %v2054 = vsel %vm249, %v2046, 0.0
    %v2055 = vsel %vm249, %v2047, 0.0
    %v2056 = vsel %vm249, %v2048, 0.0
    %v2057 = vsel %vm249, %v2049, 0.0
    %v2058 = vsel %vm249, %v2050, 0.0
    %v2059 = vsel %vm249, %v2051, 0.0
    %v2060 = vsel %vm249, %v2052, 0.0
    %v2061 = vsel %vm249, %v2053, 0.0
    %v2070 = vrot.slane %v2054, 1
    %v2071 = vsel %vm283, %v2055, %v2070
    %v2072 = vrot.slane %v2056, 7
    %v2073 = vsel %vm286, %v2072, %v2071
    %v2074 = vrot.slane %v2057, 6
    %v2075 = vsel %vm289, %v2074, %v2073
    %v2076 = vrot.slane %v2058, 5
    %v2077 = vsel %vm292, %v2076, %v2075
    %v2078 = vrot.slane %v2059, 4
    %v2079 = vsel %vm295, %v2078, %v2077
    %v2080 = vrot.slane %v2060, 3
    %v2081 = vsel %vm298, %v2080, %v2079
    %v2082 = vrot.slane %v2061, 2
    %v2083 = vsel %vm301, %v2082, %v2081
    %2084 = vrot.lane.b32.xlu0 %v167, 56
    %v2085 = vpop.permute.xlu0 %2084
    %v2087 = vsel %vm173, %v2083, 0
    %2089 = vmatprep.subr.mxu0 0.0
    %2090 = vmatpush1.msra.mxu0 0.0
    %2091 = vmatprep.subr.mxu0 0.0
    %2092 = vmatpush1.msra.mxu0 0.0
    %2093 = vmatprep.subr.mxu0 0.0
    %2094 = vmatpush1.msra.mxu0 0.0
    %2095 = vmatprep.subr.mxu0 0.0
    %2096 = vmatpush1.msra.mxu0 0.0
    %2097 = vmatprep.subr.mxu0 0.0
    %2098 = vmatpush1.msra.mxu0 0.0
    %2099 = vmatprep.subr.mxu0 0.0
    %2100 = vmatpush1.msra.mxu0 0.0
    %2101 = vmatprep.subr.mxu0 0.0
    %2102 = vmatpush1.msra.mxu0 0.0
    %2103 = vmatprep.subr.mxu0 0.0
    %2104 = vmatpush1.msra.mxu0 0.0
    %2105 = vmatprep.subr.mxu0 0.0
    %2106 = vmatpush1.msra.mxu0 0.0
    %2107 = vmatprep.subr.mxu0 0.0
    %2108 = vmatpush1.msra.mxu0 0.0
    %2109 = vmatprep.subr.mxu0 0.0
    %2110 = vmatpush1.msra.mxu0 0.0
    %2111 = vmatprep.subr.mxu0 0.0
    %2112 = vmatpush1.msra.mxu0 0.0
    %2113 = vmatprep.subr.mxu0 0.0
    %2114 = vmatpush1.msra.mxu0 0.0
    %2115 = vmatprep.subr.mxu0 0.0
    %2116 = vmatpush1.msra.mxu0 0.0
    %2117 = vmatprep.subr.mxu0 0.0
    %2118 = vmatpush1.msra.mxu0 0.0
    %2119 = vmatprep.subr.mxu0 0.0
    %2120 = vmatpush1.msra.mxu0 %v2085
    %2121 = vmatprep.subr.mxu0 0.0
    %2122 = vmatpush2.msra.mxu0 0.0
    %2123 = vmatprep.subr.mxu0 0.0
    %2124 = vmatpush2.msra.mxu0 0.0
    %2125 = vmatprep.subr.mxu0 0.0
    %2126 = vmatpush2.msra.mxu0 0.0
    %2127 = vmatprep.subr.mxu0 0.0
    %2128 = vmatpush2.msra.mxu0 0.0
    %2129 = vmatprep.subr.mxu0 0.0
    %2130 = vmatpush2.msra.mxu0 0.0
    %2131 = vmatprep.subr.mxu0 0.0
    %2132 = vmatpush2.msra.mxu0 0.0
    %2133 = vmatprep.subr.mxu0 0.0
    %2134 = vmatpush2.msra.mxu0 0.0
    %2135 = vmatprep.subr.mxu0 0.0
    %2136 = vmatpush2.msra.mxu0 0.0
    %2137 = vmatprep.subr.mxu0 0.0
    %2138 = vmatpush2.msra.mxu0 0.0
    %2139 = vmatprep.subr.mxu0 0.0
    %2140 = vmatpush2.msra.mxu0 0.0
    %2141 = vmatprep.subr.mxu0 0.0
    %2142 = vmatpush2.msra.mxu0 0.0
    %2143 = vmatprep.subr.mxu0 0.0
    %2144 = vmatpush2.msra.mxu0 0.0
    %2145 = vmatprep.subr.mxu0 0.0
    %2146 = vmatpush2.msra.mxu0 0.0
    %2147 = vmatprep.subr.mxu0 0.0
    %2148 = vmatpush2.msra.mxu0 0.0
    %2149 = vmatprep.subr.mxu0 0.0
    %2150 = vmatpush2.msra.mxu0 0.0
    %2151 = vmatprep.subr.mxu0 0.0
    %2152 = vmatpush2.msra.mxu0 0.0
    %2153 = vmatprep.mubr.f32.mxu0 0.0
    %2154 = vmatmul.mubr.f32.gmra.mxu0 %v2087
    %v2155 = vpop.f32.mrf.mxu0
    %v2156 = vadd.f32 0.0, %v2155
    %v2157 = vpop.f32.mrf.mxu0
    %2158 = vdwg.mxu0
    %2159 = vrot.lane.b32.xlu0 %v167, 112
    %v2160 = vpop.permute.xlu0 %2159
    %2161 = vrot.lane.b32.xlu0 %v167, 80
    %v2162 = vpop.permute.xlu0 %2161
    %v2163 = vsel %vm173, %v2160, 0
    %v2165 = vsel %vm173, %v2162, 0
    %2167 = vmatprep.subr.mxu0 0.0
    %2168 = vmatpush1.xpose.msra.mxu0 0.0
    %2169 = vmatprep.subr.mxu0 0.0
    %2170 = vmatpush1.xpose.msra.mxu0 0.0
    %2171 = vmatprep.subr.mxu0 0.0
    %2172 = vmatpush1.xpose.msra.mxu0 0.0
    %2173 = vmatprep.subr.mxu0 0.0
    %2174 = vmatpush1.xpose.msra.mxu0 0.0
    %2175 = vmatprep.subr.mxu0 0.0
    %2176 = vmatpush1.xpose.msra.mxu0 0.0
    %2177 = vmatprep.subr.mxu0 0.0
    %2178 = vmatpush1.xpose.msra.mxu0 0.0
    %2179 = vmatprep.subr.mxu0 0.0
    %2180 = vmatpush1.xpose.msra.mxu0 0.0
    %2181 = vmatprep.subr.mxu0 0.0
    %2182 = vmatpush1.xpose.msra.mxu0 0.0
    %2183 = vmatprep.subr.mxu0 0.0
    %2184 = vmatpush1.xpose.msra.mxu0 0.0
    %2185 = vmatprep.subr.mxu0 0.0
    %2186 = vmatpush1.xpose.msra.mxu0 0.0
    %2187 = vmatprep.subr.mxu0 0.0
    %2188 = vmatpush1.xpose.msra.mxu0 0.0
    %2189 = vmatprep.subr.mxu0 0.0
    %2190 = vmatpush1.xpose.msra.mxu0 0.0
    %2191 = vmatprep.subr.mxu0 0.0
    %2192 = vmatpush1.xpose.msra.mxu0 0.0
    %2193 = vmatprep.subr.mxu0 0.0
    %2194 = vmatpush1.xpose.msra.mxu0 0.0
    %2195 = vmatprep.subr.mxu0 0.0
    %2196 = vmatpush1.xpose.msra.mxu0 0.0
    %2197 = vmatprep.subr.mxu0 0.0
    %2198 = vmatpush1.xpose.msra.mxu0 %v2165
    %2199 = vmatprep.subr.mxu0 0.0
    %2200 = vmatpush2.xpose.msra.mxu0 0.0
    %2201 = vmatprep.subr.mxu0 0.0
    %2202 = vmatpush2.xpose.msra.mxu0 0.0
    %2203 = vmatprep.subr.mxu0 0.0
    %2204 = vmatpush2.xpose.msra.mxu0 0.0
    %2205 = vmatprep.subr.mxu0 0.0
    %2206 = vmatpush2.xpose.msra.mxu0 0.0
    %2207 = vmatprep.subr.mxu0 0.0
    %2208 = vmatpush2.xpose.msra.mxu0 0.0
    %2209 = vmatprep.subr.mxu0 0.0
    %2210 = vmatpush2.xpose.msra.mxu0 0.0
    %2211 = vmatprep.subr.mxu0 0.0
    %2212 = vmatpush2.xpose.msra.mxu0 0.0
    %2213 = vmatprep.subr.mxu0 0.0
    %2214 = vmatpush2.xpose.msra.mxu0 0.0
    %2215 = vmatprep.subr.mxu0 0.0
    %2216 = vmatpush2.xpose.msra.mxu0 0.0
    %2217 = vmatprep.subr.mxu0 0.0
    %2218 = vmatpush2.xpose.msra.mxu0 0.0
    %2219 = vmatprep.subr.mxu0 0.0
    %2220 = vmatpush2.xpose.msra.mxu0 0.0
    %2221 = vmatprep.subr.mxu0 0.0
    %2222 = vmatpush2.xpose.msra.mxu0 0.0
    %2223 = vmatprep.subr.mxu0 0.0
    %2224 = vmatpush2.xpose.msra.mxu0 0.0
    %2225 = vmatprep.subr.mxu0 0.0
    %2226 = vmatpush2.xpose.msra.mxu0 0.0
    %2227 = vmatprep.subr.mxu0 0.0
    %2228 = vmatpush2.xpose.msra.mxu0 0.0
    %2229 = vmatprep.subr.mxu0 0.0
    %2230 = vmatpush2.xpose.msra.mxu0 0.0
    %2231 = vmatprep.mubr.f32.mxu0 0.0
    %2232 = vmatmul.mubr.f32.gmra.mxu0 %v2163
    %v2233 = vpop.f32.mrf.mxu0
    %v2234 = vadd.f32 0.0, %v2233
    %v2235 = vpop.f32.mrf.mxu0
    %2236 = vdwg.mxu0
    %v2238 = vrot.slane %v2234, 7
    %v2239 = vrot.slane %v2234, 1
    %v2240 = vrot.slane %v2234, 2
    %v2241 = vrot.slane %v2234, 3
    %v2242 = vrot.slane %v2234, 4
    %v2243 = vrot.slane %v2234, 5
    %v2244 = vrot.slane %v2234, 6
    %v2253 = vsel %vm249, %v2238, -1e+30
    %v2254 = vsel %vm249, %v2234, -1e+30
    %v2255 = vsel %vm249, %v2239, -1e+30
    %v2256 = vsel %vm249, %v2240, -1e+30
    %v2257 = vsel %vm249, %v2241, -1e+30
    %v2258 = vsel %vm249, %v2242, -1e+30
    %v2259 = vsel %vm249, %v2243, -1e+30
    %v2260 = vsel %vm249, %v2244, -1e+30
    %v2269 = vrot.slane %v2254, 7
    %v2270 = vsel %vm286, %v2269, %v2253
    %v2271 = vrot.slane %v2255, 6
    %v2272 = vsel %vm289, %v2271, %v2270
    %v2273 = vrot.slane %v2256, 5
    %v2274 = vsel %vm292, %v2273, %v2272
    %v2275 = vrot.slane %v2257, 4
    %v2276 = vsel %vm295, %v2275, %v2274
    %v2277 = vrot.slane %v2258, 3
    %v2278 = vsel %vm298, %v2277, %v2276
    %v2279 = vrot.slane %v2259, 2
    %v2280 = vsel %vm301, %v2279, %v2278
    %v2281 = vrot.slane %v2260, 1
    %v2284 = vsel %vm1616, %v2280, -inf
    %2285 = vmax.xlane.f32.xlu0 %v2284
    %v2286 = vpop.xlane.xlu0 %2285
    %v2287 = vsel %vm1620, %v2281, -inf
    %2288 = vmax.xlane.f32.xlu0 %v2287
    %v2289 = vpop.xlane.xlu0 %2288
    %v2292 = vrot.slane %v2286, 1
    %v2293 = vrot.slane %v2286, 2
    %v2294 = vrot.slane %v2286, 3
    %v2295 = vrot.slane %v2286, 4
    %v2296 = vrot.slane %v2286, 5
    %v2297 = vrot.slane %v2286, 6
    %v2298 = vrot.slane %v2289, 7
    %v2307 = vsub.f32 %v2253, %v2286
    %v2308 = vsub.f32 %v2254, %v2292
    %v2309 = vsub.f32 %v2255, %v2293
    %v2310 = vsub.f32 %v2256, %v2294
    %v2311 = vsub.f32 %v2257, %v2295
    %v2312 = vsub.f32 %v2258, %v2296
    %v2313 = vsub.f32 %v2259, %v2297
    %v2314 = vsub.f32 %v2260, %v2298
    %v2315 = vmul.f32 %v2307, 1.442695
    %v2316 = vpow.pop %v2315
    %v2317 = vmul.f32 %v2308, 1.442695
    %v2318 = vpow.pop %v2317
    %v2319 = vmul.f32 %v2309, 1.442695
    %v2320 = vpow.pop %v2319
    %v2321 = vmul.f32 %v2310, 1.442695
    %v2322 = vpow.pop %v2321
    %v2323 = vmul.f32 %v2311, 1.442695
    %v2324 = vpow.pop %v2323
    %v2325 = vmul.f32 %v2312, 1.442695
    %v2326 = vpow.pop %v2325
    %v2327 = vmul.f32 %v2313, 1.442695
    %v2328 = vpow.pop %v2327
    %v2329 = vmul.f32 %v2314, 1.442695
    %v2330 = vpow.pop %v2329
    %v2339 = vrot.slane %v2318, 7
    %v2340 = vsel %vm286, %v2339, %v2316
    %v2341 = vrot.slane %v2320, 6
    %v2342 = vsel %vm289, %v2341, %v2340
    %v2343 = vrot.slane %v2322, 5
    %v2344 = vsel %vm292, %v2343, %v2342
    %v2345 = vrot.slane %v2324, 4
    %v2346 = vsel %vm295, %v2345, %v2344
    %v2347 = vrot.slane %v2326, 3
    %v2348 = vsel %vm298, %v2347, %v2346
    %v2349 = vrot.slane %v2328, 2
    %v2350 = vsel %vm301, %v2349, %v2348
    %v2351 = vrot.slane %v2330, 1
    %v2354 = vsel %vm1616, %v2350, 0.0
    %2355 = vadd.xlane.f32.xlu0 %v2354
    %v2356 = vpop.xlane.xlu0 %2355
    %v2357 = vsel %vm1620, %v2351, 0.0
    %2358 = vadd.xlane.f32.xlu0 %v2357
    %v2359 = vpop.xlane.xlu0 %2358
    %v2360 = vrcp.pop %v2356
    %v2361 = vrcp.pop %v2359
    %v2364 = vrot.slane %v2360, 1
    %v2365 = vrot.slane %v2360, 2
    %v2366 = vrot.slane %v2360, 3
    %v2367 = vrot.slane %v2360, 4
    %v2368 = vrot.slane %v2360, 5
    %v2369 = vrot.slane %v2360, 6
    %v2370 = vrot.slane %v2361, 7
    %v2379 = vmul.f32 %v2316, %v2360
    %v2380 = vmul.f32 %v2318, %v2364
    %v2381 = vmul.f32 %v2320, %v2365
    %v2382 = vmul.f32 %v2322, %v2366
    %v2383 = vmul.f32 %v2324, %v2367
    %v2384 = vmul.f32 %v2326, %v2368
    %v2385 = vmul.f32 %v2328, %v2369
    %v2386 = vmul.f32 %v2330, %v2370
    %v2387 = vsel %vm249, %v2379, 0.0
    %v2388 = vsel %vm249, %v2380, 0.0
    %v2389 = vsel %vm249, %v2381, 0.0
    %v2390 = vsel %vm249, %v2382, 0.0
    %v2391 = vsel %vm249, %v2383, 0.0
    %v2392 = vsel %vm249, %v2384, 0.0
    %v2393 = vsel %vm249, %v2385, 0.0
    %v2394 = vsel %vm249, %v2386, 0.0
    %v2403 = vrot.slane %v2387, 1
    %v2404 = vsel %vm283, %v2388, %v2403
    %v2405 = vrot.slane %v2389, 7
    %v2406 = vsel %vm286, %v2405, %v2404
    %v2407 = vrot.slane %v2390, 6
    %v2408 = vsel %vm289, %v2407, %v2406
    %v2409 = vrot.slane %v2391, 5
    %v2410 = vsel %vm292, %v2409, %v2408
    %v2411 = vrot.slane %v2392, 4
    %v2412 = vsel %vm295, %v2411, %v2410
    %v2413 = vrot.slane %v2393, 3
    %v2414 = vsel %vm298, %v2413, %v2412
    %v2415 = vrot.slane %v2394, 2
    %v2416 = vsel %vm301, %v2415, %v2414
    %2417 = vrot.lane.b32.xlu0 %v167, 48
    %v2418 = vpop.permute.xlu0 %2417
    %v2420 = vsel %vm173, %v2416, 0
    %2422 = vmatprep.subr.mxu0 0.0
    %2423 = vmatpush1.msra.mxu0 0.0
    %2424 = vmatprep.subr.mxu0 0.0
    %2425 = vmatpush1.msra.mxu0 0.0
    %2426 = vmatprep.subr.mxu0 0.0
    %2427 = vmatpush1.msra.mxu0 0.0
    %2428 = vmatprep.subr.mxu0 0.0
    %2429 = vmatpush1.msra.mxu0 0.0
    %2430 = vmatprep.subr.mxu0 0.0
    %2431 = vmatpush1.msra.mxu0 0.0
    %2432 = vmatprep.subr.mxu0 0.0
    %2433 = vmatpush1.msra.mxu0 0.0
    %2434 = vmatprep.subr.mxu0 0.0
    %2435 = vmatpush1.msra.mxu0 0.0
    %2436 = vmatprep.subr.mxu0 0.0
    %2437 = vmatpush1.msra.mxu0 0.0
    %2438 = vmatprep.subr.mxu0 0.0
    %2439 = vmatpush1.msra.mxu0 0.0
    %2440 = vmatprep.subr.mxu0 0.0
    %2441 = vmatpush1.msra.mxu0 0.0
    %2442 = vmatprep.subr.mxu0 0.0
    %2443 = vmatpush1.msra.mxu0 0.0
    %2444 = vmatprep.subr.mxu0 0.0
    %2445 = vmatpush1.msra.mxu0 0.0
    %2446 = vmatprep.subr.mxu0 0.0
    %2447 = vmatpush1.msra.mxu0 0.0
    %2448 = vmatprep.subr.mxu0 0.0
    %2449 = vmatpush1.msra.mxu0 0.0
    %2450 = vmatprep.subr.mxu0 0.0
    %2451 = vmatpush1.msra.mxu0 0.0
    %2452 = vmatprep.subr.mxu0 0.0
    %2453 = vmatpush1.msra.mxu0 %v2418
    %2454 = vmatprep.subr.mxu0 0.0
    %2455 = vmatpush2.msra.mxu0 0.0
    %2456 = vmatprep.subr.mxu0 0.0
    %2457 = vmatpush2.msra.mxu0 0.0
    %2458 = vmatprep.subr.mxu0 0.0
    %2459 = vmatpush2.msra.mxu0 0.0
    %2460 = vmatprep.subr.mxu0 0.0
    %2461 = vmatpush2.msra.mxu0 0.0
    %2462 = vmatprep.subr.mxu0 0.0
    %2463 = vmatpush2.msra.mxu0 0.0
    %2464 = vmatprep.subr.mxu0 0.0
    %2465 = vmatpush2.msra.mxu0 0.0
    %2466 = vmatprep.subr.mxu0 0.0
    %2467 = vmatpush2.msra.mxu0 0.0
    %2468 = vmatprep.subr.mxu0 0.0
    %2469 = vmatpush2.msra.mxu0 0.0
    %2470 = vmatprep.subr.mxu0 0.0
    %2471 = vmatpush2.msra.mxu0 0.0
    %2472 = vmatprep.subr.mxu0 0.0
    %2473 = vmatpush2.msra.mxu0 0.0
    %2474 = vmatprep.subr.mxu0 0.0
    %2475 = vmatpush2.msra.mxu0 0.0
    %2476 = vmatprep.subr.mxu0 0.0
    %2477 = vmatpush2.msra.mxu0 0.0
    %2478 = vmatprep.subr.mxu0 0.0
    %2479 = vmatpush2.msra.mxu0 0.0
    %2480 = vmatprep.subr.mxu0 0.0
    %2481 = vmatpush2.msra.mxu0 0.0
    %2482 = vmatprep.subr.mxu0 0.0
    %2483 = vmatpush2.msra.mxu0 0.0
    %2484 = vmatprep.subr.mxu0 0.0
    %2485 = vmatpush2.msra.mxu0 0.0
    %2486 = vmatprep.mubr.f32.mxu0 0.0
    %2487 = vmatmul.mubr.f32.gmra.mxu0 %v2420
    %v2488 = vpop.f32.mrf.mxu0
    %v2489 = vadd.f32 0.0, %v2488
    %v2490 = vpop.f32.mrf.mxu0
    %2491 = vdwg.mxu0
    %2492 = vrot.lane.b32.xlu0 %v167, 104
    %v2493 = vpop.permute.xlu0 %2492
    %2494 = vrot.lane.b32.xlu0 %v167, 72
    %v2495 = vpop.permute.xlu0 %2494
    %v2496 = vsel %vm173, %v2493, 0
    %v2498 = vsel %vm173, %v2495, 0
    %2500 = vmatprep.subr.mxu0 0.0
    %2501 = vmatpush1.xpose.msra.mxu0 0.0
    %2502 = vmatprep.subr.mxu0 0.0
    %2503 = vmatpush1.xpose.msra.mxu0 0.0
    %2504 = vmatprep.subr.mxu0 0.0
    %2505 = vmatpush1.xpose.msra.mxu0 0.0
    %2506 = vmatprep.subr.mxu0 0.0
    %2507 = vmatpush1.xpose.msra.mxu0 0.0
    %2508 = vmatprep.subr.mxu0 0.0
    %2509 = vmatpush1.xpose.msra.mxu0 0.0
    %2510 = vmatprep.subr.mxu0 0.0
    %2511 = vmatpush1.xpose.msra.mxu0 0.0
    %2512 = vmatprep.subr.mxu0 0.0
    %2513 = vmatpush1.xpose.msra.mxu0 0.0
    %2514 = vmatprep.subr.mxu0 0.0
    %2515 = vmatpush1.xpose.msra.mxu0 0.0
    %2516 = vmatprep.subr.mxu0 0.0
    %2517 = vmatpush1.xpose.msra.mxu0 0.0
    %2518 = vmatprep.subr.mxu0 0.0
    %2519 = vmatpush1.xpose.msra.mxu0 0.0
    %2520 = vmatprep.subr.mxu0 0.0
    %2521 = vmatpush1.xpose.msra.mxu0 0.0
    %2522 = vmatprep.subr.mxu0 0.0
    %2523 = vmatpush1.xpose.msra.mxu0 0.0
    %2524 = vmatprep.subr.mxu0 0.0
    %2525 = vmatpush1.xpose.msra.mxu0 0.0
    %2526 = vmatprep.subr.mxu0 0.0
    %2527 = vmatpush1.xpose.msra.mxu0 0.0
    %2528 = vmatprep.subr.mxu0 0.0
    %2529 = vmatpush1.xpose.msra.mxu0 0.0
    %2530 = vmatprep.subr.mxu0 0.0
    %2531 = vmatpush1.xpose.msra.mxu0 %v2498
    %2532 = vmatprep.subr.mxu0 0.0
    %2533 = vmatpush2.xpose.msra.mxu0 0.0
    %2534 = vmatprep.subr.mxu0 0.0
    %2535 = vmatpush2.xpose.msra.mxu0 0.0
    %2536 = vmatprep.subr.mxu0 0.0
    %2537 = vmatpush2.xpose.msra.mxu0 0.0
    %2538 = vmatprep.subr.mxu0 0.0
    %2539 = vmatpush2.xpose.msra.mxu0 0.0
    %2540 = vmatprep.subr.mxu0 0.0
    %2541 = vmatpush2.xpose.msra.mxu0 0.0
    %2542 = vmatprep.subr.mxu0 0.0
    %2543 = vmatpush2.xpose.msra.mxu0 0.0
    %2544 = vmatprep.subr.mxu0 0.0
    %2545 = vmatpush2.xpose.msra.mxu0 0.0
    %2546 = vmatprep.subr.mxu0 0.0
    %2547 = vmatpush2.xpose.msra.mxu0 0.0
    %2548 = vmatprep.subr.mxu0 0.0
    %2549 = vmatpush2.xpose.msra.mxu0 0.0
    %2550 = vmatprep.subr.mxu0 0.0
    %2551 = vmatpush2.xpose.msra.mxu0 0.0
    %2552 = vmatprep.subr.mxu0 0.0
    %2553 = vmatpush2.xpose.msra.mxu0 0.0
    %2554 = vmatprep.subr.mxu0 0.0
    %2555 = vmatpush2.xpose.msra.mxu0 0.0
    %2556 = vmatprep.subr.mxu0 0.0
    %2557 = vmatpush2.xpose.msra.mxu0 0.0
    %2558 = vmatprep.subr.mxu0 0.0
    %2559 = vmatpush2.xpose.msra.mxu0 0.0
    %2560 = vmatprep.subr.mxu0 0.0
    %2561 = vmatpush2.xpose.msra.mxu0 0.0
    %2562 = vmatprep.subr.mxu0 0.0
    %2563 = vmatpush2.xpose.msra.mxu0 0.0
    %2564 = vmatprep.mubr.f32.mxu0 0.0
    %2565 = vmatmul.mubr.f32.gmra.mxu0 %v2496
    %v2566 = vpop.f32.mrf.mxu0
    %v2567 = vadd.f32 0.0, %v2566
    %v2568 = vpop.f32.mrf.mxu0
    %2569 = vdwg.mxu0
    %v2571 = vrot.slane %v2567, 7
    %v2572 = vrot.slane %v2567, 1
    %v2573 = vrot.slane %v2567, 2
    %v2574 = vrot.slane %v2567, 3
    %v2575 = vrot.slane %v2567, 4
    %v2576 = vrot.slane %v2567, 5
    %v2577 = vrot.slane %v2567, 6
    %v2586 = vsel %vm249, %v2571, -1e+30
    %v2587 = vsel %vm249, %v2567, -1e+30
    %v2588 = vsel %vm249, %v2572, -1e+30
    %v2589 = vsel %vm249, %v2573, -1e+30
    %v2590 = vsel %vm249, %v2574, -1e+30
    %v2591 = vsel %vm249, %v2575, -1e+30
    %v2592 = vsel %vm249, %v2576, -1e+30
    %v2593 = vsel %vm249, %v2577, -1e+30
    %v2602 = vrot.slane %v2587, 7
    %v2603 = vsel %vm286, %v2602, %v2586
    %v2604 = vrot.slane %v2588, 6
    %v2605 = vsel %vm289, %v2604, %v2603
    %v2606 = vrot.slane %v2589, 5
    %v2607 = vsel %vm292, %v2606, %v2605
    %v2608 = vrot.slane %v2590, 4
    %v2609 = vsel %vm295, %v2608, %v2607
    %v2610 = vrot.slane %v2591, 3
    %v2611 = vsel %vm298, %v2610, %v2609
    %v2612 = vrot.slane %v2592, 2
    %v2613 = vsel %vm301, %v2612, %v2611
    %v2614 = vrot.slane %v2593, 1
    %v2617 = vsel %vm1616, %v2613, -inf
    %2618 = vmax.xlane.f32.xlu0 %v2617
    %v2619 = vpop.xlane.xlu0 %2618
    %v2620 = vsel %vm1620, %v2614, -inf
    %2621 = vmax.xlane.f32.xlu0 %v2620
    %v2622 = vpop.xlane.xlu0 %2621
    %v2625 = vrot.slane %v2619, 1
    %v2626 = vrot.slane %v2619, 2
    %v2627 = vrot.slane %v2619, 3
    %v2628 = vrot.slane %v2619, 4
    %v2629 = vrot.slane %v2619, 5
    %v2630 = vrot.slane %v2619, 6
    %v2631 = vrot.slane %v2622, 7
    %v2640 = vsub.f32 %v2586, %v2619
    %v2641 = vsub.f32 %v2587, %v2625
    %v2642 = vsub.f32 %v2588, %v2626
    %v2643 = vsub.f32 %v2589, %v2627
    %v2644 = vsub.f32 %v2590, %v2628
    %v2645 = vsub.f32 %v2591, %v2629
    %v2646 = vsub.f32 %v2592, %v2630
    %v2647 = vsub.f32 %v2593, %v2631
    %v2648 = vmul.f32 %v2640, 1.442695
    %v2649 = vpow.pop %v2648
    %v2650 = vmul.f32 %v2641, 1.442695
    %v2651 = vpow.pop %v2650
    %v2652 = vmul.f32 %v2642, 1.442695
    %v2653 = vpow.pop %v2652
    %v2654 = vmul.f32 %v2643, 1.442695
    %v2655 = vpow.pop %v2654
    %v2656 = vmul.f32 %v2644, 1.442695
    %v2657 = vpow.pop %v2656
    %v2658 = vmul.f32 %v2645, 1.442695
    %v2659 = vpow.pop %v2658
    %v2660 = vmul.f32 %v2646, 1.442695
    %v2661 = vpow.pop %v2660
    %v2662 = vmul.f32 %v2647, 1.442695
    %v2663 = vpow.pop %v2662
    %v2672 = vrot.slane %v2651, 7
    %v2673 = vsel %vm286, %v2672, %v2649
    %v2674 = vrot.slane %v2653, 6
    %v2675 = vsel %vm289, %v2674, %v2673
    %v2676 = vrot.slane %v2655, 5
    %v2677 = vsel %vm292, %v2676, %v2675
    %v2678 = vrot.slane %v2657, 4
    %v2679 = vsel %vm295, %v2678, %v2677
    %v2680 = vrot.slane %v2659, 3
    %v2681 = vsel %vm298, %v2680, %v2679
    %v2682 = vrot.slane %v2661, 2
    %v2683 = vsel %vm301, %v2682, %v2681
    %v2684 = vrot.slane %v2663, 1
    %v2687 = vsel %vm1616, %v2683, 0.0
    %2688 = vadd.xlane.f32.xlu0 %v2687
    %v2689 = vpop.xlane.xlu0 %2688
    %v2690 = vsel %vm1620, %v2684, 0.0
    %2691 = vadd.xlane.f32.xlu0 %v2690
    %v2692 = vpop.xlane.xlu0 %2691
    %v2693 = vrcp.pop %v2689
    %v2694 = vrcp.pop %v2692
    %v2697 = vrot.slane %v2693, 1
    %v2698 = vrot.slane %v2693, 2
    %v2699 = vrot.slane %v2693, 3
    %v2700 = vrot.slane %v2693, 4
    %v2701 = vrot.slane %v2693, 5
    %v2702 = vrot.slane %v2693, 6
    %v2703 = vrot.slane %v2694, 7
    %v2712 = vmul.f32 %v2649, %v2693
    %v2713 = vmul.f32 %v2651, %v2697
    %v2714 = vmul.f32 %v2653, %v2698
    %v2715 = vmul.f32 %v2655, %v2699
    %v2716 = vmul.f32 %v2657, %v2700
    %v2717 = vmul.f32 %v2659, %v2701
    %v2718 = vmul.f32 %v2661, %v2702
    %v2719 = vmul.f32 %v2663, %v2703
    %v2720 = vsel %vm249, %v2712, 0.0
    %v2721 = vsel %vm249, %v2713, 0.0
    %v2722 = vsel %vm249, %v2714, 0.0
    %v2723 = vsel %vm249, %v2715, 0.0
    %v2724 = vsel %vm249, %v2716, 0.0
    %v2725 = vsel %vm249, %v2717, 0.0
    %v2726 = vsel %vm249, %v2718, 0.0
    %v2727 = vsel %vm249, %v2719, 0.0
    %v2736 = vrot.slane %v2720, 1
    %v2737 = vsel %vm283, %v2721, %v2736
    %v2738 = vrot.slane %v2722, 7
    %v2739 = vsel %vm286, %v2738, %v2737
    %v2740 = vrot.slane %v2723, 6
    %v2741 = vsel %vm289, %v2740, %v2739
    %v2742 = vrot.slane %v2724, 5
    %v2743 = vsel %vm292, %v2742, %v2741
    %v2744 = vrot.slane %v2725, 4
    %v2745 = vsel %vm295, %v2744, %v2743
    %v2746 = vrot.slane %v2726, 3
    %v2747 = vsel %vm298, %v2746, %v2745
    %v2748 = vrot.slane %v2727, 2
    %v2749 = vsel %vm301, %v2748, %v2747
    %2750 = vrot.lane.b32.xlu0 %v167, 40
    %v2751 = vpop.permute.xlu0 %2750
    %v2753 = vsel %vm173, %v2749, 0
    %2755 = vmatprep.subr.mxu0 0.0
    %2756 = vmatpush1.msra.mxu0 0.0
    %2757 = vmatprep.subr.mxu0 0.0
    %2758 = vmatpush1.msra.mxu0 0.0
    %2759 = vmatprep.subr.mxu0 0.0
    %2760 = vmatpush1.msra.mxu0 0.0
    %2761 = vmatprep.subr.mxu0 0.0
    %2762 = vmatpush1.msra.mxu0 0.0
    %2763 = vmatprep.subr.mxu0 0.0
    %2764 = vmatpush1.msra.mxu0 0.0
    %2765 = vmatprep.subr.mxu0 0.0
    %2766 = vmatpush1.msra.mxu0 0.0
    %2767 = vmatprep.subr.mxu0 0.0
    %2768 = vmatpush1.msra.mxu0 0.0
    %2769 = vmatprep.subr.mxu0 0.0
    %2770 = vmatpush1.msra.mxu0 0.0
    %2771 = vmatprep.subr.mxu0 0.0
    %2772 = vmatpush1.msra.mxu0 0.0
    %2773 = vmatprep.subr.mxu0 0.0
    %2774 = vmatpush1.msra.mxu0 0.0
    %2775 = vmatprep.subr.mxu0 0.0
    %2776 = vmatpush1.msra.mxu0 0.0
    %2777 = vmatprep.subr.mxu0 0.0
    %2778 = vmatpush1.msra.mxu0 0.0
    %2779 = vmatprep.subr.mxu0 0.0
    %2780 = vmatpush1.msra.mxu0 0.0
    %2781 = vmatprep.subr.mxu0 0.0
    %2782 = vmatpush1.msra.mxu0 0.0
    %2783 = vmatprep.subr.mxu0 0.0
    %2784 = vmatpush1.msra.mxu0 0.0
    %2785 = vmatprep.subr.mxu0 0.0
    %2786 = vmatpush1.msra.mxu0 %v2751
    %2787 = vmatprep.subr.mxu0 0.0
    %2788 = vmatpush2.msra.mxu0 0.0
    %2789 = vmatprep.subr.mxu0 0.0
    %2790 = vmatpush2.msra.mxu0 0.0
    %2791 = vmatprep.subr.mxu0 0.0
    %2792 = vmatpush2.msra.mxu0 0.0
    %2793 = vmatprep.subr.mxu0 0.0
    %2794 = vmatpush2.msra.mxu0 0.0
    %2795 = vmatprep.subr.mxu0 0.0
    %2796 = vmatpush2.msra.mxu0 0.0
    %2797 = vmatprep.subr.mxu0 0.0
    %2798 = vmatpush2.msra.mxu0 0.0
    %2799 = vmatprep.subr.mxu0 0.0
    %2800 = vmatpush2.msra.mxu0 0.0
    %2801 = vmatprep.subr.mxu0 0.0
    %2802 = vmatpush2.msra.mxu0 0.0
    %2803 = vmatprep.subr.mxu0 0.0
    %2804 = vmatpush2.msra.mxu0 0.0
    %2805 = vmatprep.subr.mxu0 0.0
    %2806 = vmatpush2.msra.mxu0 0.0
    %2807 = vmatprep.subr.mxu0 0.0
    %2808 = vmatpush2.msra.mxu0 0.0
    %2809 = vmatprep.subr.mxu0 0.0
    %2810 = vmatpush2.msra.mxu0 0.0
    %2811 = vmatprep.subr.mxu0 0.0
    %2812 = vmatpush2.msra.mxu0 0.0
    %2813 = vmatprep.subr.mxu0 0.0
    %2814 = vmatpush2.msra.mxu0 0.0
    %2815 = vmatprep.subr.mxu0 0.0
    %2816 = vmatpush2.msra.mxu0 0.0
    %2817 = vmatprep.subr.mxu0 0.0
    %2818 = vmatpush2.msra.mxu0 0.0
    %2819 = vmatprep.mubr.f32.mxu0 0.0
    %2820 = vmatmul.mubr.f32.gmra.mxu0 %v2753
    %v2821 = vpop.f32.mrf.mxu0
    %v2822 = vadd.f32 0.0, %v2821
    %v2823 = vpop.f32.mrf.mxu0
    %2824 = vdwg.mxu0
    %2826 = vrot.lane.b32.xlu0 %v2156, 8
    %v2827 = vpop.permute.xlu0 %2826
    %2830 = vrot.lane.b32.xlu0 %v2489, 16
    %v2831 = vpop.permute.xlu0 %2830
    %2834 = vrot.lane.b32.xlu0 %v2822, 24
    %v2835 = vpop.permute.xlu0 %2834
    %v2837 = vsel %vm173, %v1823, %v2827
    %v2838 = vsel %vm1488, %v2837, %v2831
    %v2839 = vsel %vm1490, %v2838, %v2835
    %v2840 = vld [vmem:[%s4] sm:$0xff]
    %v2841 = vld [vmem:[%s4 + $0x8] sm:$0xff]
    %v2842 = vld [vmem:[%s4 + $0x10] sm:$0xff]
    %v2843 = vld [vmem:[%s4 + $0x18] sm:$0xff]
    %v2844 = vlaneseq
    %v2845 = vshrl.u32 %v2844, 7
    %v2846 = vsub.s32 4, %v2845
    %v2847 = vrot.slane %v37, %v2846
    %v2849 = vsel %vm38, %v1491, 0
    %v2852 = vsel %vm38, %v2839, 0
    %2854 = vmatprep.subr.mxu0 0.0
    %2855 = vmatpush1.msra.mxu0 0.0
    %2856 = vmatprep.subr.mxu0 0.0
    %2857 = vmatpush1.msra.mxu0 0.0
    %2858 = vmatprep.subr.mxu0 0.0
    %2859 = vmatpush1.msra.mxu0 0.0
    %2860 = vmatprep.subr.mxu0 0.0
    %2861 = vmatpush1.msra.mxu0 0.0
    %2862 = vmatprep.subr.mxu0 0.0
    %2863 = vmatpush1.msra.mxu0 0.0
    %2864 = vmatprep.subr.mxu0 0.0
    %2865 = vmatpush1.msra.mxu0 0.0
    %2866 = vmatprep.subr.mxu0 0.0
    %2867 = vmatpush1.msra.mxu0 0.0
    %2868 = vmatprep.subr.mxu0 0.0
    %2869 = vmatpush1.msra.mxu0 0.0
    %2870 = vmatprep.subr.mxu0 0.0
    %2871 = vmatpush1.msra.mxu0 0.0
    %2872 = vmatprep.subr.mxu0 0.0
    %2873 = vmatpush1.msra.mxu0 0.0
    %2874 = vmatprep.subr.mxu0 0.0
    %2875 = vmatpush1.msra.mxu0 0.0
    %2876 = vmatprep.subr.mxu0 0.0
    %2877 = vmatpush1.msra.mxu0 0.0
    %2878 = vmatprep.subr.mxu0 0.0
    %2879 = vmatpush1.msra.mxu0 %v2843
    %2880 = vmatprep.subr.mxu0 0.0
    %2881 = vmatpush1.msra.mxu0 %v2842
    %2882 = vmatprep.subr.mxu0 0.0
    %2883 = vmatpush1.msra.mxu0 %v2841
    %2884 = vmatprep.subr.mxu0 0.0
    %2885 = vmatpush1.msra.mxu0 %v2840
    %2886 = vmatprep.subr.mxu0 0.0
    %2887 = vmatpush2.msra.mxu0 0.0
    %2888 = vmatprep.subr.mxu0 0.0
    %2889 = vmatpush2.msra.mxu0 0.0
    %2890 = vmatprep.subr.mxu0 0.0
    %2891 = vmatpush2.msra.mxu0 0.0
    %2892 = vmatprep.subr.mxu0 0.0
    %2893 = vmatpush2.msra.mxu0 0.0
    %2894 = vmatprep.subr.mxu0 0.0
    %2895 = vmatpush2.msra.mxu0 0.0
    %2896 = vmatprep.subr.mxu0 0.0
    %2897 = vmatpush2.msra.mxu0 0.0
    %2898 = vmatprep.subr.mxu0 0.0
    %2899 = vmatpush2.msra.mxu0 0.0
    %2900 = vmatprep.subr.mxu0 0.0
    %2901 = vmatpush2.msra.mxu0 0.0
    %2902 = vmatprep.subr.mxu0 0.0
    %2903 = vmatpush2.msra.mxu0 0.0
    %2904 = vmatprep.subr.mxu0 0.0
    %2905 = vmatpush2.msra.mxu0 0.0
    %2906 = vmatprep.subr.mxu0 0.0
    %2907 = vmatpush2.msra.mxu0 0.0
    %2908 = vmatprep.subr.mxu0 0.0
    %2909 = vmatpush2.msra.mxu0 0.0
    %2910 = vmatprep.subr.mxu0 0.0
    %2911 = vmatpush2.msra.mxu0 0.0
    %2912 = vmatprep.subr.mxu0 0.0
    %2913 = vmatpush2.msra.mxu0 0.0
    %2914 = vmatprep.subr.mxu0 0.0
    %2915 = vmatpush2.msra.mxu0 0.0
    %2916 = vmatprep.subr.mxu0 0.0
    %2917 = vmatpush2.msra.mxu0 0.0
    %2918 = vmatprep.mubr.f32.mxu0 0.0
    %2919 = vmatmul.mubr.f32.gmra.mxu0 %v2849
    %v2920 = vpop.f32.mrf.mxu0
    %v2921 = vadd.f32 %v2847, %v2920
    %v2922 = vpop.f32.mrf.mxu0
    %2923 = vmatprep.mubr.f32.mxu0 0.0
    %2924 = vmatmul.mubr.f32.gmra.mxu0 %v2852
    %v2925 = vpop.f32.mrf.mxu0
    %v2926 = vadd.f32 %v2847, %v2925
    %v2927 = vpop.f32.mrf.mxu0
    %2928 = vdwg.mxu0
    %v2929 = vadd.f32 %v33, %v2921
    %v2930 = vadd.f32 %v34, %v2926
    %v2931 = vsel %vm38, %v2929, 0.0
    %2932 = vadd.xlane.f32.xlu0 %v2931
    %v2933 = vpop.xlane.xlu0 %2932
    %v2934 = vsel %vm38, %v2930, 0.0
    %2935 = vadd.xlane.f32.xlu0 %v2934
    %v2936 = vpop.xlane.xlu0 %2935
    %v2937 = vmul.f32 %v2933, %v45
    %v2938 = vmul.f32 %v2936, %v45
    %v2939 = vsub.f32 %v2929, %v2937
    %v2940 = vsub.f32 %v2930, %v2938
    %v2941 = vmul.f32 %v2939, %v2939
    %v2942 = vmul.f32 %v2940, %v2940
    %v2943 = vsel %vm38, %v2941, 0.0
    %2944 = vadd.xlane.f32.xlu0 %v2943
    %v2945 = vpop.xlane.xlu0 %2944
    %v2946 = vsel %vm38, %v2942, 0.0
    %2947 = vadd.xlane.f32.xlu0 %v2946
    %v2948 = vpop.xlane.xlu0 %2947
    %v2949 = vmul.f32 %v2945, %v45
    %v2950 = vmul.f32 %v2948, %v45
    %v2951 = vadd.f32 %v2949, 1e-06
    %v2952 = vadd.f32 %v2950, 1e-06
    %v2953 = vrsqrt.pop %v2951
    %v2954 = vrsqrt.pop %v2952
    %v2955 = vmul.f32 %v2939, %v2953
    %v2956 = vmul.f32 %v2940, %v2954
    %v2957 = vlaneseq
    %v2958 = vshrl.u32 %v2957, 7
    %v2959 = vsub.s32 2, %v2958
    %v2960 = vrot.slane %v37, %v2959
    %v2961 = vmul.f32 %v2955, %v2960
    %v2962 = vmul.f32 %v2956, %v2960
    %v2963 = vlaneseq
    %v2964 = vshrl.u32 %v2963, 7
    %v2965 = vsub.s32 3, %v2964
    %v2966 = vrot.slane %v37, %v2965
    %v2967 = vadd.f32 %v2961, %v2966
    %v2968 = vadd.f32 %v2962, %v2966
    %v2969 = vld [vmem:[%s5] sm:$0xff]
    %v2970 = vld [vmem:[%s5 + $0x8] sm:$0xff]
    %v2971 = vld [vmem:[%s5 + $0x10] sm:$0xff]
    %v2972 = vld [vmem:[%s5 + $0x18] sm:$0xff]
    %v2973 = vld [vmem:[%s6] sm:$0x1]
    %v2975 = vlaneseq
    %v2976 = vshrl.u32 %v2975, 7
    %v2977 = vsub.s32 0, %v2976
    %v2978 = vrot.slane %v2973, %v2977
    %v2981 = vsel %vm38, %v2967, 0
    %v2984 = vsel %vm38, %v2968, 0
    %2986 = vmatprep.subr.mxu0 0.0
    %2987 = vmatpush1.msra.mxu0 0.0
    %2988 = vmatprep.subr.mxu0 0.0
    %2989 = vmatpush1.msra.mxu0 0.0
    %2990 = vmatprep.subr.mxu0 0.0
    %2991 = vmatpush1.msra.mxu0 0.0
    %2992 = vmatprep.subr.mxu0 0.0
    %2993 = vmatpush1.msra.mxu0 0.0
    %2994 = vmatprep.subr.mxu0 0.0
    %2995 = vmatpush1.msra.mxu0 0.0
    %2996 = vmatprep.subr.mxu0 0.0
    %2997 = vmatpush1.msra.mxu0 0.0
    %2998 = vmatprep.subr.mxu0 0.0
    %2999 = vmatpush1.msra.mxu0 0.0
    %3000 = vmatprep.subr.mxu0 0.0
    %3001 = vmatpush1.msra.mxu0 0.0
    %3002 = vmatprep.subr.mxu0 0.0
    %3003 = vmatpush1.msra.mxu0 0.0
    %3004 = vmatprep.subr.mxu0 0.0
    %3005 = vmatpush1.msra.mxu0 0.0
    %3006 = vmatprep.subr.mxu0 0.0
    %3007 = vmatpush1.msra.mxu0 0.0
    %3008 = vmatprep.subr.mxu0 0.0
    %3009 = vmatpush1.msra.mxu0 0.0
    %3010 = vmatprep.subr.mxu0 0.0
    %3011 = vmatpush1.msra.mxu0 %v2972
    %3012 = vmatprep.subr.mxu0 0.0
    %3013 = vmatpush1.msra.mxu0 %v2971
    %3014 = vmatprep.subr.mxu0 0.0
    %3015 = vmatpush1.msra.mxu0 %v2970
    %3016 = vmatprep.subr.mxu0 0.0
    %3017 = vmatpush1.msra.mxu0 %v2969
    %3018 = vmatprep.subr.mxu0 0.0
    %3019 = vmatpush2.msra.mxu0 0.0
    %3020 = vmatprep.subr.mxu0 0.0
    %3021 = vmatpush2.msra.mxu0 0.0
    %3022 = vmatprep.subr.mxu0 0.0
    %3023 = vmatpush2.msra.mxu0 0.0
    %3024 = vmatprep.subr.mxu0 0.0
    %3025 = vmatpush2.msra.mxu0 0.0
    %3026 = vmatprep.subr.mxu0 0.0
    %3027 = vmatpush2.msra.mxu0 0.0
    %3028 = vmatprep.subr.mxu0 0.0
    %3029 = vmatpush2.msra.mxu0 0.0
    %3030 = vmatprep.subr.mxu0 0.0
    %3031 = vmatpush2.msra.mxu0 0.0
    %3032 = vmatprep.subr.mxu0 0.0
    %3033 = vmatpush2.msra.mxu0 0.0
    %3034 = vmatprep.subr.mxu0 0.0
    %3035 = vmatpush2.msra.mxu0 0.0
    %3036 = vmatprep.subr.mxu0 0.0
    %3037 = vmatpush2.msra.mxu0 0.0
    %3038 = vmatprep.subr.mxu0 0.0
    %3039 = vmatpush2.msra.mxu0 0.0
    %3040 = vmatprep.subr.mxu0 0.0
    %3041 = vmatpush2.msra.mxu0 0.0
    %3042 = vmatprep.subr.mxu0 0.0
    %3043 = vmatpush2.msra.mxu0 0.0
    %3044 = vmatprep.subr.mxu0 0.0
    %3045 = vmatpush2.msra.mxu0 0.0
    %3046 = vmatprep.subr.mxu0 0.0
    %3047 = vmatpush2.msra.mxu0 0.0
    %3048 = vmatprep.subr.mxu0 0.0
    %3049 = vmatpush2.msra.mxu0 0.0
    %3050 = vmatprep.mubr.f32.mxu0 0.0
    %3051 = vmatmul.mubr.f32.gmra.mxu0 %v2981
    %v3052 = vpop.f32.mrf.mxu0
    %v3053 = vadd.f32 %v2978, %v3052
    %v3054 = vpop.f32.mrf.mxu0
    %3055 = vmatprep.mubr.f32.mxu0 0.0
    %3056 = vmatmul.mubr.f32.gmra.mxu0 %v2984
    %v3057 = vpop.f32.mrf.mxu0
    %v3058 = vadd.f32 %v2978, %v3057
    %v3059 = vpop.f32.mrf.mxu0
    %3060 = vdwg.mxu0
    %v3061 = vmul.f32 %v3053, 0.5
    %v3062 = vmul.f32 %v3058, 0.5
    %v3063 = vmul.f32 %v3053, 0.044715
    %v3064 = vmul.f32 %v3058, 0.044715
    %v3065 = vmul.f32 %v3063, %v3053
    %v3066 = vmul.f32 %v3064, %v3058
    %v3067 = vmul.f32 %v3065, %v3053
    %v3068 = vmul.f32 %v3066, %v3058
    %v3069 = vadd.f32 %v3053, %v3067
    %v3070 = vadd.f32 %v3058, %v3068
    %v3071 = vmul.f32 %v3069, 0.7978846
    %v3072 = vmul.f32 %v3070, 0.7978846
    %v3073 = vtanh.pop %v3071
    %v3074 = vtanh.pop %v3072
    %v3075 = vadd.f32 %v3073, 1.0
    %v3076 = vadd.f32 %v3074, 1.0
    %v3077 = vmul.f32 %v3061, %v3075
    %v3078 = vmul.f32 %v3062, %v3076
    %v3079 = vld [vmem:[%s7] sm:$0xff]
    %v3080 = vld [vmem:[%s7 + $0x8] sm:$0xff]
    %v3081 = vld [vmem:[%s7 + $0x10] sm:$0xff]
    %v3082 = vld [vmem:[%s7 + $0x18] sm:$0xff]
    %v3083 = vld [vmem:[%s7 + $0x20] sm:$0xff]
    %v3084 = vld [vmem:[%s7 + $0x28] sm:$0xff]
    %v3085 = vld [vmem:[%s7 + $0x30] sm:$0xff]
    %v3086 = vld [vmem:[%s7 + $0x38] sm:$0xff]
    %v3087 = vld [vmem:[%s7 + $0x40] sm:$0xff]
    %v3088 = vld [vmem:[%s7 + $0x48] sm:$0xff]
    %v3089 = vld [vmem:[%s7 + $0x50] sm:$0xff]
    %v3090 = vld [vmem:[%s7 + $0x58] sm:$0xff]
    %v3091 = vld [vmem:[%s7 + $0x60] sm:$0xff]
    %v3092 = vld [vmem:[%s7 + $0x68] sm:$0xff]
    %v3093 = vld [vmem:[%s7 + $0x70] sm:$0xff]
    %v3094 = vld [vmem:[%s7 + $0x78] sm:$0xff]
    %v3095 = vlaneseq
    %v3096 = vshrl.u32 %v3095, 7
    %v3097 = vsub.s32 5, %v3096
    %v3098 = vrot.slane %v37, %v3097
    %3099 = vmatprep.subr.mxu0 0.0
    %3100 = vmatpush1.msra.mxu0 %v3094
    %3101 = vmatprep.subr.mxu0 0.0
    %3102 = vmatpush1.msra.mxu0 %v3093
    %3103 = vmatprep.subr.mxu0 0.0
    %3104 = vmatpush1.msra.mxu0 %v3092
    %3105 = vmatprep.subr.mxu0 0.0
    %3106 = vmatpush1.msra.mxu0 %v3091
    %3107 = vmatprep.subr.mxu0 0.0
    %3108 = vmatpush1.msra.mxu0 %v3090
    %3109 = vmatprep.subr.mxu0 0.0
    %3110 = vmatpush1.msra.mxu0 %v3089
    %3111 = vmatprep.subr.mxu0 0.0
    %3112 = vmatpush1.msra.mxu0 %v3088
    %3113 = vmatprep.subr.mxu0 0.0
    %3114 = vmatpush1.msra.mxu0 %v3087
    %3115 = vmatprep.subr.mxu0 0.0
    %3116 = vmatpush1.msra.mxu0 %v3086
    %3117 = vmatprep.subr.mxu0 0.0
    %3118 = vmatpush1.msra.mxu0 %v3085
    %3119 = vmatprep.subr.mxu0 0.0
    %3120 = vmatpush1.msra.mxu0 %v3084
    %3121 = vmatprep.subr.mxu0 0.0
    %3122 = vmatpush1.msra.mxu0 %v3083
    %3123 = vmatprep.subr.mxu0 0.0
    %3124 = vmatpush1.msra.mxu0 %v3082
    %3125 = vmatprep.subr.mxu0 0.0
    %3126 = vmatpush1.msra.mxu0 %v3081
    %3127 = vmatprep.subr.mxu0 0.0
    %3128 = vmatpush1.msra.mxu0 %v3080
    %3129 = vmatprep.subr.mxu0 0.0
    %3130 = vmatpush1.msra.mxu0 %v3079
    %3131 = vmatprep.subr.mxu0 0.0
    %3132 = vmatpush2.msra.mxu0 0.0
    %3133 = vmatprep.subr.mxu0 0.0
    %3134 = vmatpush2.msra.mxu0 0.0
    %3135 = vmatprep.subr.mxu0 0.0
    %3136 = vmatpush2.msra.mxu0 0.0
    %3137 = vmatprep.subr.mxu0 0.0
    %3138 = vmatpush2.msra.mxu0 0.0
    %3139 = vmatprep.subr.mxu0 0.0
    %3140 = vmatpush2.msra.mxu0 0.0
    %3141 = vmatprep.subr.mxu0 0.0
    %3142 = vmatpush2.msra.mxu0 0.0
    %3143 = vmatprep.subr.mxu0 0.0
    %3144 = vmatpush2.msra.mxu0 0.0
    %3145 = vmatprep.subr.mxu0 0.0
    %3146 = vmatpush2.msra.mxu0 0.0
    %3147 = vmatprep.subr.mxu0 0.0
    %3148 = vmatpush2.msra.mxu0 0.0
    %3149 = vmatprep.subr.mxu0 0.0
    %3150 = vmatpush2.msra.mxu0 0.0
    %3151 = vmatprep.subr.mxu0 0.0
    %3152 = vmatpush2.msra.mxu0 0.0
    %3153 = vmatprep.subr.mxu0 0.0
    %3154 = vmatpush2.msra.mxu0 0.0
    %3155 = vmatprep.subr.mxu0 0.0
    %3156 = vmatpush2.msra.mxu0 0.0
    %3157 = vmatprep.subr.mxu0 0.0
    %3158 = vmatpush2.msra.mxu0 0.0
    %3159 = vmatprep.subr.mxu0 0.0
    %3160 = vmatpush2.msra.mxu0 0.0
    %3161 = vmatprep.subr.mxu0 0.0
    %3162 = vmatpush2.msra.mxu0 0.0
    %3163 = vmatprep.mubr.f32.mxu0 0.0
    %3164 = vmatmul.mubr.f32.gmra.mxu0 %v3077
    %v3165 = vpop.f32.mrf.mxu0
    %v3166 = vadd.f32 %v3098, %v3165
    %v3167 = vpop.f32.mrf.mxu0
    %3168 = vmatprep.mubr.f32.mxu0 0.0
    %3169 = vmatmul.mubr.f32.gmra.mxu0 %v3078
    %v3170 = vpop.f32.mrf.mxu0
    %v3171 = vadd.f32 %v3098, %v3170
    %v3172 = vpop.f32.mrf.mxu0
    %3173 = vdwg.mxu0
    %v3174 = vadd.f32 %v2929, %v3166
    %v3175 = vadd.f32 %v2930, %v3171
    %3176 = vst.msk [vmem:[#allocation2] sm:$0xff] %vm38, %v3174
    %3177 = vst.msk [vmem:[#allocation2 + $0x8] sm:$0xff] %vm38, %v3175
    // Predicated region
    $region38: #{tpu_custom_call.1} parent=1 // pred_check
      _
    $region39: #{tpu_custom_call.1} parent=1 // pred_check_branch
      %3179 = sbr.rel (0) target = $region41
    $region40: #{tpu_custom_call.1} parent=1 // pred_region
      %s3181 = ssub.s32 256, 256
      %3182 = vsyncadd [#allocation3], %s3181
      %s3183 = sshll.u32 [#allocation2], 4
      %s3184 = int_to_ptr.vmem [resolvable:$true] %s3183
      %3189 = dma.vmem_to_hbm [thread:$0]  %s3184, 256, %s9, [#allocation3], 128, 128, 8
    $region41: #{tpu_custom_call.1} parent=1 // pred_fallthru
      _
    // Predicated region
    $region42: #{tpu_custom_call.1} parent=1 // pred_check
      _
    $region43: #{tpu_custom_call.1} parent=1 // pred_check_branch
      %3191 = sbr.rel (0) target = $region45
    $region44: #{tpu_custom_call.1} parent=1 // pred_region
      %3192 = dma.done [#allocation3], 256
    $region45: #{tpu_custom_call.1} parent=1 // pred_fallthru
      _
    %3193 = vsyncpa [#allocation3], 1

</llo_original>
